<compile_context>
chip_gen: v7x
topology: tpu7x:2x2x1
jax: 0.10.0
libtpu: 0.0.40
codegen_flags: <defaults>
</compile_context>

<pallas_src>
import math
import functools

import jax
import jax.numpy as jnp
from jax import lax
from jax.experimental import pallas as pl
from jax.experimental.pallas import tpu as pltpu


VMEM_LIMIT = 32 * 1024 * 1024   # safe on v5e/v6e (128 MiB phys) and v7x (64 MiB)


# ----------------------------------------------------------------------------
# tiling helper
# ----------------------------------------------------------------------------

def _pick_tile(dim, target, align):
    """Largest tile <= target that divides dim and is a multiple of `align`.

    Returns the full dim when dim <= target or when no aligned divisor exists
    (full-extent blocks are always legal).  Lane-tiled dims are pre-padded to
    multiples of 128 at weight-prep time so the fallback never produces a
    huge unaligned tile.
    """
    if dim <= target:
        return dim
    t = (target // align) * align
    while t >= align:
        if dim % t == 0:
            return t
        t -= align
    return dim


# ----------------------------------------------------------------------------
# Kernel 1: tiled linear  out = x @ W + b   (bf16 MXU, f32 accumulate)
# ----------------------------------------------------------------------------

def _linear_kernel(x_ref, w_ref, b_ref, o_ref, acc_ref, *, k_axis):
    k = pl.program_id(k_axis)

    @pl.when(k == 0)
    def _():
        # fold the bias into the accumulator init (saves a (tm,tn) add at the end)
        acc_ref[...] = jnp.broadcast_to(b_ref[...], acc_ref.shape)

    acc_ref[...] += jnp.dot(x_ref[...].astype(jnp.bfloat16), w_ref[...],
                            preferred_element_type=jnp.float32)

    @pl.when(k == pl.num_programs(k_axis) - 1)
    def _():
        o_ref[...] = acc_ref[...].astype(o_ref.dtype)


def pallas_linear(x, wt, b, *, out_dtype=jnp.float32, tm=512, tn=512, tk=512):
    """x: (N, Din) f32; wt: (Din, Dout) bf16 (pre-transposed); b: (Dout,) f32."""
    N, Din = x.shape
    Dout = wt.shape[1]
    tm = _pick_tile(N, tm, 8)
    tn = _pick_tile(Dout, tn, 128)
    tk = _pick_tile(Din, tk, 128)
    grid = (N // tm, Dout // tn, Din // tk)
    kern = functools.partial(_linear_kernel, k_axis=2)
    return pl.pallas_call(
        kern,
        out_shape=jax.ShapeDtypeStruct((N, Dout), out_dtype),
        grid=grid,
        in_specs=[pl.BlockSpec((tm, tk), lambda i, j, k: (i, k)),
                  pl.BlockSpec((tk, tn), lambda i, j, k: (k, j)),
                  pl.BlockSpec((1, tn), lambda i, j, k: (0, j))],
        out_specs=pl.BlockSpec((tm, tn), lambda i, j, k: (i, j)),
        scratch_shapes=[pltpu.VMEM((tm, tn), jnp.float32)],
        compiler_params=pltpu.CompilerParams(
            dimension_semantics=("parallel", "parallel", "arbitrary"),
            vmem_limit_bytes=VMEM_LIMIT),
    )(x, wt, b[None, :])


def pallas_linear_seq_major(x, wt, b, *, batch, seq, tm=512, tn=512, tk=512):
    """Final FC with the (B,S,out)->(S,B,out) transpose folded into the store.

    x: (B*S, Din) rows ordered (b, s); returns f32 (S, B*Dout) — a free reshape
    to (S, B, Dout) gives the module's seq-major output layout.
    """
    N, Din = x.shape
    Dout = wt.shape[1]
    assert N == batch * seq
    tm = _pick_tile(seq, tm, 8)
    tn = _pick_tile(Dout, tn, 128)
    tk = _pick_tile(Din, tk, 128)
    sb = seq // tm
    nb = Dout // tn
    grid = (batch, sb, nb, Din // tk)
    kern = functools.partial(_linear_kernel, k_axis=3)
    return pl.pallas_call(
        kern,
        out_shape=jax.ShapeDtypeStruct((seq, batch * Dout), jnp.float32),
        grid=grid,
        in_specs=[
            pl.BlockSpec((tm, tk), lambda bi, si, j, k, sb=sb: (bi * sb + si, k)),
            pl.BlockSpec((tk, tn), lambda bi, si, j, k: (k, j)),
            pl.BlockSpec((1, tn), lambda bi, si, j, k: (0, j)),
        ],
        out_specs=pl.BlockSpec((tm, tn),
                               lambda bi, si, j, k, nb=nb: (si, bi * nb + j)),
        scratch_shapes=[pltpu.VMEM((tm, tn), jnp.float32)],
        compiler_params=pltpu.CompilerParams(
            dimension_semantics=("parallel", "parallel", "parallel", "arbitrary"),
            vmem_limit_bytes=VMEM_LIMIT),
    )(x, wt, b[None, :])


# ----------------------------------------------------------------------------
# Kernel 2: flash-style attention fused with out_proj + residual + LayerNorm
# ----------------------------------------------------------------------------

def _attn_proj_ln_kernel(q_ref, k_ref, v_ref, res_ref, wo_ref, bo_ref,
                         g_ref, bb_ref, o_ref, m_scr, l_scr, acc_scr,
                         *, nheads, dp, scale, eps):
    ki = pl.program_id(2)

    @pl.when(ki == 0)
    def _():
        m_scr[...] = jnp.full(m_scr.shape, -jnp.inf, jnp.float32)
        l_scr[...] = jnp.zeros(l_scr.shape, jnp.float32)
        acc_scr[...] = jnp.zeros(acc_scr.shape, jnp.float32)

    q = q_ref[0]     # (tq,  H*dp) bf16, per-head slices lane-aligned (dp % 128 == 0)
    k = k_ref[0]     # (tkv, H*dp) bf16
    v = v_ref[0]     # (tkv, H*dp) bf16

    for h in range(nheads):                       # static head loop
        sl = slice(h * dp, (h + 1) * dp)
        # q @ k^T without materializing a transpose (contract last dims).
        s = lax.dot_general(q[:, sl], k[:, sl], (((1,), (1,)), ((), ())),
                            preferred_element_type=jnp.float32) * scale
        m_prev = m_scr[h]                                        # (tq, 1)
        m_new = jnp.maximum(m_prev, jnp.max(s, axis=-1, keepdims=True))
        alpha = jnp.exp(m_prev - m_new)
        p = jnp.exp(s - m_new)
        l_scr[h] = alpha * l_scr[h] + jnp.sum(p, axis=-1, keepdims=True)
        acc_scr[h] = alpha * acc_scr[h] + jnp.dot(
            p.astype(jnp.bfloat16), v[:, sl], preferred_element_type=jnp.float32)
        m_scr[h] = m_new

    @pl.when(ki == pl.num_programs(2) - 1)
    def _():
        # fused epilogue: out_proj (per-head, no concat) + residual + LayerNorm
        y = res_ref[0] + bo_ref[...]                             # (tq, D) f32
        for h in range(nheads):
            inv_l = pl.reciprocal(l_scr[h], approx=True)
            oh = (acc_scr[h] * inv_l).astype(jnp.bfloat16)       # (tq, dp)
            y = y + jnp.dot(oh, wo_ref[h * dp:(h + 1) * dp, :],
                            preferred_element_type=jnp.float32)
        mu = jnp.mean(y, axis=-1, keepdims=True)
        var = jnp.mean(y * y, axis=-1, keepdims=True) - mu * mu
        o_ref[0] = (y - mu) * lax.rsqrt(var + eps) * g_ref[...] + bb_ref[...]


def pallas_attn_proj_ln(qkv, res, wo, bo, gamma, beta, *, nheads, dh, dp,
                        eps=1e-5, tq=256, tkv=256):
    """LayerNorm(res + MHA(qkv) @ Wout + bout).

    qkv: (B, S, 3*H*dp) bf16 packed [q|k|v] with the head dim zero-padded to dp.
    res: (B, S, D) f32.  wo: (H*dp, D) bf16 (rows zero-padded).  Returns (B,S,D) f32.
    """
    B, S, _ = qkv.shape
    D = res.shape[-1]
    Hdp = nheads * dp
    tq = _pick_tile(S, tq, 16)
    tkv = _pick_tile(S, tkv, 16)
    scale = 1.0 / math.sqrt(dh)
    kern = functools.partial(_attn_proj_ln_kernel, nheads=nheads, dp=dp,
                             scale=scale, eps=eps)
    return pl.pallas_call(
        kern,
        out_shape=jax.ShapeDtypeStruct((B, S, D), jnp.float32),
        grid=(B, S // tq, S // tkv),
        in_specs=[
            pl.BlockSpec((1, tq, Hdp), lambda b, qi, ki: (b, qi, 0)),   # q
            pl.BlockSpec((1, tkv, Hdp), lambda b, qi, ki: (b, ki, 1)),  # k
            pl.BlockSpec((1, tkv, Hdp), lambda b, qi, ki: (b, ki, 2)),  # v
            pl.BlockSpec((1, tq, D), lambda b, qi, ki: (b, qi, 0)),     # residual
            pl.BlockSpec((Hdp, D), lambda b, qi, ki: (0, 0)),           # out_proj W
            pl.BlockSpec((1, D), lambda b, qi, ki: (0, 0)),             # out_proj b
            pl.BlockSpec((1, D), lambda b, qi, ki: (0, 0)),             # ln gamma
            pl.BlockSpec((1, D), lambda b, qi, ki: (0, 0)),             # ln beta
        ],
        out_specs=pl.BlockSpec((1, tq, D), lambda b, qi, ki: (b, qi, 0)),
        scratch_shapes=[pltpu.VMEM((nheads, tq, 1), jnp.float32),   # m
                        pltpu.VMEM((nheads, tq, 1), jnp.float32),   # l
                        pltpu.VMEM((nheads, tq, dp), jnp.float32)], # acc
        compiler_params=pltpu.CompilerParams(
            dimension_semantics=("parallel", "parallel", "arbitrary"),
            vmem_limit_bytes=VMEM_LIMIT),
    )(qkv, qkv, qkv, res, wo, bo[None, :], gamma[None, :], beta[None, :])


# ----------------------------------------------------------------------------
# Kernel 3: fused FFN  LayerNorm(x + lin2(relu(lin1(x))))
# ----------------------------------------------------------------------------

def _ffn_kernel(x_ref, w1_ref, b1_ref, w2_ref, b2_ref, g_ref, bb_ref,
                o_ref, acc_ref, *, eps):
    f = pl.program_id(1)

    @pl.when(f == 0)
    def _():
        acc_ref[...] = jnp.broadcast_to(b2_ref[...], acc_ref.shape)   # b2 folded in

    xb = x_ref[...].astype(jnp.bfloat16)
    h = jnp.dot(xb, w1_ref[...], preferred_element_type=jnp.float32) + b1_ref[...]
    h = jnp.maximum(h, 0.0).astype(jnp.bfloat16)   # hidden tile never touches HBM
    acc_ref[...] += jnp.dot(h, w2_ref[...], preferred_element_type=jnp.float32)

    @pl.when(f == pl.num_programs(1) - 1)
    def _():
        y = acc_ref[...] + x_ref[...]
        mu = jnp.mean(y, axis=-1, keepdims=True)
        var = jnp.mean(y * y, axis=-1, keepdims=True) - mu * mu
        o_ref[...] = (y - mu) * lax.rsqrt(var + eps) * g_ref[...] + bb_ref[...]


def pallas_ffn_add_ln(x, w1t, b1, w2t, b2, gamma, beta, *, eps=1e-5,
                      tm=512, tf=512):
    """LayerNorm(x + relu(x @ w1t + b1) @ w2t + b2).  x: (N, D) f32, weights bf16."""
    N, D = x.shape
    F = w1t.shape[1]
    tm = _pick_tile(N, tm, 8)
    tf = _pick_tile(F, tf, 128)
    kern = functools.partial(_ffn_kernel, eps=eps)
    return pl.pallas_call(
        kern,
        out_shape=jax.ShapeDtypeStruct((N, D), jnp.float32),
        grid=(N // tm, F // tf),
        in_specs=[pl.BlockSpec((tm, D), lambda i, f: (i, 0)),
                  pl.BlockSpec((D, tf), lambda i, f: (0, f)),
                  pl.BlockSpec((1, tf), lambda i, f: (0, f)),
                  pl.BlockSpec((tf, D), lambda i, f: (f, 0)),
                  pl.BlockSpec((1, D), lambda i, f: (0, 0)),
                  pl.BlockSpec((1, D), lambda i, f: (0, 0)),
                  pl.BlockSpec((1, D), lambda i, f: (0, 0))],
        out_specs=pl.BlockSpec((tm, D), lambda i, f: (i, 0)),
        scratch_shapes=[pltpu.VMEM((tm, D), jnp.float32)],
        compiler_params=pltpu.CompilerParams(
            dimension_semantics=("parallel", "arbitrary"),
            vmem_limit_bytes=VMEM_LIMIT),
    )(x, w1t, b1[None, :], w2t, b2[None, :], gamma[None, :], beta[None, :])


# ----------------------------------------------------------------------------
# Parameters / buffers (deterministic synthetic init, torch-equivalent layout)
# ----------------------------------------------------------------------------

def make_positional_encoding(max_len, d_model):
    position = jnp.arange(max_len, dtype=jnp.float32)[:, None]
    div_term = jnp.exp(jnp.arange(0, d_model, 2, dtype=jnp.float32)
                       * (-math.log(10000.0) / d_model))
    pe = jnp.zeros((max_len, d_model), jnp.float32)
    pe = pe.at[:, 0::2].set(jnp.sin(position * div_term))
    pe = pe.at[:, 1::2].set(jnp.cos(position * div_term))
    return pe  # (max_len, d_model)


def init_params(key, d_model, dim_ff, num_layers, output_size):
    """Raw f32 weights, pre-transposed as (Din, Dout) == torch W.T."""
    def nrm(k, shape, scale=0.02):
        return scale * jax.random.normal(k, shape, jnp.float32)

    keys = jax.random.split(key, num_layers + 1)
    layers = []
    for li in range(num_layers):
        k = jax.random.split(keys[li], 8)
        layers.append(dict(
            in_proj_wt=nrm(k[0], (d_model, 3 * d_model)),
            in_proj_b=nrm(k[1], (3 * d_model,)),
            out_proj_wt=nrm(k[2], (d_model, d_model)),
            out_proj_b=nrm(k[3], (d_model,)),
            ln1_g=jnp.ones((d_model,), jnp.float32),
            ln1_b=jnp.zeros((d_model,), jnp.float32),
            lin1_wt=nrm(k[4], (d_model, dim_ff)),
            lin1_b=nrm(k[5], (dim_ff,)),
            lin2_wt=nrm(k[6], (dim_ff, d_model)),
            lin2_b=nrm(k[7], (d_model,)),
            ln2_g=jnp.ones((d_model,), jnp.float32),
            ln2_b=jnp.zeros((d_model,), jnp.float32),
        ))
    kf = jax.random.split(keys[-1], 2)
    return dict(layers=layers,
                fc_wt=nrm(kf[0], (d_model, output_size)),
                fc_b=nrm(kf[1], (output_size,)))


def prepare_kernel_params(raw, nhead):
    """Kernel-ready params: bf16 weights, head dim zero-padded to 128 lanes for
    q/k/v and out_proj, final FC output padded to a multiple of 128."""
    H = nhead
    bf = jnp.bfloat16
    layers = []
    for L in raw['layers']:
        D = L['in_proj_wt'].shape[0]
        dh = D // H
        dp = ((dh + 127) // 128) * 128
        # QKV weight/bias -> layout (3, H, dp) along the output columns.
        w = L['in_proj_wt'].reshape(D, 3, H, dh)
        wq = jnp.zeros((D, 3, H, dp), jnp.float32).at[..., :dh].set(w)
        bq = jnp.zeros((3, H, dp), jnp.float32).at[..., :dh].set(
            L['in_proj_b'].reshape(3, H, dh))
        # out_proj weight rows -> (H, dp) with zero rows in the pad region.
        wo = L['out_proj_wt'].reshape(H, dh, D)
        wo_p = jnp.zeros((H, dp, D), jnp.float32).at[:, :dh, :].set(wo)
        layers.append(dict(
            qkv_wt=wq.reshape(D, 3 * H * dp).astype(bf),
            qkv_b=bq.reshape(3 * H * dp),
            out_wt=wo_p.reshape(H * dp, D).astype(bf),
            out_b=L['out_proj_b'],
            ln1_g=L['ln1_g'], ln1_b=L['ln1_b'],
            lin1_wt=L['lin1_wt'].astype(bf), lin1_b=L['lin1_b'],
            lin2_wt=L['lin2_wt'].astype(bf), lin2_b=L['lin2_b'],
            ln2_g=L['ln2_g'], ln2_b=L['ln2_b'],
        ))
    fc_wt, fc_b = raw['fc_wt'], raw['fc_b']
    Dout = fc_wt.shape[1]
    Dout_pad = ((Dout + 127) // 128) * 128
    fc_wt_p = jnp.zeros((fc_wt.shape[0], Dout_pad), jnp.float32).at[:, :Dout].set(fc_wt)
    fc_b_p = jnp.zeros((Dout_pad,), jnp.float32).at[:Dout].set(fc_b)
    return dict(layers=layers, fc_wt=fc_wt_p.astype(bf), fc_b=fc_b_p)


# ----------------------------------------------------------------------------
# CustomTokenizer.forward  (transformer=True branch, eval mode)
# ----------------------------------------------------------------------------

def custom_tokenizer_forward(x, params, pe, *, nhead, output_size):
    """x: (batch, seq, d_model) f32 -> logits (seq, batch, output_size).

    Residual stream is kept batch-major as a (B*S, D) f32 slab; attention
    handles the per-batch coupling; the final FC writes the seq-major layout
    directly.  Dropout layers are identity in eval mode.
    """
    B, S, D = x.shape
    H = nhead

    # PositionalEncoding
    x = x + pe[:S][None, :, :]
    xf = x.reshape(B * S, D)

    for L in params['layers']:
        dp = L['out_wt'].shape[0] // H
        dh = D // H
        # ---- self-attention block (post-LN TransformerEncoderLayer) ----
        qkv = pallas_linear(xf, L['qkv_wt'], L['qkv_b'],
                            out_dtype=jnp.bfloat16)            # (B*S, 3*H*dp)
        attn = pallas_attn_proj_ln(
            qkv.reshape(B, S, 3 * H * dp), xf.reshape(B, S, D),
            L['out_wt'], L['out_b'], L['ln1_g'], L['ln1_b'],
            nheads=H, dh=dh, dp=dp)                            # (B, S, D)
        xf = attn.reshape(B * S, D)
        # ---- fused feed-forward block: LN(x + lin2(relu(lin1(x)))) ----
        xf = pallas_ffn_add_ln(xf, L['lin1_wt'], L['lin1_b'],
                               L['lin2_wt'], L['lin2_b'],
                               L['ln2_g'], L['ln2_b'])

    out_pad = params['fc_wt'].shape[1]
    logits = pallas_linear_seq_major(xf, params['fc_wt'], params['fc_b'],
                                     batch=B, seq=S)            # (S, B*out_pad)
    logits = logits.reshape(S, B, out_pad)[..., :output_size]   # free reshape + slice
    return logits                                               # (S, B, out)


# ----------------------------------------------------------------------------
# Pure-JAX reference (mirrors the kernel's bf16 MXU casts; correctness only)
# ----------------------------------------------------------------------------

def reference_forward(x, params, pe, nhead):
    B, S, D = x.shape
    H, dh = nhead, D // nhead
    bf = jnp.bfloat16
    scale = 1.0 / math.sqrt(dh)

    def mm(a, b):
        return jnp.dot(a.astype(bf), b.astype(bf),
                       preferred_element_type=jnp.float32)

    def ln(y, g, b, eps=1e-5):
        mu = y.mean(-1, keepdims=True)
        var = ((y - mu) ** 2).mean(-1, keepdims=True)
        return (y - mu) / jnp.sqrt(var + eps) * g + b

    x = x + pe[:S][None, :, :]
    for L in params['layers']:
        qkv = (mm(x, L['in_proj_wt']) + L['in_proj_b']).astype(bf)
        q, k, v = jnp.split(qkv, 3, axis=-1)
        q = q.reshape(B, S, H, dh).transpose(0, 2, 1, 3)
        k = k.reshape(B, S, H, dh).transpose(0, 2, 1, 3)
        v = v.reshape(B, S, H, dh).transpose(0, 2, 1, 3)
        s = jnp.einsum('bhqd,bhkd->bhqk', q, k,
                       preferred_element_type=jnp.float32) * scale
        m = s.max(-1, keepdims=True)
        p = jnp.exp(s - m)
        l = p.sum(-1, keepdims=True)
        a = jnp.einsum('bhqk,bhkd->bhqd', p.astype(bf), v,
                       preferred_element_type=jnp.float32) / l
        a = a.transpose(0, 2, 1, 3).reshape(B, S, D)
        sa = mm(a, L['out_proj_wt']) + L['out_proj_b']
        x = ln(x + sa, L['ln1_g'], L['ln1_b'])
        h = jax.nn.relu(mm(x, L['lin1_wt']) + L['lin1_b'])
        ff = mm(h, L['lin2_wt']) + L['lin2_b']
        x = ln(x + ff, L['ln2_g'], L['ln2_b'])
    out = mm(x, params['fc_wt']) + params['fc_b']
    return jnp.transpose(out, (1, 0, 2))


# ----------------------------------------------------------------------------
# main
# ----------------------------------------------------------------------------

if __name__ == "__main__":
    # Small shapes consistent with the module (real model: d_model=768, nhead=8,
    # dim_feedforward=3072, num_layers=6, output=10000).  OUTPUT=200 deliberately
    # exercises the pad-to-multiple-of-128 path of the final FC.
    BATCH, SEQ = 2, 8
    D_MODEL, NHEAD, DIM_FF = 64, 8, 128
    NUM_LAYERS, OUTPUT = 2, 200
    MAX_LEN = 64

    key = jax.random.PRNGKey(0)
    kx, kp = jax.random.split(key)
    x = jax.random.normal(kx, (BATCH, SEQ, D_MODEL), jnp.float32)
    raw_params = init_params(kp, D_MODEL, DIM_FF, NUM_LAYERS, OUTPUT)
    kparams = prepare_kernel_params(raw_params, NHEAD)
    pe = make_positional_encoding(MAX_LEN, D_MODEL)

    # TODO(synk): LSTM branch (transformer=False) and training utilities
    # (masked_loss, optimizer/scheduler, save/load_from_checkpoint) are
    # host-side PyTorch plumbing with no kernel equivalent; only forward (the
    # transformer branch, eval mode) is implemented.

    fwd = jax.jit(functools.partial(custom_tokenizer_forward,
                                    nhead=NHEAD, output_size=OUTPUT))
    out = jax.block_until_ready(fwd(x, kparams, pe))

    ref = reference_forward(x, raw_params, pe, NHEAD)
    assert out.shape == (SEQ, BATCH, OUTPUT), out.shape
    max_err = float(jnp.max(jnp.abs(out - ref)))
    # reference mirrors the kernel's bf16 MXU casts; remaining deviation comes
    # from the approximate EUP reciprocal in the softmax denominator and
    # accumulation-order differences.
    assert max_err < 5e-3, max_err

    print("KERNEL_OK")
</pallas_src>

<mosaic_0001>
module attributes {stable_mosaic.version = 11 : i64} {
  func.func @_linear_kernel(%arg0: i32, %arg1: i32, %arg2: i32, %arg3: memref<16x64xf32, #tpu.memory_space<vmem>>, %arg4: memref<64x512xbf16, #tpu.memory_space<vmem>>, %arg5: memref<1x512xf32, #tpu.memory_space<vmem>>, %arg6: memref<16x512xbf16, #tpu.memory_space<vmem>>, %arg7: memref<16x512xf32, #tpu.memory_space<vmem>>) attributes {dimension_semantics = [#tpu.dimension_semantics<parallel>, #tpu.dimension_semantics<parallel>, #tpu.dimension_semantics<arbitrary>], iteration_bounds = array<i64: 1, 6, 1>, scalar_prefetch = 0 : i64, scratch_operands = 1 : i64, tpu.core_type = #tpu.core_type<tc>, window_params = [{transform_indices = @transform_0, window_bounds = array<i64: 16, 64>}, {transform_indices = @transform_1, window_bounds = array<i64: 64, 512>}, {transform_indices = @transform_2, window_bounds = array<i64: 1, 512>}, {transform_indices = @transform_3, window_bounds = array<i64: 16, 512>}]} {
    %c0_i32 = arith.constant 0 : i32
    %0 = arith.cmpi eq, %arg2, %c0_i32 : i32
    %1 = arith.extui %0 : i1 to i32
    %c0_i32_0 = arith.constant 0 : i32
    %2 = arith.cmpi ne, %1, %c0_i32_0 : i32
    scf.if %2 {
      %c0_10 = arith.constant 0 : index
      %c0_11 = arith.constant 0 : index
      %13 = vector.load %arg5[%c0_10, %c0_11] : memref<1x512xf32, #tpu.memory_space<vmem>>, vector<1x512xf32>
      %14 = vector.shape_cast %13 : vector<1x512xf32> to vector<1x512xf32>
      %15 = vector.broadcast %14 : vector<1x512xf32> to vector<16x512xf32>
      %c0_12 = arith.constant 0 : index
      %c0_13 = arith.constant 0 : index
      %16 = vector.load %arg7[%c0_12, %c0_13] : memref<16x512xf32, #tpu.memory_space<vmem>>, vector<16x512xf32>
      tpu.vector_store %arg7[%c0_12, %c0_13], %15 {strides = array<i32>} : memref<16x512xf32, #tpu.memory_space<vmem>>, vector<16x512xf32>,
    } else {
    }
    %c0 = arith.constant 0 : index
    %c0_1 = arith.constant 0 : index
    %3 = vector.load %arg7[%c0, %c0_1] : memref<16x512xf32, #tpu.memory_space<vmem>>, vector<16x512xf32>
    %c0_2 = arith.constant 0 : index
    %c0_3 = arith.constant 0 : index
    %4 = vector.load %arg3[%c0_2, %c0_3] : memref<16x64xf32, #tpu.memory_space<vmem>>, vector<16x64xf32>
    %5 = arith.truncf %4 : vector<16x64xf32> to vector<16x64xbf16>
    %c0_4 = arith.constant 0 : index
    %c0_5 = arith.constant 0 : index
    %6 = vector.load %arg4[%c0_4, %c0_5] : memref<64x512xbf16, #tpu.memory_space<vmem>>, vector<64x512xbf16>
    %cst = arith.constant dense<0.000000e+00> : vector<16x512xf32>
    %7 = tpu.matmul %5, %6, %cst {dimension_numbers = #tpu.dot_dimension_numbers<[1], [0], [0], [1], [0, 0, 1, 1], [], []>} : vector<16x64xbf16>, vector<64x512xbf16>, vector<16x512xf32> -> vector<16x512xf32>
    %8 = arith.addf %3, %7 : vector<16x512xf32>
    %c0_6 = arith.constant 0 : index
    %c0_7 = arith.constant 0 : index
    %9 = vector.load %arg7[%c0_6, %c0_7] : memref<16x512xf32, #tpu.memory_space<vmem>>, vector<16x512xf32>
    tpu.vector_store %arg7[%c0_6, %c0_7], %8 {strides = array<i32>} : memref<16x512xf32, #tpu.memory_space<vmem>>, vector<16x512xf32>,
    %c0_i32_8 = arith.constant 0 : i32
    %10 = arith.cmpi eq, %arg2, %c0_i32_8 : i32
    %11 = arith.extui %10 : i1 to i32
    %c0_i32_9 = arith.constant 0 : i32
    %12 = arith.cmpi ne, %11, %c0_i32_9 : i32
    scf.if %12 {
      %c0_10 = arith.constant 0 : index
      %c0_11 = arith.constant 0 : index
      %13 = vector.load %arg7[%c0_10, %c0_11] : memref<16x512xf32, #tpu.memory_space<vmem>>, vector<16x512xf32>
      %14 = arith.truncf %13 : vector<16x512xf32> to vector<16x512xbf16>
      %c0_12 = arith.constant 0 : index
      %c0_13 = arith.constant 0 : index
      %15 = vector.load %arg6[%c0_12, %c0_13] : memref<16x512xbf16, #tpu.memory_space<vmem>>, vector<16x512xbf16>
      tpu.vector_store %arg6[%c0_12, %c0_13], %14 {strides = array<i32>} : memref<16x512xbf16, #tpu.memory_space<vmem>>, vector<16x512xbf16>,
    } else {
    }
    return
  }
  func.func @transform_0(%arg0: i32, %arg1: i32, %arg2: i32) -> (i32, i32) {
    %c0_i32 = arith.constant 0 : i32
    return %arg0, %arg2 : i32, i32
  }
  func.func @transform_1(%arg0: i32, %arg1: i32, %arg2: i32) -> (i32, i32) {
    %c0_i32 = arith.constant 0 : i32
    return %arg2, %arg1 : i32, i32
  }
  func.func @transform_2(%arg0: i32, %arg1: i32, %arg2: i32) -> (i32, i32) {
    %c0_i32 = arith.constant 0 : i32
    %c0_i32_0 = arith.constant 0 : i32
    return %c0_i32, %arg1 : i32, i32
  }
  func.func @transform_3(%arg0: i32, %arg1: i32, %arg2: i32) -> (i32, i32) {
    %c0_i32 = arith.constant 0 : i32
    return %arg0, %arg1 : i32, i32
  }
}

module attributes {stable_mosaic.version = 11 : i64} {
  func.func @_attn_proj_ln_kernel(%arg0: i32, %arg1: i32, %arg2: i32, %arg3: memref<1x8x1024xbf16, #tpu.memory_space<vmem>>, %arg4: memref<1x8x1024xbf16, #tpu.memory_space<vmem>>, %arg5: memref<1x8x1024xbf16, #tpu.memory_space<vmem>>, %arg6: memref<1x8x64xf32, #tpu.memory_space<vmem>>, %arg7: memref<1024x64xbf16, #tpu.memory_space<vmem>>, %arg8: memref<1x64xf32, #tpu.memory_space<vmem>>, %arg9: memref<1x64xf32, #tpu.memory_space<vmem>>, %arg10: memref<1x64xf32, #tpu.memory_space<vmem>>, %arg11: memref<1x8x64xf32, #tpu.memory_space<vmem>>, %arg12: memref<8x8x1xf32, #tpu.memory_space<vmem>>, %arg13: memref<8x8x1xf32, #tpu.memory_space<vmem>>, %arg14: memref<8x8x128xf32, #tpu.memory_space<vmem>>) attributes {dimension_semantics = [#tpu.dimension_semantics<parallel>, #tpu.dimension_semantics<parallel>, #tpu.dimension_semantics<arbitrary>], iteration_bounds = array<i64: 2, 1, 1>, scalar_prefetch = 0 : i64, scratch_operands = 3 : i64, tpu.core_type = #tpu.core_type<tc>, window_params = [{transform_indices = @transform_0, window_bounds = array<i64: 1, 8, 1024>}, {transform_indices = @transform_1, window_bounds = array<i64: 1, 8, 1024>}, {transform_indices = @transform_2, window_bounds = array<i64: 1, 8, 1024>}, {transform_indices = @transform_3, window_bounds = array<i64: 1, 8, 64>}, {pipeline_mode = #tpu.pipeline_mode<synchronous>, transform_indices = @transform_4, window_bounds = array<i64: 1024, 64>}, {pipeline_mode = #tpu.pipeline_mode<synchronous>, transform_indices = @transform_5, window_bounds = array<i64: 1, 64>}, {pipeline_mode = #tpu.pipeline_mode<synchronous>, transform_indices = @transform_6, window_bounds = array<i64: 1, 64>}, {pipeline_mode = #tpu.pipeline_mode<synchronous>, transform_indices = @transform_7, window_bounds = array<i64: 1, 64>}, {transform_indices = @transform_8, window_bounds = array<i64: 1, 8, 64>}]} {
    %c0_i32 = arith.constant 0 : i32
    %0 = arith.cmpi eq, %arg2, %c0_i32 : i32
    %1 = arith.extui %0 : i1 to i32
    %c0_i32_0 = arith.constant 0 : i32
    %2 = arith.cmpi ne, %1, %c0_i32_0 : i32
    scf.if %2 {
      %cst_187 = arith.constant 0xFF800000 : f32
      %316 = vector.broadcast %cst_187 : f32 to vector<8x8x1xf32>
      %c0_188 = arith.constant 0 : index
      %c0_189 = arith.constant 0 : index
      %c0_190 = arith.constant 0 : index
      %317 = vector.load %arg12[%c0_188, %c0_189, %c0_190] : memref<8x8x1xf32, #tpu.memory_space<vmem>>, vector<8x8x1xf32>
      tpu.vector_store %arg12[%c0_188, %c0_189, %c0_190], %316 {strides = array<i32>} : memref<8x8x1xf32, #tpu.memory_space<vmem>>, vector<8x8x1xf32>,
      %cst_191 = arith.constant 0.000000e+00 : f32
      %318 = vector.broadcast %cst_191 : f32 to vector<8x8x1xf32>
      %c0_192 = arith.constant 0 : index
      %c0_193 = arith.constant 0 : index
      %c0_194 = arith.constant 0 : index
      %319 = vector.load %arg13[%c0_192, %c0_193, %c0_194] : memref<8x8x1xf32, #tpu.memory_space<vmem>>, vector<8x8x1xf32>
      tpu.vector_store %arg13[%c0_192, %c0_193, %c0_194], %318 {strides = array<i32>} : memref<8x8x1xf32, #tpu.memory_space<vmem>>, vector<8x8x1xf32>,
      %cst_195 = arith.constant 0.000000e+00 : f32
      %320 = vector.broadcast %cst_195 : f32 to vector<8x8x128xf32>
      %c0_196 = arith.constant 0 : index
      %c0_197 = arith.constant 0 : index
      %c0_198 = arith.constant 0 : index
      %321 = vector.load %arg14[%c0_196, %c0_197, %c0_198] : memref<8x8x128xf32, #tpu.memory_space<vmem>>, vector<8x8x128xf32>
      tpu.vector_store %arg14[%c0_196, %c0_197, %c0_198], %320 {strides = array<i32>} : memref<8x8x128xf32, #tpu.memory_space<vmem>>, vector<8x8x128xf32>,
    } else {
    }
    %c0 = arith.constant 0 : index
    %c0_1 = arith.constant 0 : index
    %c0_2 = arith.constant 0 : index
    %3 = vector.load %arg3[%c0, %c0_1, %c0_2] : memref<1x8x1024xbf16, #tpu.memory_space<vmem>>, vector<1x8x1024xbf16>
    %4 = vector.shape_cast %3 : vector<1x8x1024xbf16> to vector<8x1024xbf16>
    %c0_3 = arith.constant 0 : index
    %c0_4 = arith.constant 0 : index
    %c0_5 = arith.constant 0 : index
    %5 = vector.load %arg4[%c0_3, %c0_4, %c0_5] : memref<1x8x1024xbf16, #tpu.memory_space<vmem>>, vector<1x8x1024xbf16>
    %6 = vector.shape_cast %5 : vector<1x8x1024xbf16> to vector<8x1024xbf16>
    %c0_6 = arith.constant 0 : index
    %c0_7 = arith.constant 0 : index
    %c0_8 = arith.constant 0 : index
    %7 = vector.load %arg5[%c0_6, %c0_7, %c0_8] : memref<1x8x1024xbf16, #tpu.memory_space<vmem>>, vector<1x8x1024xbf16>
    %8 = vector.shape_cast %7 : vector<1x8x1024xbf16> to vector<8x1024xbf16>
    %9 = vector.extract_strided_slice %4 {offsets = [0, 0], sizes = [8, 128], strides = [1, 1]} : vector<8x1024xbf16> to vector<8x128xbf16>
    %10 = vector.extract_strided_slice %6 {offsets = [0, 0], sizes = [8, 128], strides = [1, 1]} : vector<8x1024xbf16> to vector<8x128xbf16>
    %cst = arith.constant dense<0.000000e+00> : vector<8x8xf32>
    %11 = tpu.matmul %9, %10, %cst {dimension_numbers = #tpu.dot_dimension_numbers<[1], [1], [0], [0], [0, 0, 1, 0], [], []>} : vector<8x128xbf16>, vector<8x128xbf16>, vector<8x8xf32> -> vector<8x8xf32>
    %cst_9 = arith.constant 0.353553385 : f32
    %12 = vector.broadcast %cst_9 : f32 to vector<8x8xf32>
    %13 = arith.mulf %11, %12 : vector<8x8xf32>
    %c0_10 = arith.constant 0 : index
    %c0_11 = arith.constant 0 : index
    %c0_12 = arith.constant 0 : index
    %14 = vector.load %arg12[%c0_10, %c0_11, %c0_12] : memref<8x8x1xf32, #tpu.memory_space<vmem>>, vector<1x8x1xf32>
    %15 = vector.shape_cast %14 : vector<1x8x1xf32> to vector<8x1xf32>
    %cst_13 = arith.constant dense<0xFF800000> : vector<8xf32>
    %16 = vector.multi_reduction <maximumf>, %13, %cst_13 [1] : vector<8x8xf32> to vector<8xf32>
    %17 = vector.shape_cast %16 : vector<8xf32> to vector<8x1xf32>
    %18 = arith.maximumf %15, %17 : vector<8x1xf32>
    %19 = arith.subf %15, %18 : vector<8x1xf32>
    %20 = math.exp %19 : vector<8x1xf32>
    %21 = vector.broadcast %18 : vector<8x1xf32> to vector<8x8xf32>
    %22 = arith.subf %13, %21 : vector<8x8xf32>
    %23 = math.exp %22 : vector<8x8xf32>
    %c0_14 = arith.constant 0 : index
    %c0_15 = arith.constant 0 : index
    %c0_16 = arith.constant 0 : index
    %24 = vector.load %arg13[%c0_14, %c0_15, %c0_16] : memref<8x8x1xf32, #tpu.memory_space<vmem>>, vector<1x8x1xf32>
    %25 = vector.shape_cast %24 : vector<1x8x1xf32> to vector<8x1xf32>
    %26 = arith.mulf %20, %25 : vector<8x1xf32>
    %cst_17 = arith.constant dense<0.000000e+00> : vector<8xf32>
    %27 = vector.multi_reduction <add>, %23, %cst_17 [1] : vector<8x8xf32> to vector<8xf32>
    %28 = vector.shape_cast %27 : vector<8xf32> to vector<8x1xf32>
    %29 = arith.addf %26, %28 : vector<8x1xf32>
    %c0_18 = arith.constant 0 : index
    %c0_19 = arith.constant 0 : index
    %c0_20 = arith.constant 0 : index
    %30 = vector.load %arg13[%c0_18, %c0_19, %c0_20] : memref<8x8x1xf32, #tpu.memory_space<vmem>>, vector<1x8x1xf32>
    %31 = vector.shape_cast %30 : vector<1x8x1xf32> to vector<8x1xf32>
    %32 = vector.shape_cast %29 : vector<8x1xf32> to vector<1x8x1xf32>
    tpu.vector_store %arg13[%c0_18, %c0_19, %c0_20], %32 {strides = array<i32>} : memref<8x8x1xf32, #tpu.memory_space<vmem>>, vector<1x8x1xf32>,
    %c0_21 = arith.constant 0 : index
    %c0_22 = arith.constant 0 : index
    %c0_23 = arith.constant 0 : index
    %33 = vector.load %arg14[%c0_21, %c0_22, %c0_23] : memref<8x8x128xf32, #tpu.memory_space<vmem>>, vector<1x8x128xf32>
    %34 = vector.shape_cast %33 : vector<1x8x128xf32> to vector<8x128xf32>
    %35 = vector.broadcast %20 : vector<8x1xf32> to vector<8x128xf32>
    %36 = arith.mulf %35, %34 : vector<8x128xf32>
    %37 = arith.truncf %23 : vector<8x8xf32> to vector<8x8xbf16>
    %38 = vector.extract_strided_slice %8 {offsets = [0, 0], sizes = [8, 128], strides = [1, 1]} : vector<8x1024xbf16> to vector<8x128xbf16>
    %cst_24 = arith.constant dense<0.000000e+00> : vector<8x128xf32>
    %39 = tpu.matmul %37, %38, %cst_24 {dimension_numbers = #tpu.dot_dimension_numbers<[1], [0], [0], [1], [0, 0, 1, 1], [], []>} : vector<8x8xbf16>, vector<8x128xbf16>, vector<8x128xf32> -> vector<8x128xf32>
    %40 = arith.addf %36, %39 : vector<8x128xf32>
    %c0_25 = arith.constant 0 : index
    %c0_26 = arith.constant 0 : index
    %c0_27 = arith.constant 0 : index
    %41 = vector.load %arg14[%c0_25, %c0_26, %c0_27] : memref<8x8x128xf32, #tpu.memory_space<vmem>>, vector<1x8x128xf32>
    %42 = vector.shape_cast %41 : vector<1x8x128xf32> to vector<8x128xf32>
    %43 = vector.shape_cast %40 : vector<8x128xf32> to vector<1x8x128xf32>
    tpu.vector_store %arg14[%c0_25, %c0_26, %c0_27], %43 {strides = array<i32>} : memref<8x8x128xf32, #tpu.memory_space<vmem>>, vector<1x8x128xf32>,
    %c0_28 = arith.constant 0 : index
    %c0_29 = arith.constant 0 : index
    %c0_30 = arith.constant 0 : index
    %44 = vector.load %arg12[%c0_28, %c0_29, %c0_30] : memref<8x8x1xf32, #tpu.memory_space<vmem>>, vector<1x8x1xf32>
    %45 = vector.shape_cast %44 : vector<1x8x1xf32> to vector<8x1xf32>
    %46 = vector.shape_cast %18 : vector<8x1xf32> to vector<1x8x1xf32>
    tpu.vector_store %arg12[%c0_28, %c0_29, %c0_30], %46 {strides = array<i32>} : memref<8x8x1xf32, #tpu.memory_space<vmem>>, vector<1x8x1xf32>,
    %47 = vector.extract_strided_slice %4 {offsets = [0, 128], sizes = [8, 128], strides = [1, 1]} : vector<8x1024xbf16> to vector<8x128xbf16>
    %48 = vector.extract_strided_slice %6 {offsets = [0, 128], sizes = [8, 128], strides = [1, 1]} : vector<8x1024xbf16> to vector<8x128xbf16>
    %cst_31 = arith.constant dense<0.000000e+00> : vector<8x8xf32>
    %49 = tpu.matmul %47, %48, %cst_31 {dimension_numbers = #tpu.dot_dimension_numbers<[1], [1], [0], [0], [0, 0, 1, 0], [], []>} : vector<8x128xbf16>, vector<8x128xbf16>, vector<8x8xf32> -> vector<8x8xf32>
    %cst_32 = arith.constant 0.353553385 : f32
    %50 = vector.broadcast %cst_32 : f32 to vector<8x8xf32>
    %51 = arith.mulf %49, %50 : vector<8x8xf32>
    %c1 = arith.constant 1 : index
    %c0_33 = arith.constant 0 : index
    %c0_34 = arith.constant 0 : index
    %52 = vector.load %arg12[%c1, %c0_33, %c0_34] : memref<8x8x1xf32, #tpu.memory_space<vmem>>, vector<1x8x1xf32>
    %53 = vector.shape_cast %52 : vector<1x8x1xf32> to vector<8x1xf32>
    %cst_35 = arith.constant dense<0xFF800000> : vector<8xf32>
    %54 = vector.multi_reduction <maximumf>, %51, %cst_35 [1] : vector<8x8xf32> to vector<8xf32>
    %55 = vector.shape_cast %54 : vector<8xf32> to vector<8x1xf32>
    %56 = arith.maximumf %53, %55 : vector<8x1xf32>
    %57 = arith.subf %53, %56 : vector<8x1xf32>
    %58 = math.exp %57 : vector<8x1xf32>
    %59 = vector.broadcast %56 : vector<8x1xf32> to vector<8x8xf32>
    %60 = arith.subf %51, %59 : vector<8x8xf32>
    %61 = math.exp %60 : vector<8x8xf32>
    %c1_36 = arith.constant 1 : index
    %c0_37 = arith.constant 0 : index
    %c0_38 = arith.constant 0 : index
    %62 = vector.load %arg13[%c1_36, %c0_37, %c0_38] : memref<8x8x1xf32, #tpu.memory_space<vmem>>, vector<1x8x1xf32>
    %63 = vector.shape_cast %62 : vector<1x8x1xf32> to vector<8x1xf32>
    %64 = arith.mulf %58, %63 : vector<8x1xf32>
    %cst_39 = arith.constant dense<0.000000e+00> : vector<8xf32>
    %65 = vector.multi_reduction <add>, %61, %cst_39 [1] : vector<8x8xf32> to vector<8xf32>
    %66 = vector.shape_cast %65 : vector<8xf32> to vector<8x1xf32>
    %67 = arith.addf %64, %66 : vector<8x1xf32>
    %c1_40 = arith.constant 1 : index
    %c0_41 = arith.constant 0 : index
    %c0_42 = arith.constant 0 : index
    %68 = vector.load %arg13[%c1_40, %c0_41, %c0_42] : memref<8x8x1xf32, #tpu.memory_space<vmem>>, vector<1x8x1xf32>
    %69 = vector.shape_cast %68 : vector<1x8x1xf32> to vector<8x1xf32>
    %70 = vector.shape_cast %67 : vector<8x1xf32> to vector<1x8x1xf32>
    tpu.vector_store %arg13[%c1_40, %c0_41, %c0_42], %70 {strides = array<i32>} : memref<8x8x1xf32, #tpu.memory_space<vmem>>, vector<1x8x1xf32>,
    %c1_43 = arith.constant 1 : index
    %c0_44 = arith.constant 0 : index
    %c0_45 = arith.constant 0 : index
    %71 = vector.load %arg14[%c1_43, %c0_44, %c0_45] : memref<8x8x128xf32, #tpu.memory_space<vmem>>, vector<1x8x128xf32>
    %72 = vector.shape_cast %71 : vector<1x8x128xf32> to vector<8x128xf32>
    %73 = vector.broadcast %58 : vector<8x1xf32> to vector<8x128xf32>
    %74 = arith.mulf %73, %72 : vector<8x128xf32>
    %75 = arith.truncf %61 : vector<8x8xf32> to vector<8x8xbf16>
    %76 = vector.extract_strided_slice %8 {offsets = [0, 128], sizes = [8, 128], strides = [1, 1]} : vector<8x1024xbf16> to vector<8x128xbf16>
    %cst_46 = arith.constant dense<0.000000e+00> : vector<8x128xf32>
    %77 = tpu.matmul %75, %76, %cst_46 {dimension_numbers = #tpu.dot_dimension_numbers<[1], [0], [0], [1], [0, 0, 1, 1], [], []>} : vector<8x8xbf16>, vector<8x128xbf16>, vector<8x128xf32> -> vector<8x128xf32>
    %78 = arith.addf %74, %77 : vector<8x128xf32>
    %c1_47 = arith.constant 1 : index
    %c0_48 = arith.constant 0 : index
    %c0_49 = arith.constant 0 : index
    %79 = vector.load %arg14[%c1_47, %c0_48, %c0_49] : memref<8x8x128xf32, #tpu.memory_space<vmem>>, vector<1x8x128xf32>
    %80 = vector.shape_cast %79 : vector<1x8x128xf32> to vector<8x128xf32>
    %81 = vector.shape_cast %78 : vector<8x128xf32> to vector<1x8x128xf32>
    tpu.vector_store %arg14[%c1_47, %c0_48, %c0_49], %81 {strides = array<i32>} : memref<8x8x128xf32, #tpu.memory_space<vmem>>, vector<1x8x128xf32>,
    %c1_50 = arith.constant 1 : index
    %c0_51 = arith.constant 0 : index
    %c0_52 = arith.constant 0 : index
    %82 = vector.load %arg12[%c1_50, %c0_51, %c0_52] : memref<8x8x1xf32, #tpu.memory_space<vmem>>, vector<1x8x1xf32>
    %83 = vector.shape_cast %82 : vector<1x8x1xf32> to vector<8x1xf32>
    %84 = vector.shape_cast %56 : vector<8x1xf32> to vector<1x8x1xf32>
    tpu.vector_store %arg12[%c1_50, %c0_51, %c0_52], %84 {strides = array<i32>} : memref<8x8x1xf32, #tpu.memory_space<vmem>>, vector<1x8x1xf32>,
    %85 = vector.extract_strided_slice %4 {offsets = [0, 256], sizes = [8, 128], strides = [1, 1]} : vector<8x1024xbf16> to vector<8x128xbf16>
    %86 = vector.extract_strided_slice %6 {offsets = [0, 256], sizes = [8, 128], strides = [1, 1]} : vector<8x1024xbf16> to vector<8x128xbf16>
    %cst_53 = arith.constant dense<0.000000e+00> : vector<8x8xf32>
    %87 = tpu.matmul %85, %86, %cst_53 {dimension_numbers = #tpu.dot_dimension_numbers<[1], [1], [0], [0], [0, 0, 1, 0], [], []>} : vector<8x128xbf16>, vector<8x128xbf16>, vector<8x8xf32> -> vector<8x8xf32>
    %cst_54 = arith.constant 0.353553385 : f32
    %88 = vector.broadcast %cst_54 : f32 to vector<8x8xf32>
    %89 = arith.mulf %87, %88 : vector<8x8xf32>
    %c2 = arith.constant 2 : index
    %c0_55 = arith.constant 0 : index
    %c0_56 = arith.constant 0 : index
    %90 = vector.load %arg12[%c2, %c0_55, %c0_56] : memref<8x8x1xf32, #tpu.memory_space<vmem>>, vector<1x8x1xf32>
    %91 = vector.shape_cast %90 : vector<1x8x1xf32> to vector<8x1xf32>
    %cst_57 = arith.constant dense<0xFF800000> : vector<8xf32>
    %92 = vector.multi_reduction <maximumf>, %89, %cst_57 [1] : vector<8x8xf32> to vector<8xf32>
    %93 = vector.shape_cast %92 : vector<8xf32> to vector<8x1xf32>
    %94 = arith.maximumf %91, %93 : vector<8x1xf32>
    %95 = arith.subf %91, %94 : vector<8x1xf32>
    %96 = math.exp %95 : vector<8x1xf32>
    %97 = vector.broadcast %94 : vector<8x1xf32> to vector<8x8xf32>
    %98 = arith.subf %89, %97 : vector<8x8xf32>
    %99 = math.exp %98 : vector<8x8xf32>
    %c2_58 = arith.constant 2 : index
    %c0_59 = arith.constant 0 : index
    %c0_60 = arith.constant 0 : index
    %100 = vector.load %arg13[%c2_58, %c0_59, %c0_60] : memref<8x8x1xf32, #tpu.memory_space<vmem>>, vector<1x8x1xf32>
    %101 = vector.shape_cast %100 : vector<1x8x1xf32> to vector<8x1xf32>
    %102 = arith.mulf %96, %101 : vector<8x1xf32>
    %cst_61 = arith.constant dense<0.000000e+00> : vector<8xf32>
    %103 = vector.multi_reduction <add>, %99, %cst_61 [1] : vector<8x8xf32> to vector<8xf32>
    %104 = vector.shape_cast %103 : vector<8xf32> to vector<8x1xf32>
    %105 = arith.addf %102, %104 : vector<8x1xf32>
    %c2_62 = arith.constant 2 : index
    %c0_63 = arith.constant 0 : index
    %c0_64 = arith.constant 0 : index
    %106 = vector.load %arg13[%c2_62, %c0_63, %c0_64] : memref<8x8x1xf32, #tpu.memory_space<vmem>>, vector<1x8x1xf32>
    %107 = vector.shape_cast %106 : vector<1x8x1xf32> to vector<8x1xf32>
    %108 = vector.shape_cast %105 : vector<8x1xf32> to vector<1x8x1xf32>
    tpu.vector_store %arg13[%c2_62, %c0_63, %c0_64], %108 {strides = array<i32>} : memref<8x8x1xf32, #tpu.memory_space<vmem>>, vector<1x8x1xf32>,
    %c2_65 = arith.constant 2 : index
    %c0_66 = arith.constant 0 : index
    %c0_67 = arith.constant 0 : index
    %109 = vector.load %arg14[%c2_65, %c0_66, %c0_67] : memref<8x8x128xf32, #tpu.memory_space<vmem>>, vector<1x8x128xf32>
    %110 = vector.shape_cast %109 : vector<1x8x128xf32> to vector<8x128xf32>
    %111 = vector.broadcast %96 : vector<8x1xf32> to vector<8x128xf32>
    %112 = arith.mulf %111, %110 : vector<8x128xf32>
    %113 = arith.truncf %99 : vector<8x8xf32> to vector<8x8xbf16>
    %114 = vector.extract_strided_slice %8 {offsets = [0, 256], sizes = [8, 128], strides = [1, 1]} : vector<8x1024xbf16> to vector<8x128xbf16>
    %cst_68 = arith.constant dense<0.000000e+00> : vector<8x128xf32>
    %115 = tpu.matmul %113, %114, %cst_68 {dimension_numbers = #tpu.dot_dimension_numbers<[1], [0], [0], [1], [0, 0, 1, 1], [], []>} : vector<8x8xbf16>, vector<8x128xbf16>, vector<8x128xf32> -> vector<8x128xf32>
    %116 = arith.addf %112, %115 : vector<8x128xf32>
    %c2_69 = arith.constant 2 : index
    %c0_70 = arith.constant 0 : index
    %c0_71 = arith.constant 0 : index
    %117 = vector.load %arg14[%c2_69, %c0_70, %c0_71] : memref<8x8x128xf32, #tpu.memory_space<vmem>>, vector<1x8x128xf32>
    %118 = vector.shape_cast %117 : vector<1x8x128xf32> to vector<8x128xf32>
    %119 = vector.shape_cast %116 : vector<8x128xf32> to vector<1x8x128xf32>
    tpu.vector_store %arg14[%c2_69, %c0_70, %c0_71], %119 {strides = array<i32>} : memref<8x8x128xf32, #tpu.memory_space<vmem>>, vector<1x8x128xf32>,
    %c2_72 = arith.constant 2 : index
    %c0_73 = arith.constant 0 : index
    %c0_74 = arith.constant 0 : index
    %120 = vector.load %arg12[%c2_72, %c0_73, %c0_74] : memref<8x8x1xf32, #tpu.memory_space<vmem>>, vector<1x8x1xf32>
    %121 = vector.shape_cast %120 : vector<1x8x1xf32> to vector<8x1xf32>
    %122 = vector.shape_cast %94 : vector<8x1xf32> to vector<1x8x1xf32>
    tpu.vector_store %arg12[%c2_72, %c0_73, %c0_74], %122 {strides = array<i32>} : memref<8x8x1xf32, #tpu.memory_space<vmem>>, vector<1x8x1xf32>,
    %123 = vector.extract_strided_slice %4 {offsets = [0, 384], sizes = [8, 128], strides = [1, 1]} : vector<8x1024xbf16> to vector<8x128xbf16>
    %124 = vector.extract_strided_slice %6 {offsets = [0, 384], sizes = [8, 128], strides = [1, 1]} : vector<8x1024xbf16> to vector<8x128xbf16>
    %cst_75 = arith.constant dense<0.000000e+00> : vector<8x8xf32>
    %125 = tpu.matmul %123, %124, %cst_75 {dimension_numbers = #tpu.dot_dimension_numbers<[1], [1], [0], [0], [0, 0, 1, 0], [], []>} : vector<8x128xbf16>, vector<8x128xbf16>, vector<8x8xf32> -> vector<8x8xf32>
    %cst_76 = arith.constant 0.353553385 : f32
    %126 = vector.broadcast %cst_76 : f32 to vector<8x8xf32>
    %127 = arith.mulf %125, %126 : vector<8x8xf32>
    %c3 = arith.constant 3 : index
    %c0_77 = arith.constant 0 : index
    %c0_78 = arith.constant 0 : index
    %128 = vector.load %arg12[%c3, %c0_77, %c0_78] : memref<8x8x1xf32, #tpu.memory_space<vmem>>, vector<1x8x1xf32>
    %129 = vector.shape_cast %128 : vector<1x8x1xf32> to vector<8x1xf32>
    %cst_79 = arith.constant dense<0xFF800000> : vector<8xf32>
    %130 = vector.multi_reduction <maximumf>, %127, %cst_79 [1] : vector<8x8xf32> to vector<8xf32>
    %131 = vector.shape_cast %130 : vector<8xf32> to vector<8x1xf32>
    %132 = arith.maximumf %129, %131 : vector<8x1xf32>
    %133 = arith.subf %129, %132 : vector<8x1xf32>
    %134 = math.exp %133 : vector<8x1xf32>
    %135 = vector.broadcast %132 : vector<8x1xf32> to vector<8x8xf32>
    %136 = arith.subf %127, %135 : vector<8x8xf32>
    %137 = math.exp %136 : vector<8x8xf32>
    %c3_80 = arith.constant 3 : index
    %c0_81 = arith.constant 0 : index
    %c0_82 = arith.constant 0 : index
    %138 = vector.load %arg13[%c3_80, %c0_81, %c0_82] : memref<8x8x1xf32, #tpu.memory_space<vmem>>, vector<1x8x1xf32>
    %139 = vector.shape_cast %138 : vector<1x8x1xf32> to vector<8x1xf32>
    %140 = arith.mulf %134, %139 : vector<8x1xf32>
    %cst_83 = arith.constant dense<0.000000e+00> : vector<8xf32>
    %141 = vector.multi_reduction <add>, %137, %cst_83 [1] : vector<8x8xf32> to vector<8xf32>
    %142 = vector.shape_cast %141 : vector<8xf32> to vector<8x1xf32>
    %143 = arith.addf %140, %142 : vector<8x1xf32>
    %c3_84 = arith.constant 3 : index
    %c0_85 = arith.constant 0 : index
    %c0_86 = arith.constant 0 : index
    %144 = vector.load %arg13[%c3_84, %c0_85, %c0_86] : memref<8x8x1xf32, #tpu.memory_space<vmem>>, vector<1x8x1xf32>
    %145 = vector.shape_cast %144 : vector<1x8x1xf32> to vector<8x1xf32>
    %146 = vector.shape_cast %143 : vector<8x1xf32> to vector<1x8x1xf32>
    tpu.vector_store %arg13[%c3_84, %c0_85, %c0_86], %146 {strides = array<i32>} : memref<8x8x1xf32, #tpu.memory_space<vmem>>, vector<1x8x1xf32>,
    %c3_87 = arith.constant 3 : index
    %c0_88 = arith.constant 0 : index
    %c0_89 = arith.constant 0 : index
    %147 = vector.load %arg14[%c3_87, %c0_88, %c0_89] : memref<8x8x128xf32, #tpu.memory_space<vmem>>, vector<1x8x128xf32>
    %148 = vector.shape_cast %147 : vector<1x8x128xf32> to vector<8x128xf32>
    %149 = vector.broadcast %134 : vector<8x1xf32> to vector<8x128xf32>
    %150 = arith.mulf %149, %148 : vector<8x128xf32>
    %151 = arith.truncf %137 : vector<8x8xf32> to vector<8x8xbf16>
    %152 = vector.extract_strided_slice %8 {offsets = [0, 384], sizes = [8, 128], strides = [1, 1]} : vector<8x1024xbf16> to vector<8x128xbf16>
    %cst_90 = arith.constant dense<0.000000e+00> : vector<8x128xf32>
    %153 = tpu.matmul %151, %152, %cst_90 {dimension_numbers = #tpu.dot_dimension_numbers<[1], [0], [0], [1], [0, 0, 1, 1], [], []>} : vector<8x8xbf16>, vector<8x128xbf16>, vector<8x128xf32> -> vector<8x128xf32>
    %154 = arith.addf %150, %153 : vector<8x128xf32>
    %c3_91 = arith.constant 3 : index
    %c0_92 = arith.constant 0 : index
    %c0_93 = arith.constant 0 : index
    %155 = vector.load %arg14[%c3_91, %c0_92, %c0_93] : memref<8x8x128xf32, #tpu.memory_space<vmem>>, vector<1x8x128xf32>
    %156 = vector.shape_cast %155 : vector<1x8x128xf32> to vector<8x128xf32>
    %157 = vector.shape_cast %154 : vector<8x128xf32> to vector<1x8x128xf32>
    tpu.vector_store %arg14[%c3_91, %c0_92, %c0_93], %157 {strides = array<i32>} : memref<8x8x128xf32, #tpu.memory_space<vmem>>, vector<1x8x128xf32>,
    %c3_94 = arith.constant 3 : index
    %c0_95 = arith.constant 0 : index
    %c0_96 = arith.constant 0 : index
    %158 = vector.load %arg12[%c3_94, %c0_95, %c0_96] : memref<8x8x1xf32, #tpu.memory_space<vmem>>, vector<1x8x1xf32>
    %159 = vector.shape_cast %158 : vector<1x8x1xf32> to vector<8x1xf32>
    %160 = vector.shape_cast %132 : vector<8x1xf32> to vector<1x8x1xf32>
    tpu.vector_store %arg12[%c3_94, %c0_95, %c0_96], %160 {strides = array<i32>} : memref<8x8x1xf32, #tpu.memory_space<vmem>>, vector<1x8x1xf32>,
    %161 = vector.extract_strided_slice %4 {offsets = [0, 512], sizes = [8, 128], strides = [1, 1]} : vector<8x1024xbf16> to vector<8x128xbf16>
    %162 = vector.extract_strided_slice %6 {offsets = [0, 512], sizes = [8, 128], strides = [1, 1]} : vector<8x1024xbf16> to vector<8x128xbf16>
    %cst_97 = arith.constant dense<0.000000e+00> : vector<8x8xf32>
    %163 = tpu.matmul %161, %162, %cst_97 {dimension_numbers = #tpu.dot_dimension_numbers<[1], [1], [0], [0], [0, 0, 1, 0], [], []>} : vector<8x128xbf16>, vector<8x128xbf16>, vector<8x8xf32> -> vector<8x8xf32>
    %cst_98 = arith.constant 0.353553385 : f32
    %164 = vector.broadcast %cst_98 : f32 to vector<8x8xf32>
    %165 = arith.mulf %163, %164 : vector<8x8xf32>
    %c4 = arith.constant 4 : index
    %c0_99 = arith.constant 0 : index
    %c0_100 = arith.constant 0 : index
    %166 = vector.load %arg12[%c4, %c0_99, %c0_100] : memref<8x8x1xf32, #tpu.memory_space<vmem>>, vector<1x8x1xf32>
    %167 = vector.shape_cast %166 : vector<1x8x1xf32> to vector<8x1xf32>
    %cst_101 = arith.constant dense<0xFF800000> : vector<8xf32>
    %168 = vector.multi_reduction <maximumf>, %165, %cst_101 [1] : vector<8x8xf32> to vector<8xf32>
    %169 = vector.shape_cast %168 : vector<8xf32> to vector<8x1xf32>
    %170 = arith.maximumf %167, %169 : vector<8x1xf32>
    %171 = arith.subf %167, %170 : vector<8x1xf32>
    %172 = math.exp %171 : vector<8x1xf32>
    %173 = vector.broadcast %170 : vector<8x1xf32> to vector<8x8xf32>
    %174 = arith.subf %165, %173 : vector<8x8xf32>
    %175 = math.exp %174 : vector<8x8xf32>
    %c4_102 = arith.constant 4 : index
    %c0_103 = arith.constant 0 : index
    %c0_104 = arith.constant 0 : index
    %176 = vector.load %arg13[%c4_102, %c0_103, %c0_104] : memref<8x8x1xf32, #tpu.memory_space<vmem>>, vector<1x8x1xf32>
    %177 = vector.shape_cast %176 : vector<1x8x1xf32> to vector<8x1xf32>
    %178 = arith.mulf %172, %177 : vector<8x1xf32>
    %cst_105 = arith.constant dense<0.000000e+00> : vector<8xf32>
    %179 = vector.multi_reduction <add>, %175, %cst_105 [1] : vector<8x8xf32> to vector<8xf32>
    %180 = vector.shape_cast %179 : vector<8xf32> to vector<8x1xf32>
    %181 = arith.addf %178, %180 : vector<8x1xf32>
    %c4_106 = arith.constant 4 : index
    %c0_107 = arith.constant 0 : index
    %c0_108 = arith.constant 0 : index
    %182 = vector.load %arg13[%c4_106, %c0_107, %c0_108] : memref<8x8x1xf32, #tpu.memory_space<vmem>>, vector<1x8x1xf32>
    %183 = vector.shape_cast %182 : vector<1x8x1xf32> to vector<8x1xf32>
    %184 = vector.shape_cast %181 : vector<8x1xf32> to vector<1x8x1xf32>
    tpu.vector_store %arg13[%c4_106, %c0_107, %c0_108], %184 {strides = array<i32>} : memref<8x8x1xf32, #tpu.memory_space<vmem>>, vector<1x8x1xf32>,
    %c4_109 = arith.constant 4 : index
    %c0_110 = arith.constant 0 : index
    %c0_111 = arith.constant 0 : index
    %185 = vector.load %arg14[%c4_109, %c0_110, %c0_111] : memref<8x8x128xf32, #tpu.memory_space<vmem>>, vector<1x8x128xf32>
    %186 = vector.shape_cast %185 : vector<1x8x128xf32> to vector<8x128xf32>
    %187 = vector.broadcast %172 : vector<8x1xf32> to vector<8x128xf32>
    %188 = arith.mulf %187, %186 : vector<8x128xf32>
    %189 = arith.truncf %175 : vector<8x8xf32> to vector<8x8xbf16>
    %190 = vector.extract_strided_slice %8 {offsets = [0, 512], sizes = [8, 128], strides = [1, 1]} : vector<8x1024xbf16> to vector<8x128xbf16>
    %cst_112 = arith.constant dense<0.000000e+00> : vector<8x128xf32>
    %191 = tpu.matmul %189, %190, %cst_112 {dimension_numbers = #tpu.dot_dimension_numbers<[1], [0], [0], [1], [0, 0, 1, 1], [], []>} : vector<8x8xbf16>, vector<8x128xbf16>, vector<8x128xf32> -> vector<8x128xf32>
    %192 = arith.addf %188, %191 : vector<8x128xf32>
    %c4_113 = arith.constant 4 : index
    %c0_114 = arith.constant 0 : index
    %c0_115 = arith.constant 0 : index
    %193 = vector.load %arg14[%c4_113, %c0_114, %c0_115] : memref<8x8x128xf32, #tpu.memory_space<vmem>>, vector<1x8x128xf32>
    %194 = vector.shape_cast %193 : vector<1x8x128xf32> to vector<8x128xf32>
    %195 = vector.shape_cast %192 : vector<8x128xf32> to vector<1x8x128xf32>
    tpu.vector_store %arg14[%c4_113, %c0_114, %c0_115], %195 {strides = array<i32>} : memref<8x8x128xf32, #tpu.memory_space<vmem>>, vector<1x8x128xf32>,
    %c4_116 = arith.constant 4 : index
    %c0_117 = arith.constant 0 : index
    %c0_118 = arith.constant 0 : index
    %196 = vector.load %arg12[%c4_116, %c0_117, %c0_118] : memref<8x8x1xf32, #tpu.memory_space<vmem>>, vector<1x8x1xf32>
    %197 = vector.shape_cast %196 : vector<1x8x1xf32> to vector<8x1xf32>
    %198 = vector.shape_cast %170 : vector<8x1xf32> to vector<1x8x1xf32>
    tpu.vector_store %arg12[%c4_116, %c0_117, %c0_118], %198 {strides = array<i32>} : memref<8x8x1xf32, #tpu.memory_space<vmem>>, vector<1x8x1xf32>,
    %199 = vector.extract_strided_slice %4 {offsets = [0, 640], sizes = [8, 128], strides = [1, 1]} : vector<8x1024xbf16> to vector<8x128xbf16>
    %200 = vector.extract_strided_slice %6 {offsets = [0, 640], sizes = [8, 128], strides = [1, 1]} : vector<8x1024xbf16> to vector<8x128xbf16>
    %cst_119 = arith.constant dense<0.000000e+00> : vector<8x8xf32>
    %201 = tpu.matmul %199, %200, %cst_119 {dimension_numbers = #tpu.dot_dimension_numbers<[1], [1], [0], [0], [0, 0, 1, 0], [], []>} : vector<8x128xbf16>, vector<8x128xbf16>, vector<8x8xf32> -> vector<8x8xf32>
    %cst_120 = arith.constant 0.353553385 : f32
    %202 = vector.broadcast %cst_120 : f32 to vector<8x8xf32>
    %203 = arith.mulf %201, %202 : vector<8x8xf32>
    %c5 = arith.constant 5 : index
    %c0_121 = arith.constant 0 : index
    %c0_122 = arith.constant 0 : index
    %204 = vector.load %arg12[%c5, %c0_121, %c0_122] : memref<8x8x1xf32, #tpu.memory_space<vmem>>, vector<1x8x1xf32>
    %205 = vector.shape_cast %204 : vector<1x8x1xf32> to vector<8x1xf32>
    %cst_123 = arith.constant dense<0xFF800000> : vector<8xf32>
    %206 = vector.multi_reduction <maximumf>, %203, %cst_123 [1] : vector<8x8xf32> to vector<8xf32>
    %207 = vector.shape_cast %206 : vector<8xf32> to vector<8x1xf32>
    %208 = arith.maximumf %205, %207 : vector<8x1xf32>
    %209 = arith.subf %205, %208 : vector<8x1xf32>
    %210 = math.exp %209 : vector<8x1xf32>
    %211 = vector.broadcast %208 : vector<8x1xf32> to vector<8x8xf32>
    %212 = arith.subf %203, %211 : vector<8x8xf32>
    %213 = math.exp %212 : vector<8x8xf32>
    %c5_124 = arith.constant 5 : index
    %c0_125 = arith.constant 0 : index
    %c0_126 = arith.constant 0 : index
    %214 = vector.load %arg13[%c5_124, %c0_125, %c0_126] : memref<8x8x1xf32, #tpu.memory_space<vmem>>, vector<1x8x1xf32>
    %215 = vector.shape_cast %214 : vector<1x8x1xf32> to vector<8x1xf32>
    %216 = arith.mulf %210, %215 : vector<8x1xf32>
    %cst_127 = arith.constant dense<0.000000e+00> : vector<8xf32>
    %217 = vector.multi_reduction <add>, %213, %cst_127 [1] : vector<8x8xf32> to vector<8xf32>
    %218 = vector.shape_cast %217 : vector<8xf32> to vector<8x1xf32>
    %219 = arith.addf %216, %218 : vector<8x1xf32>
    %c5_128 = arith.constant 5 : index
    %c0_129 = arith.constant 0 : index
    %c0_130 = arith.constant 0 : index
    %220 = vector.load %arg13[%c5_128, %c0_129, %c0_130] : memref<8x8x1xf32, #tpu.memory_space<vmem>>, vector<1x8x1xf32>
    %221 = vector.shape_cast %220 : vector<1x8x1xf32> to vector<8x1xf32>
    %222 = vector.shape_cast %219 : vector<8x1xf32> to vector<1x8x1xf32>
    tpu.vector_store %arg13[%c5_128, %c0_129, %c0_130], %222 {strides = array<i32>} : memref<8x8x1xf32, #tpu.memory_space<vmem>>, vector<1x8x1xf32>,
    %c5_131 = arith.constant 5 : index
    %c0_132 = arith.constant 0 : index
    %c0_133 = arith.constant 0 : index
    %223 = vector.load %arg14[%c5_131, %c0_132, %c0_133] : memref<8x8x128xf32, #tpu.memory_space<vmem>>, vector<1x8x128xf32>
    %224 = vector.shape_cast %223 : vector<1x8x128xf32> to vector<8x128xf32>
    %225 = vector.broadcast %210 : vector<8x1xf32> to vector<8x128xf32>
    %226 = arith.mulf %225, %224 : vector<8x128xf32>
    %227 = arith.truncf %213 : vector<8x8xf32> to vector<8x8xbf16>
    %228 = vector.extract_strided_slice %8 {offsets = [0, 640], sizes = [8, 128], strides = [1, 1]} : vector<8x1024xbf16> to vector<8x128xbf16>
    %cst_134 = arith.constant dense<0.000000e+00> : vector<8x128xf32>
    %229 = tpu.matmul %227, %228, %cst_134 {dimension_numbers = #tpu.dot_dimension_numbers<[1], [0], [0], [1], [0, 0, 1, 1], [], []>} : vector<8x8xbf16>, vector<8x128xbf16>, vector<8x128xf32> -> vector<8x128xf32>
    %230 = arith.addf %226, %229 : vector<8x128xf32>
    %c5_135 = arith.constant 5 : index
    %c0_136 = arith.constant 0 : index
    %c0_137 = arith.constant 0 : index
    %231 = vector.load %arg14[%c5_135, %c0_136, %c0_137] : memref<8x8x128xf32, #tpu.memory_space<vmem>>, vector<1x8x128xf32>
    %232 = vector.shape_cast %231 : vector<1x8x128xf32> to vector<8x128xf32>
    %233 = vector.shape_cast %230 : vector<8x128xf32> to vector<1x8x128xf32>
    tpu.vector_store %arg14[%c5_135, %c0_136, %c0_137], %233 {strides = array<i32>} : memref<8x8x128xf32, #tpu.memory_space<vmem>>, vector<1x8x128xf32>,
    %c5_138 = arith.constant 5 : index
    %c0_139 = arith.constant 0 : index
    %c0_140 = arith.constant 0 : index
    %234 = vector.load %arg12[%c5_138, %c0_139, %c0_140] : memref<8x8x1xf32, #tpu.memory_space<vmem>>, vector<1x8x1xf32>
    %235 = vector.shape_cast %234 : vector<1x8x1xf32> to vector<8x1xf32>
    %236 = vector.shape_cast %208 : vector<8x1xf32> to vector<1x8x1xf32>
    tpu.vector_store %arg12[%c5_138, %c0_139, %c0_140], %236 {strides = array<i32>} : memref<8x8x1xf32, #tpu.memory_space<vmem>>, vector<1x8x1xf32>,
    %237 = vector.extract_strided_slice %4 {offsets = [0, 768], sizes = [8, 128], strides = [1, 1]} : vector<8x1024xbf16> to vector<8x128xbf16>
    %238 = vector.extract_strided_slice %6 {offsets = [0, 768], sizes = [8, 128], strides = [1, 1]} : vector<8x1024xbf16> to vector<8x128xbf16>
    %cst_141 = arith.constant dense<0.000000e+00> : vector<8x8xf32>
    %239 = tpu.matmul %237, %238, %cst_141 {dimension_numbers = #tpu.dot_dimension_numbers<[1], [1], [0], [0], [0, 0, 1, 0], [], []>} : vector<8x128xbf16>, vector<8x128xbf16>, vector<8x8xf32> -> vector<8x8xf32>
    %cst_142 = arith.constant 0.353553385 : f32
    %240 = vector.broadcast %cst_142 : f32 to vector<8x8xf32>
    %241 = arith.mulf %239, %240 : vector<8x8xf32>
    %c6 = arith.constant 6 : index
    %c0_143 = arith.constant 0 : index
    %c0_144 = arith.constant 0 : index
    %242 = vector.load %arg12[%c6, %c0_143, %c0_144] : memref<8x8x1xf32, #tpu.memory_space<vmem>>, vector<1x8x1xf32>
    %243 = vector.shape_cast %242 : vector<1x8x1xf32> to vector<8x1xf32>
    %cst_145 = arith.constant dense<0xFF800000> : vector<8xf32>
    %244 = vector.multi_reduction <maximumf>, %241, %cst_145 [1] : vector<8x8xf32> to vector<8xf32>
    %245 = vector.shape_cast %244 : vector<8xf32> to vector<8x1xf32>
    %246 = arith.maximumf %243, %245 : vector<8x1xf32>
    %247 = arith.subf %243, %246 : vector<8x1xf32>
    %248 = math.exp %247 : vector<8x1xf32>
    %249 = vector.broadcast %246 : vector<8x1xf32> to vector<8x8xf32>
    %250 = arith.subf %241, %249 : vector<8x8xf32>
    %251 = math.exp %250 : vector<8x8xf32>
    %c6_146 = arith.constant 6 : index
    %c0_147 = arith.constant 0 : index
    %c0_148 = arith.constant 0 : index
    %252 = vector.load %arg13[%c6_146, %c0_147, %c0_148] : memref<8x8x1xf32, #tpu.memory_space<vmem>>, vector<1x8x1xf32>
    %253 = vector.shape_cast %252 : vector<1x8x1xf32> to vector<8x1xf32>
    %254 = arith.mulf %248, %253 : vector<8x1xf32>
    %cst_149 = arith.constant dense<0.000000e+00> : vector<8xf32>
    %255 = vector.multi_reduction <add>, %251, %cst_149 [1] : vector<8x8xf32> to vector<8xf32>
    %256 = vector.shape_cast %255 : vector<8xf32> to vector<8x1xf32>
    %257 = arith.addf %254, %256 : vector<8x1xf32>
    %c6_150 = arith.constant 6 : index
    %c0_151 = arith.constant 0 : index
    %c0_152 = arith.constant 0 : index
    %258 = vector.load %arg13[%c6_150, %c0_151, %c0_152] : memref<8x8x1xf32, #tpu.memory_space<vmem>>, vector<1x8x1xf32>
    %259 = vector.shape_cast %258 : vector<1x8x1xf32> to vector<8x1xf32>
    %260 = vector.shape_cast %257 : vector<8x1xf32> to vector<1x8x1xf32>
    tpu.vector_store %arg13[%c6_150, %c0_151, %c0_152], %260 {strides = array<i32>} : memref<8x8x1xf32, #tpu.memory_space<vmem>>, vector<1x8x1xf32>,
    %c6_153 = arith.constant 6 : index
    %c0_154 = arith.constant 0 : index
    %c0_155 = arith.constant 0 : index
    %261 = vector.load %arg14[%c6_153, %c0_154, %c0_155] : memref<8x8x128xf32, #tpu.memory_space<vmem>>, vector<1x8x128xf32>
    %262 = vector.shape_cast %261 : vector<1x8x128xf32> to vector<8x128xf32>
    %263 = vector.broadcast %248 : vector<8x1xf32> to vector<8x128xf32>
    %264 = arith.mulf %263, %262 : vector<8x128xf32>
    %265 = arith.truncf %251 : vector<8x8xf32> to vector<8x8xbf16>
    %266 = vector.extract_strided_slice %8 {offsets = [0, 768], sizes = [8, 128], strides = [1, 1]} : vector<8x1024xbf16> to vector<8x128xbf16>
    %cst_156 = arith.constant dense<0.000000e+00> : vector<8x128xf32>
    %267 = tpu.matmul %265, %266, %cst_156 {dimension_numbers = #tpu.dot_dimension_numbers<[1], [0], [0], [1], [0, 0, 1, 1], [], []>} : vector<8x8xbf16>, vector<8x128xbf16>, vector<8x128xf32> -> vector<8x128xf32>
    %268 = arith.addf %264, %267 : vector<8x128xf32>
    %c6_157 = arith.constant 6 : index
    %c0_158 = arith.constant 0 : index
    %c0_159 = arith.constant 0 : index
    %269 = vector.load %arg14[%c6_157, %c0_158, %c0_159] : memref<8x8x128xf32, #tpu.memory_space<vmem>>, vector<1x8x128xf32>
    %270 = vector.shape_cast %269 : vector<1x8x128xf32> to vector<8x128xf32>
    %271 = vector.shape_cast %268 : vector<8x128xf32> to vector<1x8x128xf32>
    tpu.vector_store %arg14[%c6_157, %c0_158, %c0_159], %271 {strides = array<i32>} : memref<8x8x128xf32, #tpu.memory_space<vmem>>, vector<1x8x128xf32>,
    %c6_160 = arith.constant 6 : index
    %c0_161 = arith.constant 0 : index
    %c0_162 = arith.constant 0 : index
    %272 = vector.load %arg12[%c6_160, %c0_161, %c0_162] : memref<8x8x1xf32, #tpu.memory_space<vmem>>, vector<1x8x1xf32>
    %273 = vector.shape_cast %272 : vector<1x8x1xf32> to vector<8x1xf32>
    %274 = vector.shape_cast %246 : vector<8x1xf32> to vector<1x8x1xf32>
    tpu.vector_store %arg12[%c6_160, %c0_161, %c0_162], %274 {strides = array<i32>} : memref<8x8x1xf32, #tpu.memory_space<vmem>>, vector<1x8x1xf32>,
    %275 = vector.extract_strided_slice %4 {offsets = [0, 896], sizes = [8, 128], strides = [1, 1]} : vector<8x1024xbf16> to vector<8x128xbf16>
    %276 = vector.extract_strided_slice %6 {offsets = [0, 896], sizes = [8, 128], strides = [1, 1]} : vector<8x1024xbf16> to vector<8x128xbf16>
    %cst_163 = arith.constant dense<0.000000e+00> : vector<8x8xf32>
    %277 = tpu.matmul %275, %276, %cst_163 {dimension_numbers = #tpu.dot_dimension_numbers<[1], [1], [0], [0], [0, 0, 1, 0], [], []>} : vector<8x128xbf16>, vector<8x128xbf16>, vector<8x8xf32> -> vector<8x8xf32>
    %cst_164 = arith.constant 0.353553385 : f32
    %278 = vector.broadcast %cst_164 : f32 to vector<8x8xf32>
    %279 = arith.mulf %277, %278 : vector<8x8xf32>
    %c7 = arith.constant 7 : index
    %c0_165 = arith.constant 0 : index
    %c0_166 = arith.constant 0 : index
    %280 = vector.load %arg12[%c7, %c0_165, %c0_166] : memref<8x8x1xf32, #tpu.memory_space<vmem>>, vector<1x8x1xf32>
    %281 = vector.shape_cast %280 : vector<1x8x1xf32> to vector<8x1xf32>
    %cst_167 = arith.constant dense<0xFF800000> : vector<8xf32>
    %282 = vector.multi_reduction <maximumf>, %279, %cst_167 [1] : vector<8x8xf32> to vector<8xf32>
    %283 = vector.shape_cast %282 : vector<8xf32> to vector<8x1xf32>
    %284 = arith.maximumf %281, %283 : vector<8x1xf32>
    %285 = arith.subf %281, %284 : vector<8x1xf32>
    %286 = math.exp %285 : vector<8x1xf32>
    %287 = vector.broadcast %284 : vector<8x1xf32> to vector<8x8xf32>
    %288 = arith.subf %279, %287 : vector<8x8xf32>
    %289 = math.exp %288 : vector<8x8xf32>
    %c7_168 = arith.constant 7 : index
    %c0_169 = arith.constant 0 : index
    %c0_170 = arith.constant 0 : index
    %290 = vector.load %arg13[%c7_168, %c0_169, %c0_170] : memref<8x8x1xf32, #tpu.memory_space<vmem>>, vector<1x8x1xf32>
    %291 = vector.shape_cast %290 : vector<1x8x1xf32> to vector<8x1xf32>
    %292 = arith.mulf %286, %291 : vector<8x1xf32>
    %cst_171 = arith.constant dense<0.000000e+00> : vector<8xf32>
    %293 = vector.multi_reduction <add>, %289, %cst_171 [1] : vector<8x8xf32> to vector<8xf32>
    %294 = vector.shape_cast %293 : vector<8xf32> to vector<8x1xf32>
    %295 = arith.addf %292, %294 : vector<8x1xf32>
    %c7_172 = arith.constant 7 : index
    %c0_173 = arith.constant 0 : index
    %c0_174 = arith.constant 0 : index
    %296 = vector.load %arg13[%c7_172, %c0_173, %c0_174] : memref<8x8x1xf32, #tpu.memory_space<vmem>>, vector<1x8x1xf32>
    %297 = vector.shape_cast %296 : vector<1x8x1xf32> to vector<8x1xf32>
    %298 = vector.shape_cast %295 : vector<8x1xf32> to vector<1x8x1xf32>
    tpu.vector_store %arg13[%c7_172, %c0_173, %c0_174], %298 {strides = array<i32>} : memref<8x8x1xf32, #tpu.memory_space<vmem>>, vector<1x8x1xf32>,
    %c7_175 = arith.constant 7 : index
    %c0_176 = arith.constant 0 : index
    %c0_177 = arith.constant 0 : index
    %299 = vector.load %arg14[%c7_175, %c0_176, %c0_177] : memref<8x8x128xf32, #tpu.memory_space<vmem>>, vector<1x8x128xf32>
    %300 = vector.shape_cast %299 : vector<1x8x128xf32> to vector<8x128xf32>
    %301 = vector.broadcast %286 : vector<8x1xf32> to vector<8x128xf32>
    %302 = arith.mulf %301, %300 : vector<8x128xf32>
    %303 = arith.truncf %289 : vector<8x8xf32> to vector<8x8xbf16>
    %304 = vector.extract_strided_slice %8 {offsets = [0, 896], sizes = [8, 128], strides = [1, 1]} : vector<8x1024xbf16> to vector<8x128xbf16>
    %cst_178 = arith.constant dense<0.000000e+00> : vector<8x128xf32>
    %305 = tpu.matmul %303, %304, %cst_178 {dimension_numbers = #tpu.dot_dimension_numbers<[1], [0], [0], [1], [0, 0, 1, 1], [], []>} : vector<8x8xbf16>, vector<8x128xbf16>, vector<8x128xf32> -> vector<8x128xf32>
    %306 = arith.addf %302, %305 : vector<8x128xf32>
    %c7_179 = arith.constant 7 : index
    %c0_180 = arith.constant 0 : index
    %c0_181 = arith.constant 0 : index
    %307 = vector.load %arg14[%c7_179, %c0_180, %c0_181] : memref<8x8x128xf32, #tpu.memory_space<vmem>>, vector<1x8x128xf32>
    %308 = vector.shape_cast %307 : vector<1x8x128xf32> to vector<8x128xf32>
    %309 = vector.shape_cast %306 : vector<8x128xf32> to vector<1x8x128xf32>
    tpu.vector_store %arg14[%c7_179, %c0_180, %c0_181], %309 {strides = array<i32>} : memref<8x8x128xf32, #tpu.memory_space<vmem>>, vector<1x8x128xf32>,
    %c7_182 = arith.constant 7 : index
    %c0_183 = arith.constant 0 : index
    %c0_184 = arith.constant 0 : index
    %310 = vector.load %arg12[%c7_182, %c0_183, %c0_184] : memref<8x8x1xf32, #tpu.memory_space<vmem>>, vector<1x8x1xf32>
    %311 = vector.shape_cast %310 : vector<1x8x1xf32> to vector<8x1xf32>
    %312 = vector.shape_cast %284 : vector<8x1xf32> to vector<1x8x1xf32>
    tpu.vector_store %arg12[%c7_182, %c0_183, %c0_184], %312 {strides = array<i32>} : memref<8x8x1xf32, #tpu.memory_space<vmem>>, vector<1x8x1xf32>,
    %c0_i32_185 = arith.constant 0 : i32
    %313 = arith.cmpi eq, %arg2, %c0_i32_185 : i32
    %314 = arith.extui %313 : i1 to i32
    %c0_i32_186 = arith.constant 0 : i32
    %315 = arith.cmpi ne, %314, %c0_i32_186 : i32
    scf.if %315 {
      %c0_187 = arith.constant 0 : index
      %c0_188 = arith.constant 0 : index
      %c0_189 = arith.constant 0 : index
      %316 = vector.load %arg6[%c0_187, %c0_188, %c0_189] : memref<1x8x64xf32, #tpu.memory_space<vmem>>, vector<1x8x64xf32>
      %317 = vector.shape_cast %316 : vector<1x8x64xf32> to vector<8x64xf32>
      %c0_190 = arith.constant 0 : index
      %c0_191 = arith.constant 0 : index
      %318 = vector.load %arg8[%c0_190, %c0_191] : memref<1x64xf32, #tpu.memory_space<vmem>>, vector<1x64xf32>
      %319 = vector.broadcast %318 : vector<1x64xf32> to vector<8x64xf32>
      %320 = arith.addf %317, %319 : vector<8x64xf32>
      %c0_192 = arith.constant 0 : index
      %c0_193 = arith.constant 0 : index
      %c0_194 = arith.constant 0 : index
      %321 = vector.load %arg13[%c0_192, %c0_193, %c0_194] : memref<8x8x1xf32, #tpu.memory_space<vmem>>, vector<1x8x1xf32>
      %322 = vector.shape_cast %321 : vector<1x8x1xf32> to vector<8x1xf32>
      %323 = tpu.reciprocal %322 {approx = true} : vector<8x1xf32> -> vector<8x1xf32>
      %c0_195 = arith.constant 0 : index
      %c0_196 = arith.constant 0 : index
      %c0_197 = arith.constant 0 : index
      %324 = vector.load %arg14[%c0_195, %c0_196, %c0_197] : memref<8x8x128xf32, #tpu.memory_space<vmem>>, vector<1x8x128xf32>
      %325 = vector.shape_cast %324 : vector<1x8x128xf32> to vector<8x128xf32>
      %326 = vector.broadcast %323 : vector<8x1xf32> to vector<8x128xf32>
      %327 = arith.mulf %325, %326 : vector<8x128xf32>
      %328 = arith.truncf %327 : vector<8x128xf32> to vector<8x128xbf16>
      %c0_198 = arith.constant 0 : index
      %c0_199 = arith.constant 0 : index
      %329 = vector.load %arg7[%c0_198, %c0_199] : memref<1024x64xbf16, #tpu.memory_space<vmem>>, vector<128x64xbf16>
      %cst_200 = arith.constant dense<0.000000e+00> : vector<8x64xf32>
      %330 = tpu.matmul %328, %329, %cst_200 {dimension_numbers = #tpu.dot_dimension_numbers<[1], [0], [0], [1], [0, 0, 1, 1], [], []>} : vector<8x128xbf16>, vector<128x64xbf16>, vector<8x64xf32> -> vector<8x64xf32>
      %331 = arith.addf %320, %330 : vector<8x64xf32>
      %c1_201 = arith.constant 1 : index
      %c0_202 = arith.constant 0 : index
      %c0_203 = arith.constant 0 : index
      %332 = vector.load %arg13[%c1_201, %c0_202, %c0_203] : memref<8x8x1xf32, #tpu.memory_space<vmem>>, vector<1x8x1xf32>
      %333 = vector.shape_cast %332 : vector<1x8x1xf32> to vector<8x1xf32>
      %334 = tpu.reciprocal %333 {approx = true} : vector<8x1xf32> -> vector<8x1xf32>
      %c1_204 = arith.constant 1 : index
      %c0_205 = arith.constant 0 : index
      %c0_206 = arith.constant 0 : index
      %335 = vector.load %arg14[%c1_204, %c0_205, %c0_206] : memref<8x8x128xf32, #tpu.memory_space<vmem>>, vector<1x8x128xf32>
      %336 = vector.shape_cast %335 : vector<1x8x128xf32> to vector<8x128xf32>
      %337 = vector.broadcast %334 : vector<8x1xf32> to vector<8x128xf32>
      %338 = arith.mulf %336, %337 : vector<8x128xf32>
      %339 = arith.truncf %338 : vector<8x128xf32> to vector<8x128xbf16>
      %c128 = arith.constant 128 : index
      %c0_207 = arith.constant 0 : index
      %340 = vector.load %arg7[%c128, %c0_207] : memref<1024x64xbf16, #tpu.memory_space<vmem>>, vector<128x64xbf16>
      %cst_208 = arith.constant dense<0.000000e+00> : vector<8x64xf32>
      %341 = tpu.matmul %339, %340, %cst_208 {dimension_numbers = #tpu.dot_dimension_numbers<[1], [0], [0], [1], [0, 0, 1, 1], [], []>} : vector<8x128xbf16>, vector<128x64xbf16>, vector<8x64xf32> -> vector<8x64xf32>
      %342 = arith.addf %331, %341 : vector<8x64xf32>
      %c2_209 = arith.constant 2 : index
      %c0_210 = arith.constant 0 : index
      %c0_211 = arith.constant 0 : index
      %343 = vector.load %arg13[%c2_209, %c0_210, %c0_211] : memref<8x8x1xf32, #tpu.memory_space<vmem>>, vector<1x8x1xf32>
      %344 = vector.shape_cast %343 : vector<1x8x1xf32> to vector<8x1xf32>
      %345 = tpu.reciprocal %344 {approx = true} : vector<8x1xf32> -> vector<8x1xf32>
      %c2_212 = arith.constant 2 : index
      %c0_213 = arith.constant 0 : index
      %c0_214 = arith.constant 0 : index
      %346 = vector.load %arg14[%c2_212, %c0_213, %c0_214] : memref<8x8x128xf32, #tpu.memory_space<vmem>>, vector<1x8x128xf32>
      %347 = vector.shape_cast %346 : vector<1x8x128xf32> to vector<8x128xf32>
      %348 = vector.broadcast %345 : vector<8x1xf32> to vector<8x128xf32>
      %349 = arith.mulf %347, %348 : vector<8x128xf32>
      %350 = arith.truncf %349 : vector<8x128xf32> to vector<8x128xbf16>
      %c256 = arith.constant 256 : index
      %c0_215 = arith.constant 0 : index
      %351 = vector.load %arg7[%c256, %c0_215] : memref<1024x64xbf16, #tpu.memory_space<vmem>>, vector<128x64xbf16>
      %cst_216 = arith.constant dense<0.000000e+00> : vector<8x64xf32>
      %352 = tpu.matmul %350, %351, %cst_216 {dimension_numbers = #tpu.dot_dimension_numbers<[1], [0], [0], [1], [0, 0, 1, 1], [], []>} : vector<8x128xbf16>, vector<128x64xbf16>, vector<8x64xf32> -> vector<8x64xf32>
      %353 = arith.addf %342, %352 : vector<8x64xf32>
      %c3_217 = arith.constant 3 : index
      %c0_218 = arith.constant 0 : index
      %c0_219 = arith.constant 0 : index
      %354 = vector.load %arg13[%c3_217, %c0_218, %c0_219] : memref<8x8x1xf32, #tpu.memory_space<vmem>>, vector<1x8x1xf32>
      %355 = vector.shape_cast %354 : vector<1x8x1xf32> to vector<8x1xf32>
      %356 = tpu.reciprocal %355 {approx = true} : vector<8x1xf32> -> vector<8x1xf32>
      %c3_220 = arith.constant 3 : index
      %c0_221 = arith.constant 0 : index
      %c0_222 = arith.constant 0 : index
      %357 = vector.load %arg14[%c3_220, %c0_221, %c0_222] : memref<8x8x128xf32, #tpu.memory_space<vmem>>, vector<1x8x128xf32>
      %358 = vector.shape_cast %357 : vector<1x8x128xf32> to vector<8x128xf32>
      %359 = vector.broadcast %356 : vector<8x1xf32> to vector<8x128xf32>
      %360 = arith.mulf %358, %359 : vector<8x128xf32>
      %361 = arith.truncf %360 : vector<8x128xf32> to vector<8x128xbf16>
      %c384 = arith.constant 384 : index
      %c0_223 = arith.constant 0 : index
      %362 = vector.load %arg7[%c384, %c0_223] : memref<1024x64xbf16, #tpu.memory_space<vmem>>, vector<128x64xbf16>
      %cst_224 = arith.constant dense<0.000000e+00> : vector<8x64xf32>
      %363 = tpu.matmul %361, %362, %cst_224 {dimension_numbers = #tpu.dot_dimension_numbers<[1], [0], [0], [1], [0, 0, 1, 1], [], []>} : vector<8x128xbf16>, vector<128x64xbf16>, vector<8x64xf32> -> vector<8x64xf32>
      %364 = arith.addf %353, %363 : vector<8x64xf32>
      %c4_225 = arith.constant 4 : index
      %c0_226 = arith.constant 0 : index
      %c0_227 = arith.constant 0 : index
      %365 = vector.load %arg13[%c4_225, %c0_226, %c0_227] : memref<8x8x1xf32, #tpu.memory_space<vmem>>, vector<1x8x1xf32>
      %366 = vector.shape_cast %365 : vector<1x8x1xf32> to vector<8x1xf32>
      %367 = tpu.reciprocal %366 {approx = true} : vector<8x1xf32> -> vector<8x1xf32>
      %c4_228 = arith.constant 4 : index
      %c0_229 = arith.constant 0 : index
      %c0_230 = arith.constant 0 : index
      %368 = vector.load %arg14[%c4_228, %c0_229, %c0_230] : memref<8x8x128xf32, #tpu.memory_space<vmem>>, vector<1x8x128xf32>
      %369 = vector.shape_cast %368 : vector<1x8x128xf32> to vector<8x128xf32>
      %370 = vector.broadcast %367 : vector<8x1xf32> to vector<8x128xf32>
      %371 = arith.mulf %369, %370 : vector<8x128xf32>
      %372 = arith.truncf %371 : vector<8x128xf32> to vector<8x128xbf16>
      %c512 = arith.constant 512 : index
      %c0_231 = arith.constant 0 : index
      %373 = vector.load %arg7[%c512, %c0_231] : memref<1024x64xbf16, #tpu.memory_space<vmem>>, vector<128x64xbf16>
      %cst_232 = arith.constant dense<0.000000e+00> : vector<8x64xf32>
      %374 = tpu.matmul %372, %373, %cst_232 {dimension_numbers = #tpu.dot_dimension_numbers<[1], [0], [0], [1], [0, 0, 1, 1], [], []>} : vector<8x128xbf16>, vector<128x64xbf16>, vector<8x64xf32> -> vector<8x64xf32>
      %375 = arith.addf %364, %374 : vector<8x64xf32>
      %c5_233 = arith.constant 5 : index
      %c0_234 = arith.constant 0 : index
      %c0_235 = arith.constant 0 : index
      %376 = vector.load %arg13[%c5_233, %c0_234, %c0_235] : memref<8x8x1xf32, #tpu.memory_space<vmem>>, vector<1x8x1xf32>
      %377 = vector.shape_cast %376 : vector<1x8x1xf32> to vector<8x1xf32>
      %378 = tpu.reciprocal %377 {approx = true} : vector<8x1xf32> -> vector<8x1xf32>
      %c5_236 = arith.constant 5 : index
      %c0_237 = arith.constant 0 : index
      %c0_238 = arith.constant 0 : index
      %379 = vector.load %arg14[%c5_236, %c0_237, %c0_238] : memref<8x8x128xf32, #tpu.memory_space<vmem>>, vector<1x8x128xf32>
      %380 = vector.shape_cast %379 : vector<1x8x128xf32> to vector<8x128xf32>
      %381 = vector.broadcast %378 : vector<8x1xf32> to vector<8x128xf32>
      %382 = arith.mulf %380, %381 : vector<8x128xf32>
      %383 = arith.truncf %382 : vector<8x128xf32> to vector<8x128xbf16>
      %c640 = arith.constant 640 : index
      %c0_239 = arith.constant 0 : index
      %384 = vector.load %arg7[%c640, %c0_239] : memref<1024x64xbf16, #tpu.memory_space<vmem>>, vector<128x64xbf16>
      %cst_240 = arith.constant dense<0.000000e+00> : vector<8x64xf32>
      %385 = tpu.matmul %383, %384, %cst_240 {dimension_numbers = #tpu.dot_dimension_numbers<[1], [0], [0], [1], [0, 0, 1, 1], [], []>} : vector<8x128xbf16>, vector<128x64xbf16>, vector<8x64xf32> -> vector<8x64xf32>
      %386 = arith.addf %375, %385 : vector<8x64xf32>
      %c6_241 = arith.constant 6 : index
      %c0_242 = arith.constant 0 : index
      %c0_243 = arith.constant 0 : index
      %387 = vector.load %arg13[%c6_241, %c0_242, %c0_243] : memref<8x8x1xf32, #tpu.memory_space<vmem>>, vector<1x8x1xf32>
      %388 = vector.shape_cast %387 : vector<1x8x1xf32> to vector<8x1xf32>
      %389 = tpu.reciprocal %388 {approx = true} : vector<8x1xf32> -> vector<8x1xf32>
      %c6_244 = arith.constant 6 : index
      %c0_245 = arith.constant 0 : index
      %c0_246 = arith.constant 0 : index
      %390 = vector.load %arg14[%c6_244, %c0_245, %c0_246] : memref<8x8x128xf32, #tpu.memory_space<vmem>>, vector<1x8x128xf32>
      %391 = vector.shape_cast %390 : vector<1x8x128xf32> to vector<8x128xf32>
      %392 = vector.broadcast %389 : vector<8x1xf32> to vector<8x128xf32>
      %393 = arith.mulf %391, %392 : vector<8x128xf32>
      %394 = arith.truncf %393 : vector<8x128xf32> to vector<8x128xbf16>
      %c768 = arith.constant 768 : index
      %c0_247 = arith.constant 0 : index
      %395 = vector.load %arg7[%c768, %c0_247] : memref<1024x64xbf16, #tpu.memory_space<vmem>>, vector<128x64xbf16>
      %cst_248 = arith.constant dense<0.000000e+00> : vector<8x64xf32>
      %396 = tpu.matmul %394, %395, %cst_248 {dimension_numbers = #tpu.dot_dimension_numbers<[1], [0], [0], [1], [0, 0, 1, 1], [], []>} : vector<8x128xbf16>, vector<128x64xbf16>, vector<8x64xf32> -> vector<8x64xf32>
      %397 = arith.addf %386, %396 : vector<8x64xf32>
      %c7_249 = arith.constant 7 : index
      %c0_250 = arith.constant 0 : index
      %c0_251 = arith.constant 0 : index
      %398 = vector.load %arg13[%c7_249, %c0_250, %c0_251] : memref<8x8x1xf32, #tpu.memory_space<vmem>>, vector<1x8x1xf32>
      %399 = vector.shape_cast %398 : vector<1x8x1xf32> to vector<8x1xf32>
      %400 = tpu.reciprocal %399 {approx = true} : vector<8x1xf32> -> vector<8x1xf32>
      %c7_252 = arith.constant 7 : index
      %c0_253 = arith.constant 0 : index
      %c0_254 = arith.constant 0 : index
      %401 = vector.load %arg14[%c7_252, %c0_253, %c0_254] : memref<8x8x128xf32, #tpu.memory_space<vmem>>, vector<1x8x128xf32>
      %402 = vector.shape_cast %401 : vector<1x8x128xf32> to vector<8x128xf32>
      %403 = vector.broadcast %400 : vector<8x1xf32> to vector<8x128xf32>
      %404 = arith.mulf %402, %403 : vector<8x128xf32>
      %405 = arith.truncf %404 : vector<8x128xf32> to vector<8x128xbf16>
      %c896 = arith.constant 896 : index
      %c0_255 = arith.constant 0 : index
      %406 = vector.load %arg7[%c896, %c0_255] : memref<1024x64xbf16, #tpu.memory_space<vmem>>, vector<128x64xbf16>
      %cst_256 = arith.constant dense<0.000000e+00> : vector<8x64xf32>
      %407 = tpu.matmul %405, %406, %cst_256 {dimension_numbers = #tpu.dot_dimension_numbers<[1], [0], [0], [1], [0, 0, 1, 1], [], []>} : vector<8x128xbf16>, vector<128x64xbf16>, vector<8x64xf32> -> vector<8x64xf32>
      %408 = arith.addf %397, %407 : vector<8x64xf32>
      %cst_257 = arith.constant dense<0.000000e+00> : vector<8xf32>
      %409 = vector.multi_reduction <add>, %408, %cst_257 [1] : vector<8x64xf32> to vector<8xf32>
      %410 = vector.shape_cast %409 : vector<8xf32> to vector<8x1xf32>
      %cst_258 = arith.constant 6.400000e+01 : f32
      %411 = vector.broadcast %cst_258 : f32 to vector<8x1xf32>
      %412 = arith.divf %410, %411 : vector<8x1xf32>
      %413 = arith.mulf %408, %408 : vector<8x64xf32>
      %cst_259 = arith.constant dense<0.000000e+00> : vector<8xf32>
      %414 = vector.multi_reduction <add>, %413, %cst_259 [1] : vector<8x64xf32> to vector<8xf32>
      %415 = vector.shape_cast %414 : vector<8xf32> to vector<8x1xf32>
      %cst_260 = arith.constant 6.400000e+01 : f32
      %416 = vector.broadcast %cst_260 : f32 to vector<8x1xf32>
      %417 = arith.divf %415, %416 : vector<8x1xf32>
      %418 = arith.mulf %412, %412 : vector<8x1xf32>
      %419 = arith.subf %417, %418 : vector<8x1xf32>
      %420 = vector.broadcast %412 : vector<8x1xf32> to vector<8x64xf32>
      %421 = arith.subf %408, %420 : vector<8x64xf32>
      %cst_261 = arith.constant 9.99999974E-6 : f32
      %422 = vector.broadcast %cst_261 : f32 to vector<8x1xf32>
      %423 = arith.addf %419, %422 : vector<8x1xf32>
      %424 = math.rsqrt %423 : vector<8x1xf32>
      %425 = vector.broadcast %424 : vector<8x1xf32> to vector<8x64xf32>
      %426 = arith.mulf %421, %425 : vector<8x64xf32>
      %c0_262 = arith.constant 0 : index
      %c0_263 = arith.constant 0 : index
      %427 = vector.load %arg9[%c0_262, %c0_263] : memref<1x64xf32, #tpu.memory_space<vmem>>, vector<1x64xf32>
      %428 = vector.broadcast %427 : vector<1x64xf32> to vector<8x64xf32>
      %429 = arith.mulf %426, %428 : vector<8x64xf32>
      %c0_264 = arith.constant 0 : index
      %c0_265 = arith.constant 0 : index
      %430 = vector.load %arg10[%c0_264, %c0_265] : memref<1x64xf32, #tpu.memory_space<vmem>>, vector<1x64xf32>
      %431 = vector.broadcast %430 : vector<1x64xf32> to vector<8x64xf32>
      %432 = arith.addf %429, %431 : vector<8x64xf32>
      %c0_266 = arith.constant 0 : index
      %c0_267 = arith.constant 0 : index
      %c0_268 = arith.constant 0 : index
      %433 = vector.load %arg11[%c0_266, %c0_267, %c0_268] : memref<1x8x64xf32, #tpu.memory_space<vmem>>, vector<1x8x64xf32>
      %434 = vector.shape_cast %433 : vector<1x8x64xf32> to vector<8x64xf32>
      %435 = vector.shape_cast %432 : vector<8x64xf32> to vector<1x8x64xf32>
      tpu.vector_store %arg11[%c0_266, %c0_267, %c0_268], %435 {strides = array<i32>} : memref<1x8x64xf32, #tpu.memory_space<vmem>>, vector<1x8x64xf32>,
    } else {
    }
    return
  }
  func.func @transform_0(%arg0: i32, %arg1: i32, %arg2: i32) -> (i32, i32, i32) {
    %c0_i32 = arith.constant 0 : i32
    %c0_i32_0 = arith.constant 0 : i32
    return %arg0, %arg1, %c0_i32 : i32, i32, i32
  }
  func.func @transform_1(%arg0: i32, %arg1: i32, %arg2: i32) -> (i32, i32, i32) {
    %c1_i32 = arith.constant 1 : i32
    %c0_i32 = arith.constant 0 : i32
    return %arg0, %arg2, %c1_i32 : i32, i32, i32
  }
  func.func @transform_2(%arg0: i32, %arg1: i32, %arg2: i32) -> (i32, i32, i32) {
    %c2_i32 = arith.constant 2 : i32
    %c0_i32 = arith.constant 0 : i32
    return %arg0, %arg2, %c2_i32 : i32, i32, i32
  }
  func.func @transform_3(%arg0: i32, %arg1: i32, %arg2: i32) -> (i32, i32, i32) {
    %c0_i32 = arith.constant 0 : i32
    %c0_i32_0 = arith.constant 0 : i32
    return %arg0, %arg1, %c0_i32 : i32, i32, i32
  }
  func.func @transform_4(%arg0: i32, %arg1: i32, %arg2: i32) -> (i32, i32) {
    %c0_i32 = arith.constant 0 : i32
    %c0_i32_0 = arith.constant 0 : i32
    %c0_i32_1 = arith.constant 0 : i32
    return %c0_i32, %c0_i32_0 : i32, i32
  }
  func.func @transform_5(%arg0: i32, %arg1: i32, %arg2: i32) -> (i32, i32) {
    %c0_i32 = arith.constant 0 : i32
    %c0_i32_0 = arith.constant 0 : i32
    %c0_i32_1 = arith.constant 0 : i32
    return %c0_i32, %c0_i32_0 : i32, i32
  }
  func.func @transform_6(%arg0: i32, %arg1: i32, %arg2: i32) -> (i32, i32) {
    %c0_i32 = arith.constant 0 : i32
    %c0_i32_0 = arith.constant 0 : i32
    %c0_i32_1 = arith.constant 0 : i32
    return %c0_i32, %c0_i32_0 : i32, i32
  }
  func.func @transform_7(%arg0: i32, %arg1: i32, %arg2: i32) -> (i32, i32) {
    %c0_i32 = arith.constant 0 : i32
    %c0_i32_0 = arith.constant 0 : i32
    %c0_i32_1 = arith.constant 0 : i32
    return %c0_i32, %c0_i32_0 : i32, i32
  }
  func.func @transform_8(%arg0: i32, %arg1: i32, %arg2: i32) -> (i32, i32, i32) {
    %c0_i32 = arith.constant 0 : i32
    %c0_i32_0 = arith.constant 0 : i32
    return %arg0, %arg1, %c0_i32 : i32, i32, i32
  }
}

module attributes {stable_mosaic.version = 11 : i64} {
  func.func @_ffn_kernel(%arg0: i32, %arg1: i32, %arg2: memref<16x64xf32, #tpu.memory_space<vmem>>, %arg3: memref<64x128xbf16, #tpu.memory_space<vmem>>, %arg4: memref<1x128xf32, #tpu.memory_space<vmem>>, %arg5: memref<128x64xbf16, #tpu.memory_space<vmem>>, %arg6: memref<1x64xf32, #tpu.memory_space<vmem>>, %arg7: memref<1x64xf32, #tpu.memory_space<vmem>>, %arg8: memref<1x64xf32, #tpu.memory_space<vmem>>, %arg9: memref<16x64xf32, #tpu.memory_space<vmem>>, %arg10: memref<16x64xf32, #tpu.memory_space<vmem>>) attributes {dimension_semantics = [#tpu.dimension_semantics<parallel>, #tpu.dimension_semantics<arbitrary>], iteration_bounds = array<i64: 1, 1>, scalar_prefetch = 0 : i64, scratch_operands = 1 : i64, tpu.core_type = #tpu.core_type<tc>, window_params = [{transform_indices = @transform_0, window_bounds = array<i64: 16, 64>}, {transform_indices = @transform_1, window_bounds = array<i64: 64, 128>}, {transform_indices = @transform_2, window_bounds = array<i64: 1, 128>}, {transform_indices = @transform_3, window_bounds = array<i64: 128, 64>}, {pipeline_mode = #tpu.pipeline_mode<synchronous>, transform_indices = @transform_4, window_bounds = array<i64: 1, 64>}, {pipeline_mode = #tpu.pipeline_mode<synchronous>, transform_indices = @transform_5, window_bounds = array<i64: 1, 64>}, {pipeline_mode = #tpu.pipeline_mode<synchronous>, transform_indices = @transform_6, window_bounds = array<i64: 1, 64>}, {transform_indices = @transform_7, window_bounds = array<i64: 16, 64>}]} {
    %c0_i32 = arith.constant 0 : i32
    %0 = arith.cmpi eq, %arg1, %c0_i32 : i32
    %1 = arith.extui %0 : i1 to i32
    %c0_i32_0 = arith.constant 0 : i32
    %2 = arith.cmpi ne, %1, %c0_i32_0 : i32
    scf.if %2 {
      %c0_16 = arith.constant 0 : index
      %c0_17 = arith.constant 0 : index
      %21 = vector.load %arg6[%c0_16, %c0_17] : memref<1x64xf32, #tpu.memory_space<vmem>>, vector<1x64xf32>
      %22 = vector.shape_cast %21 : vector<1x64xf32> to vector<1x64xf32>
      %23 = vector.broadcast %22 : vector<1x64xf32> to vector<16x64xf32>
      %c0_18 = arith.constant 0 : index
      %c0_19 = arith.constant 0 : index
      %24 = vector.load %arg10[%c0_18, %c0_19] : memref<16x64xf32, #tpu.memory_space<vmem>>, vector<16x64xf32>
      tpu.vector_store %arg10[%c0_18, %c0_19], %23 {strides = array<i32>} : memref<16x64xf32, #tpu.memory_space<vmem>>, vector<16x64xf32>,
    } else {
    }
    %c0 = arith.constant 0 : index
    %c0_1 = arith.constant 0 : index
    %3 = vector.load %arg2[%c0, %c0_1] : memref<16x64xf32, #tpu.memory_space<vmem>>, vector<16x64xf32>
    %4 = arith.truncf %3 : vector<16x64xf32> to vector<16x64xbf16>
    %c0_2 = arith.constant 0 : index
    %c0_3 = arith.constant 0 : index
    %5 = vector.load %arg3[%c0_2, %c0_3] : memref<64x128xbf16, #tpu.memory_space<vmem>>, vector<64x128xbf16>
    %cst = arith.constant dense<0.000000e+00> : vector<16x128xf32>
    %6 = tpu.matmul %4, %5, %cst {dimension_numbers = #tpu.dot_dimension_numbers<[1], [0], [0], [1], [0, 0, 1, 1], [], []>} : vector<16x64xbf16>, vector<64x128xbf16>, vector<16x128xf32> -> vector<16x128xf32>
    %c0_4 = arith.constant 0 : index
    %c0_5 = arith.constant 0 : index
    %7 = vector.load %arg4[%c0_4, %c0_5] : memref<1x128xf32, #tpu.memory_space<vmem>>, vector<1x128xf32>
    %8 = vector.broadcast %7 : vector<1x128xf32> to vector<16x128xf32>
    %9 = arith.addf %6, %8 : vector<16x128xf32>
    %cst_6 = arith.constant 0.000000e+00 : f32
    %10 = vector.broadcast %cst_6 : f32 to vector<16x128xf32>
    %11 = arith.maximumf %9, %10 : vector<16x128xf32>
    %12 = arith.truncf %11 : vector<16x128xf32> to vector<16x128xbf16>
    %c0_7 = arith.constant 0 : index
    %c0_8 = arith.constant 0 : index
    %13 = vector.load %arg10[%c0_7, %c0_8] : memref<16x64xf32, #tpu.memory_space<vmem>>, vector<16x64xf32>
    %c0_9 = arith.constant 0 : index
    %c0_10 = arith.constant 0 : index
    %14 = vector.load %arg5[%c0_9, %c0_10] : memref<128x64xbf16, #tpu.memory_space<vmem>>, vector<128x64xbf16>
    %cst_11 = arith.constant dense<0.000000e+00> : vector<16x64xf32>
    %15 = tpu.matmul %12, %14, %cst_11 {dimension_numbers = #tpu.dot_dimension_numbers<[1], [0], [0], [1], [0, 0, 1, 1], [], []>} : vector<16x128xbf16>, vector<128x64xbf16>, vector<16x64xf32> -> vector<16x64xf32>
    %16 = arith.addf %13, %15 : vector<16x64xf32>
    %c0_12 = arith.constant 0 : index
    %c0_13 = arith.constant 0 : index
    %17 = vector.load %arg10[%c0_12, %c0_13] : memref<16x64xf32, #tpu.memory_space<vmem>>, vector<16x64xf32>
    tpu.vector_store %arg10[%c0_12, %c0_13], %16 {strides = array<i32>} : memref<16x64xf32, #tpu.memory_space<vmem>>, vector<16x64xf32>,
    %c0_i32_14 = arith.constant 0 : i32
    %18 = arith.cmpi eq, %arg1, %c0_i32_14 : i32
    %19 = arith.extui %18 : i1 to i32
    %c0_i32_15 = arith.constant 0 : i32
    %20 = arith.cmpi ne, %19, %c0_i32_15 : i32
    scf.if %20 {
      %c0_16 = arith.constant 0 : index
      %c0_17 = arith.constant 0 : index
      %21 = vector.load %arg10[%c0_16, %c0_17] : memref<16x64xf32, #tpu.memory_space<vmem>>, vector<16x64xf32>
      %c0_18 = arith.constant 0 : index
      %c0_19 = arith.constant 0 : index
      %22 = vector.load %arg2[%c0_18, %c0_19] : memref<16x64xf32, #tpu.memory_space<vmem>>, vector<16x64xf32>
      %23 = arith.addf %21, %22 : vector<16x64xf32>
      %cst_20 = arith.constant dense<0.000000e+00> : vector<16xf32>
      %24 = vector.multi_reduction <add>, %23, %cst_20 [1] : vector<16x64xf32> to vector<16xf32>
      %25 = vector.shape_cast %24 : vector<16xf32> to vector<16x1xf32>
      %cst_21 = arith.constant 6.400000e+01 : f32
      %26 = vector.broadcast %cst_21 : f32 to vector<16x1xf32>
      %27 = arith.divf %25, %26 : vector<16x1xf32>
      %28 = arith.mulf %23, %23 : vector<16x64xf32>
      %cst_22 = arith.constant dense<0.000000e+00> : vector<16xf32>
      %29 = vector.multi_reduction <add>, %28, %cst_22 [1] : vector<16x64xf32> to vector<16xf32>
      %30 = vector.shape_cast %29 : vector<16xf32> to vector<16x1xf32>
      %cst_23 = arith.constant 6.400000e+01 : f32
      %31 = vector.broadcast %cst_23 : f32 to vector<16x1xf32>
      %32 = arith.divf %30, %31 : vector<16x1xf32>
      %33 = arith.mulf %27, %27 : vector<16x1xf32>
      %34 = arith.subf %32, %33 : vector<16x1xf32>
      %35 = vector.broadcast %27 : vector<16x1xf32> to vector<16x64xf32>
      %36 = arith.subf %23, %35 : vector<16x64xf32>
      %cst_24 = arith.constant 9.99999974E-6 : f32
      %37 = vector.broadcast %cst_24 : f32 to vector<16x1xf32>
      %38 = arith.addf %34, %37 : vector<16x1xf32>
      %39 = math.rsqrt %38 : vector<16x1xf32>
      %40 = vector.broadcast %39 : vector<16x1xf32> to vector<16x64xf32>
      %41 = arith.mulf %36, %40 : vector<16x64xf32>
      %c0_25 = arith.constant 0 : index
      %c0_26 = arith.constant 0 : index
      %42 = vector.load %arg7[%c0_25, %c0_26] : memref<1x64xf32, #tpu.memory_space<vmem>>, vector<1x64xf32>
      %43 = vector.broadcast %42 : vector<1x64xf32> to vector<16x64xf32>
      %44 = arith.mulf %41, %43 : vector<16x64xf32>
      %c0_27 = arith.constant 0 : index
      %c0_28 = arith.constant 0 : index
      %45 = vector.load %arg8[%c0_27, %c0_28] : memref<1x64xf32, #tpu.memory_space<vmem>>, vector<1x64xf32>
      %46 = vector.broadcast %45 : vector<1x64xf32> to vector<16x64xf32>
      %47 = arith.addf %44, %46 : vector<16x64xf32>
      %c0_29 = arith.constant 0 : index
      %c0_30 = arith.constant 0 : index
      %48 = vector.load %arg9[%c0_29, %c0_30] : memref<16x64xf32, #tpu.memory_space<vmem>>, vector<16x64xf32>
      tpu.vector_store %arg9[%c0_29, %c0_30], %47 {strides = array<i32>} : memref<16x64xf32, #tpu.memory_space<vmem>>, vector<16x64xf32>,
    } else {
    }
    return
  }
  func.func @transform_0(%arg0: i32, %arg1: i32) -> (i32, i32) {
    %c0_i32 = arith.constant 0 : i32
    %c0_i32_0 = arith.constant 0 : i32
    return %arg0, %c0_i32 : i32, i32
  }
  func.func @transform_1(%arg0: i32, %arg1: i32) -> (i32, i32) {
    %c0_i32 = arith.constant 0 : i32
    %c0_i32_0 = arith.constant 0 : i32
    return %c0_i32, %arg1 : i32, i32
  }
  func.func @transform_2(%arg0: i32, %arg1: i32) -> (i32, i32) {
    %c0_i32 = arith.constant 0 : i32
    %c0_i32_0 = arith.constant 0 : i32
    return %c0_i32, %arg1 : i32, i32
  }
  func.func @transform_3(%arg0: i32, %arg1: i32) -> (i32, i32) {
    %c0_i32 = arith.constant 0 : i32
    %c0_i32_0 = arith.constant 0 : i32
    return %arg1, %c0_i32 : i32, i32
  }
  func.func @transform_4(%arg0: i32, %arg1: i32) -> (i32, i32) {
    %c0_i32 = arith.constant 0 : i32
    %c0_i32_0 = arith.constant 0 : i32
    %c0_i32_1 = arith.constant 0 : i32
    return %c0_i32, %c0_i32_0 : i32, i32
  }
  func.func @transform_5(%arg0: i32, %arg1: i32) -> (i32, i32) {
    %c0_i32 = arith.constant 0 : i32
    %c0_i32_0 = arith.constant 0 : i32
    %c0_i32_1 = arith.constant 0 : i32
    return %c0_i32, %c0_i32_0 : i32, i32
  }
  func.func @transform_6(%arg0: i32, %arg1: i32) -> (i32, i32) {
    %c0_i32 = arith.constant 0 : i32
    %c0_i32_0 = arith.constant 0 : i32
    %c0_i32_1 = arith.constant 0 : i32
    return %c0_i32, %c0_i32_0 : i32, i32
  }
  func.func @transform_7(%arg0: i32, %arg1: i32) -> (i32, i32) {
    %c0_i32 = arith.constant 0 : i32
    %c0_i32_0 = arith.constant 0 : i32
    return %arg0, %c0_i32 : i32, i32
  }
}

module attributes {stable_mosaic.version = 11 : i64} {
  func.func @_linear_kernel(%arg0: i32, %arg1: i32, %arg2: i32, %arg3: memref<16x64xf32, #tpu.memory_space<vmem>>, %arg4: memref<64x512xbf16, #tpu.memory_space<vmem>>, %arg5: memref<1x512xf32, #tpu.memory_space<vmem>>, %arg6: memref<16x512xbf16, #tpu.memory_space<vmem>>, %arg7: memref<16x512xf32, #tpu.memory_space<vmem>>) attributes {dimension_semantics = [#tpu.dimension_semantics<parallel>, #tpu.dimension_semantics<parallel>, #tpu.dimension_semantics<arbitrary>], iteration_bounds = array<i64: 1, 6, 1>, scalar_prefetch = 0 : i64, scratch_operands = 1 : i64, tpu.core_type = #tpu.core_type<tc>, window_params = [{transform_indices = @transform_0, window_bounds = array<i64: 16, 64>}, {transform_indices = @transform_1, window_bounds = array<i64: 64, 512>}, {transform_indices = @transform_2, window_bounds = array<i64: 1, 512>}, {transform_indices = @transform_3, window_bounds = array<i64: 16, 512>}]} {
    %c0_i32 = arith.constant 0 : i32
    %0 = arith.cmpi eq, %arg2, %c0_i32 : i32
    %1 = arith.extui %0 : i1 to i32
    %c0_i32_0 = arith.constant 0 : i32
    %2 = arith.cmpi ne, %1, %c0_i32_0 : i32
    scf.if %2 {
      %c0_10 = arith.constant 0 : index
      %c0_11 = arith.constant 0 : index
      %13 = vector.load %arg5[%c0_10, %c0_11] : memref<1x512xf32, #tpu.memory_space<vmem>>, vector<1x512xf32>
      %14 = vector.shape_cast %13 : vector<1x512xf32> to vector<1x512xf32>
      %15 = vector.broadcast %14 : vector<1x512xf32> to vector<16x512xf32>
      %c0_12 = arith.constant 0 : index
      %c0_13 = arith.constant 0 : index
      %16 = vector.load %arg7[%c0_12, %c0_13] : memref<16x512xf32, #tpu.memory_space<vmem>>, vector<16x512xf32>
      tpu.vector_store %arg7[%c0_12, %c0_13], %15 {strides = array<i32>} : memref<16x512xf32, #tpu.memory_space<vmem>>, vector<16x512xf32>,
    } else {
    }
    %c0 = arith.constant 0 : index
    %c0_1 = arith.constant 0 : index
    %3 = vector.load %arg7[%c0, %c0_1] : memref<16x512xf32, #tpu.memory_space<vmem>>, vector<16x512xf32>
    %c0_2 = arith.constant 0 : index
    %c0_3 = arith.constant 0 : index
    %4 = vector.load %arg3[%c0_2, %c0_3] : memref<16x64xf32, #tpu.memory_space<vmem>>, vector<16x64xf32>
    %5 = arith.truncf %4 : vector<16x64xf32> to vector<16x64xbf16>
    %c0_4 = arith.constant 0 : index
    %c0_5 = arith.constant 0 : index
    %6 = vector.load %arg4[%c0_4, %c0_5] : memref<64x512xbf16, #tpu.memory_space<vmem>>, vector<64x512xbf16>
    %cst = arith.constant dense<0.000000e+00> : vector<16x512xf32>
    %7 = tpu.matmul %5, %6, %cst {dimension_numbers = #tpu.dot_dimension_numbers<[1], [0], [0], [1], [0, 0, 1, 1], [], []>} : vector<16x64xbf16>, vector<64x512xbf16>, vector<16x512xf32> -> vector<16x512xf32>
    %8 = arith.addf %3, %7 : vector<16x512xf32>
    %c0_6 = arith.constant 0 : index
    %c0_7 = arith.constant 0 : index
    %9 = vector.load %arg7[%c0_6, %c0_7] : memref<16x512xf32, #tpu.memory_space<vmem>>, vector<16x512xf32>
    tpu.vector_store %arg7[%c0_6, %c0_7], %8 {strides = array<i32>} : memref<16x512xf32, #tpu.memory_space<vmem>>, vector<16x512xf32>,
    %c0_i32_8 = arith.constant 0 : i32
    %10 = arith.cmpi eq, %arg2, %c0_i32_8 : i32
    %11 = arith.extui %10 : i1 to i32
    %c0_i32_9 = arith.constant 0 : i32
    %12 = arith.cmpi ne, %11, %c0_i32_9 : i32
    scf.if %12 {
      %c0_10 = arith.constant 0 : index
      %c0_11 = arith.constant 0 : index
      %13 = vector.load %arg7[%c0_10, %c0_11] : memref<16x512xf32, #tpu.memory_space<vmem>>, vector<16x512xf32>
      %14 = arith.truncf %13 : vector<16x512xf32> to vector<16x512xbf16>
      %c0_12 = arith.constant 0 : index
      %c0_13 = arith.constant 0 : index
      %15 = vector.load %arg6[%c0_12, %c0_13] : memref<16x512xbf16, #tpu.memory_space<vmem>>, vector<16x512xbf16>
      tpu.vector_store %arg6[%c0_12, %c0_13], %14 {strides = array<i32>} : memref<16x512xbf16, #tpu.memory_space<vmem>>, vector<16x512xbf16>,
    } else {
    }
    return
  }
  func.func @transform_0(%arg0: i32, %arg1: i32, %arg2: i32) -> (i32, i32) {
    %c0_i32 = arith.constant 0 : i32
    return %arg0, %arg2 : i32, i32
  }
  func.func @transform_1(%arg0: i32, %arg1: i32, %arg2: i32) -> (i32, i32) {
    %c0_i32 = arith.constant 0 : i32
    return %arg2, %arg1 : i32, i32
  }
  func.func @transform_2(%arg0: i32, %arg1: i32, %arg2: i32) -> (i32, i32) {
    %c0_i32 = arith.constant 0 : i32
    %c0_i32_0 = arith.constant 0 : i32
    return %c0_i32, %arg1 : i32, i32
  }
  func.func @transform_3(%arg0: i32, %arg1: i32, %arg2: i32) -> (i32, i32) {
    %c0_i32 = arith.constant 0 : i32
    return %arg0, %arg1 : i32, i32
  }
}

module attributes {stable_mosaic.version = 11 : i64} {
  func.func @_linear_kernel(%arg0: i32, %arg1: i32, %arg2: i32, %arg3: i32, %arg4: memref<8x64xf32, #tpu.memory_space<vmem>>, %arg5: memref<64x256xbf16, #tpu.memory_space<vmem>>, %arg6: memref<1x256xf32, #tpu.memory_space<vmem>>, %arg7: memref<8x256xf32, #tpu.memory_space<vmem>>, %arg8: memref<8x256xf32, #tpu.memory_space<vmem>>) attributes {dimension_semantics = [#tpu.dimension_semantics<parallel>, #tpu.dimension_semantics<parallel>, #tpu.dimension_semantics<parallel>, #tpu.dimension_semantics<arbitrary>], iteration_bounds = array<i64: 2, 1, 1, 1>, scalar_prefetch = 0 : i64, scratch_operands = 1 : i64, tpu.core_type = #tpu.core_type<tc>, window_params = [{transform_indices = @transform_0, window_bounds = array<i64: 8, 64>}, {transform_indices = @transform_1, window_bounds = array<i64: 64, 256>}, {transform_indices = @transform_2, window_bounds = array<i64: 1, 256>}, {transform_indices = @transform_3, window_bounds = array<i64: 8, 256>}]} {
    %c0_i32 = arith.constant 0 : i32
    %0 = arith.cmpi eq, %arg3, %c0_i32 : i32
    %1 = arith.extui %0 : i1 to i32
    %c0_i32_0 = arith.constant 0 : i32
    %2 = arith.cmpi ne, %1, %c0_i32_0 : i32
    scf.if %2 {
      %c0_10 = arith.constant 0 : index
      %c0_11 = arith.constant 0 : index
      %13 = vector.load %arg6[%c0_10, %c0_11] : memref<1x256xf32, #tpu.memory_space<vmem>>, vector<1x256xf32>
      %14 = vector.shape_cast %13 : vector<1x256xf32> to vector<1x256xf32>
      %15 = vector.broadcast %14 : vector<1x256xf32> to vector<8x256xf32>
      %c0_12 = arith.constant 0 : index
      %c0_13 = arith.constant 0 : index
      %16 = vector.load %arg8[%c0_12, %c0_13] : memref<8x256xf32, #tpu.memory_space<vmem>>, vector<8x256xf32>
      tpu.vector_store %arg8[%c0_12, %c0_13], %15 {strides = array<i32>} : memref<8x256xf32, #tpu.memory_space<vmem>>, vector<8x256xf32>,
    } else {
    }
    %c0 = arith.constant 0 : index
    %c0_1 = arith.constant 0 : index
    %3 = vector.load %arg8[%c0, %c0_1] : memref<8x256xf32, #tpu.memory_space<vmem>>, vector<8x256xf32>
    %c0_2 = arith.constant 0 : index
    %c0_3 = arith.constant 0 : index
    %4 = vector.load %arg4[%c0_2, %c0_3] : memref<8x64xf32, #tpu.memory_space<vmem>>, vector<8x64xf32>
    %5 = arith.truncf %4 : vector<8x64xf32> to vector<8x64xbf16>
    %c0_4 = arith.constant 0 : index
    %c0_5 = arith.constant 0 : index
    %6 = vector.load %arg5[%c0_4, %c0_5] : memref<64x256xbf16, #tpu.memory_space<vmem>>, vector<64x256xbf16>
    %cst = arith.constant dense<0.000000e+00> : vector<8x256xf32>
    %7 = tpu.matmul %5, %6, %cst {dimension_numbers = #tpu.dot_dimension_numbers<[1], [0], [0], [1], [0, 0, 1, 1], [], []>} : vector<8x64xbf16>, vector<64x256xbf16>, vector<8x256xf32> -> vector<8x256xf32>
    %8 = arith.addf %3, %7 : vector<8x256xf32>
    %c0_6 = arith.constant 0 : index
    %c0_7 = arith.constant 0 : index
    %9 = vector.load %arg8[%c0_6, %c0_7] : memref<8x256xf32, #tpu.memory_space<vmem>>, vector<8x256xf32>
    tpu.vector_store %arg8[%c0_6, %c0_7], %8 {strides = array<i32>} : memref<8x256xf32, #tpu.memory_space<vmem>>, vector<8x256xf32>,
    %c0_i32_8 = arith.constant 0 : i32
    %10 = arith.cmpi eq, %arg3, %c0_i32_8 : i32
    %11 = arith.extui %10 : i1 to i32
    %c0_i32_9 = arith.constant 0 : i32
    %12 = arith.cmpi ne, %11, %c0_i32_9 : i32
    scf.if %12 {
      %c0_10 = arith.constant 0 : index
      %c0_11 = arith.constant 0 : index
      %13 = vector.load %arg8[%c0_10, %c0_11] : memref<8x256xf32, #tpu.memory_space<vmem>>, vector<8x256xf32>
      %c0_12 = arith.constant 0 : index
      %c0_13 = arith.constant 0 : index
      %14 = vector.load %arg7[%c0_12, %c0_13] : memref<8x256xf32, #tpu.memory_space<vmem>>, vector<8x256xf32>
      tpu.vector_store %arg7[%c0_12, %c0_13], %13 {strides = array<i32>} : memref<8x256xf32, #tpu.memory_space<vmem>>, vector<8x256xf32>,
    } else {
    }
    return
  }
  func.func @transform_0(%arg0: i32, %arg1: i32, %arg2: i32, %arg3: i32) -> (i32, i32) {
    %c1_i32 = arith.constant 1 : i32
    %0 = arith.muli %arg0, %c1_i32 : i32
    %1 = arith.addi %0, %arg1 : i32
    %c0_i32 = arith.constant 0 : i32
    return %1, %arg3 : i32, i32
  }
  func.func @transform_1(%arg0: i32, %arg1: i32, %arg2: i32, %arg3: i32) -> (i32, i32) {
    %c0_i32 = arith.constant 0 : i32
    return %arg3, %arg2 : i32, i32
  }
  func.func @transform_2(%arg0: i32, %arg1: i32, %arg2: i32, %arg3: i32) -> (i32, i32) {
    %c0_i32 = arith.constant 0 : i32
    %c0_i32_0 = arith.constant 0 : i32
    return %c0_i32, %arg2 : i32, i32
  }
  func.func @transform_3(%arg0: i32, %arg1: i32, %arg2: i32, %arg3: i32) -> (i32, i32) {
    %c1_i32 = arith.constant 1 : i32
    %0 = arith.muli %arg0, %c1_i32 : i32
    %1 = arith.addi %0, %arg2 : i32
    %c0_i32 = arith.constant 0 : i32
    return %arg1, %1 : i32, i32
  }
}

</mosaic_0001>

<llo_original>
// kernel: custom_tokenizer_forward.7
$region0: #{custom_tokenizer_forward.7}
  #allocation0 [shape = 'u32[]', space=smem, size = 0x4, offset = 0x4, fixed_abs, tag = 'smem constant byte address 0x4 - core index']
  #allocation1 [shape = 'u32[144,128]{1,0:T(1,128)}', space=vmem, size = 0x12000, scoped, tag = 'internal scratch']
  #allocation2 [shape = 'f32[16,512]{1,0:T(8,128)}', space=vmem, size = 0x8000, scoped, tag = 'scratch operand']
  %s0 = inlined_call_operand.vmem [shape: f32[16,64], index: 0, kind: input, shape index: {}]
  %s1 = inlined_call_operand.hbm [shape: bf16[64,3072], index: 1, kind: input, shape index: {}]
  %s2 = inlined_call_operand.vmem [shape: f32[1,3072], index: 2, kind: input, shape index: {}]
  %s3 = inlined_call_operand.vmem [shape: bf16[16,3072], index: 3, kind: output, shape index: {}]
  %s4 = sld [smem:[#allocation0]]
  $region76: #{custom_tokenizer_forward.7} parent=0
    _
  %s6 = ssub.s32 1, %s4
  %s7 = scalar_select 0, %s6, %s4
  $region1: #{custom_tokenizer_forward.7} parent=0
    #allocation3 [shape = 'u8[131072]{0}', space=vmem, size = 0x20000, scoped, tag = 'input window, operand 1']
    #allocation4 [shape = 's32[2]{0}', space=sflag, size = 0x8, scoped, tag = 'scoped memory for custom_tokenizer_forward.7']
    #allocation5 [shape = 'u8[32768]{0}', space=vmem, size = 0x8000, scoped, tag = 'output window, operand 0']
    %8 = vsyncpa [#allocation4], 0
    %s9 = scalar_lea.sflag [#allocation4], 1
    %10 = vsyncpa %s9, 0
    loop: start=0, step=1, limit=8
    $region2: #{custom_tokenizer_forward.7} parent=1 // loop_pre_header
      _
    $region3: #{custom_tokenizer_forward.7} parent=1 // loop_header
      %s12 = sphi 0, %s16
      %p13 = scmp.ge.s32.totalorder %s12, 8
      %s19 = sphi 0, %s38
      %s20 = sphi 0, %s34
      %s21 = sphi 0, %s30
      %s22 = sphi 0, %s19
      %s23 = sphi 0, %s20
      %s24 = sphi 0, %s21
      %s25 = sphi 0, %s22
      %s26 = sphi 0, %s23
      %s27 = sphi 0, %s24
      %s43 = sphi 0, %s45
      %s46 = sphi 0, %s43
      %s47 = sphi 0, %s46
      %s63 = sphi 0, %s47
      %s71 = sphi 0, %s73
      %s74 = sphi 0, %s71
      %s75 = sphi 0, %s74
      %s91 = sphi 0, %s75
      %s97 = sphi 0, %s99
      %s100 = sphi 0, %s97
      %s101 = sphi 0, %s100
      %s117 = sphi 0, %s101
      %s125 = sphi 0, %s127
      %s128 = sphi 0, %s125
      %s129 = sphi 0, %s128
      %s145 = sphi 0, %s129
    $region4: #{custom_tokenizer_forward.7} parent=1 // loop_header_branch
      %15 = sbr.rel (%p13) target = $region8
    $region5: #{custom_tokenizer_forward.7} parent=1 // loop_body
      %s17 = ssub.s32 %s12, 1
      %s18 = ssub.s32 %s12, 2
      %s28 = sadd.s32 1, %s21
      %p29 = scmp.ge.s32.totalorder %s28, 1
      %s30 = scalar_select %p29, 0, %s28
      %s31 = sadd.s32 1, %s20
      %s32 = scalar_select %p29, %s31, %s20
      %p33 = scmp.ge.s32.totalorder %s32, 6
      %s34 = scalar_select %p33, 0, %s32
      %s35 = sadd.s32 1, %s19
      %s36 = scalar_select %p33, %s35, %s19
      %p37 = scmp.ge.s32.totalorder %s36, 1
      %s38 = scalar_select %p37, 0, %s36
      %s39 = ssub.s32 %s19, %s38
      %s40 = ssub.s32 %s21, %s30
      %s41 = sor.u32 %s39, %s40
      %p42 = scmp.eq.s32.totalorder %s41, 0
      %s44 = sadd.s32 %s43, 1
      %s45 = scalar_select %p42, %s43, %s44
      %p48 = pneg %p42
      %p49 = scmp.eq.s32.totalorder %s12, 5
      %p50 = por %p48, %p49
      %p51 = scmp.ne.s32.totalorder %s43, %s46
      %p52 = scmp.eq.s32.totalorder %s12, 0
      %p53 = por %p51, %p52
      %p54 = scmp.ne.s32.totalorder %s43, %s46
      %p55 = scmp.eq.s32.totalorder %s17, 5
      %p56 = por %p54, %p55
      %p57 = scmp.ne.s32.totalorder %s46, %s47
      %p58 = scmp.eq.s32.totalorder %s17, 0
      %p59 = por %p57, %p58
      %p60 = scmp.ne.s32.totalorder %s46, %s47
      %p61 = scmp.eq.s32.totalorder %s18, 5
      %p62 = por %p60, %p61
      %p64 = scmp.ne.s32.totalorder %s47, %s63
      %p65 = scmp.eq.s32.totalorder %s18, 0
      %p66 = por %p64, %p65
      %s67 = ssub.s32 %s21, %s30
      %s68 = ssub.s32 %s20, %s34
      %s69 = sor.u32 %s67, %s68
      %p70 = scmp.eq.s32.totalorder %s69, 0
      %s72 = sadd.s32 %s71, 1
      %s73 = scalar_select %p70, %s71, %s72
      %p76 = pneg %p70
      %p77 = scmp.eq.s32.totalorder %s12, 5
      %p78 = por %p76, %p77
      %p79 = scmp.ne.s32.totalorder %s71, %s74
      %p80 = scmp.eq.s32.totalorder %s12, 0
      %p81 = por %p79, %p80
      %p82 = scmp.ne.s32.totalorder %s71, %s74
      %p83 = scmp.eq.s32.totalorder %s17, 5
      %p84 = por %p82, %p83
      %p85 = scmp.ne.s32.totalorder %s74, %s75
      %p86 = scmp.eq.s32.totalorder %s17, 0
      %p87 = por %p85, %p86
      %p88 = scmp.ne.s32.totalorder %s74, %s75
      %p89 = scmp.eq.s32.totalorder %s18, 5
      %p90 = por %p88, %p89
      %p92 = scmp.ne.s32.totalorder %s75, %s91
      %p93 = scmp.eq.s32.totalorder %s18, 0
      %p94 = por %p92, %p93
      %s95 = ssub.s32 %s20, %s34
      %p96 = scmp.eq.s32.totalorder %s95, 0
      %s98 = sadd.s32 %s97, 1
      %s99 = scalar_select %p96, %s97, %s98
      %p102 = pneg %p96
      %p103 = scmp.eq.s32.totalorder %s12, 5
      %p104 = por %p102, %p103
      %p105 = scmp.ne.s32.totalorder %s97, %s100
      %p106 = scmp.eq.s32.totalorder %s12, 0
      %p107 = por %p105, %p106
      %p108 = scmp.ne.s32.totalorder %s97, %s100
      %p109 = scmp.eq.s32.totalorder %s17, 5
      %p110 = por %p108, %p109
      %p111 = scmp.ne.s32.totalorder %s100, %s101
      %p112 = scmp.eq.s32.totalorder %s17, 0
      %p113 = por %p111, %p112
      %p114 = scmp.ne.s32.totalorder %s100, %s101
      %p115 = scmp.eq.s32.totalorder %s18, 5
      %p116 = por %p114, %p115
      %p118 = scmp.ne.s32.totalorder %s101, %s117
      %p119 = scmp.eq.s32.totalorder %s18, 0
      %p120 = por %p118, %p119
      %s121 = ssub.s32 %s19, %s38
      %s122 = ssub.s32 %s20, %s34
      %s123 = sor.u32 %s121, %s122
      %p124 = scmp.eq.s32.totalorder %s123, 0
      %s126 = sadd.s32 %s125, 1
      %s127 = scalar_select %p124, %s125, %s126
      %p130 = pneg %p124
      %p131 = scmp.eq.s32.totalorder %s12, 5
      %p132 = por %p130, %p131
      %p133 = scmp.ne.s32.totalorder %s125, %s128
      %p134 = scmp.eq.s32.totalorder %s12, 0
      %p135 = por %p133, %p134
      %p136 = scmp.ne.s32.totalorder %s125, %s128
      %p137 = scmp.eq.s32.totalorder %s17, 5
      %p138 = por %p136, %p137
      %p139 = scmp.ne.s32.totalorder %s128, %s129
      %p140 = scmp.eq.s32.totalorder %s17, 0
      %p141 = por %p139, %p140
      %p142 = scmp.ne.s32.totalorder %s128, %s129
      %p143 = scmp.eq.s32.totalorder %s18, 5
      %p144 = por %p142, %p143
      %p146 = scmp.ne.s32.totalorder %s129, %s145
      %p147 = scmp.eq.s32.totalorder %s18, 0
      %p148 = por %p146, %p147
      %p149 = scmp.le.s32.totalorder 1, %s12
      %p150 = scmp.lt.s32.totalorder %s12, 7
      %p151 = pnand %p149, %p150
      %p152 = pneg %p151
      // Predicated region
      $region9: #{custom_tokenizer_forward.7} parent=5 // pred_check
        _
      $region10: #{custom_tokenizer_forward.7} parent=5 // pred_check_branch
        %154 = sbr.rel (%p151) target = $region12
      $region11: #{custom_tokenizer_forward.7} parent=5 // pred_region
        %s155 = ssub.s32 %s12, 1
        // Predicated region
        $region13: #{custom_tokenizer_forward.7} parent=11 // pred_check
          %p156 = pneg %p59
        $region14: #{custom_tokenizer_forward.7} parent=11 // pred_check_branch
          %158 = sbr.rel (%p156) target = $region16
        $region15: #{custom_tokenizer_forward.7} parent=11 // pred_region
          %s159 = smul.u32 2, %s22
          %p160 = scmp.lt.s32.totalorder %s159, 1
          %s161 = scalar_select %p160, %s159, 1
          %p162 = scmp.lt.s32.totalorder %s24, 0
          %s163 = scalar_select %p162, %s24, 0
          %s164 = sadd.s32 %s163, %s161
          %s165 = smul.addr %s164, 8
          %s166 = scalar_lea.vmem %s0, %s165
          %s167 = smul.u32 2, %s22
        $region16: #{custom_tokenizer_forward.7} parent=11 // pred_fallthru
          _
      $region12: #{custom_tokenizer_forward.7} parent=5 // pred_fallthru
        _
      %p168 = scmp.lt.s32.totalorder %s12, 6
      // Predicated region
      $region17: #{custom_tokenizer_forward.7} parent=5 // pred_check
        %p169 = pneg %p168
      $region18: #{custom_tokenizer_forward.7} parent=5 // pred_check_branch
        %171 = sbr.rel (%p169) target = $region20
      $region19: #{custom_tokenizer_forward.7} parent=5 // pred_region
        // Predicated region
        $region21: #{custom_tokenizer_forward.7} parent=19 // pred_check
          %p172 = pneg %p81
        $region22: #{custom_tokenizer_forward.7} parent=19 // pred_check_branch
          %174 = sbr.rel (%p172) target = $region24
        $region23: #{custom_tokenizer_forward.7} parent=19 // pred_region
          %s175 = sand.u32 %s71, 1
          %s176 = scalar_lea.sflag [#allocation4], %s175
          %s177 = sand.u32 %s71, 1
          %s178 = smul.addr %s177, 128
          %s179 = scalar_lea.vmem [#allocation3], %s178
          %s180 = smul.u32 8, %s21
          %s181 = smul.u32 4, %s20
          %s183 = ssub.s32 2048, 2048
          %184 = vsyncadd %s176, %s183
          %s185 = smul.addr %s180, 24
          %s186 = sadd.s32 %s181, %s185
          %s187 = smul.addr %s186, 64
          %s188 = scalar_lea.hbm %s1, %s187
          %s189 = sshll.u32 %s179, 4
          %s190 = int_to_ptr.vmem [resolvable:$true] %s189
          %195 = dma.hbm_to_vmem [thread:$0]  %s188, 2048, %s190, %s176, 1536, 256, 16
        $region24: #{custom_tokenizer_forward.7} parent=19 // pred_fallthru
          _
        // Predicated region
        $region25: #{custom_tokenizer_forward.7} parent=19 // pred_check
          %p196 = pneg %p107
        $region26: #{custom_tokenizer_forward.7} parent=19 // pred_check_branch
          %198 = sbr.rel (%p196) target = $region28
        $region27: #{custom_tokenizer_forward.7} parent=19 // pred_region
          %s199 = smul.u32 4, %s20
          %p200 = scmp.lt.s32.totalorder %s199, 23
          %s201 = scalar_select %p200, %s199, 23
          %s202 = scalar_lea.vmem %s2, %s201
          %s203 = smul.u32 4, %s20
        $region28: #{custom_tokenizer_forward.7} parent=19 // pred_fallthru
          _
      $region20: #{custom_tokenizer_forward.7} parent=5 // pred_fallthru
        _
      %p204 = scmp.le.s32.totalorder 1, %s12
      %p205 = scmp.lt.s32.totalorder %s12, 7
      %p206 = pnand %p204, %p205
      %p207 = pneg %p206
      // Predicated region
      $region29: #{custom_tokenizer_forward.7} parent=5 // pred_check
        _
      $region30: #{custom_tokenizer_forward.7} parent=5 // pred_check_branch
        %209 = sbr.rel (%p206) target = $region32
      $region31: #{custom_tokenizer_forward.7} parent=5 // pred_region
        %s210 = ssub.s32 %s12, 1
        %s211 = sand.u32 %s74, 1
        %s212 = scalar_lea.sflag [#allocation4], %s211
        %s213 = sand.u32 %s74, 1
        %s214 = smul.addr %s213, 128
        %s215 = scalar_lea.vmem [#allocation3], %s214
        // Predicated region
        $region33: #{custom_tokenizer_forward.7} parent=31 // pred_check
          %p216 = pneg %p87
        $region34: #{custom_tokenizer_forward.7} parent=31 // pred_check_branch
          %218 = sbr.rel (%p216) target = $region36
        $region35: #{custom_tokenizer_forward.7} parent=31 // pred_region
          %219 = dma.done %s212, 2048
        $region36: #{custom_tokenizer_forward.7} parent=31 // pred_fallthru
          _
        %s220 = smul.u32 2, %s22
        %p221 = scmp.lt.s32.totalorder %s220, 1
        %s222 = scalar_select %p221, %s220, 1
        %p223 = scmp.lt.s32.totalorder %s24, 0
        %s224 = scalar_select %p223, %s24, 0
        %s225 = sadd.s32 %s224, %s222
        %s226 = smul.addr %s225, 8
        %s227 = scalar_lea.vmem %s0, %s226
        %p228 = pneg %p59
        %p229 = pneg %p56
        %s230 = sand.u32 %s74, 1
        %s231 = scalar_lea.sflag [#allocation4], %s230
        %s232 = sand.u32 %s74, 1
        %s233 = smul.addr %s232, 128
        %s234 = scalar_lea.vmem [#allocation3], %s233
        %p235 = pneg %p87
        %p236 = pneg %p84
        %s237 = smul.u32 4, %s23
        %p238 = scmp.lt.s32.totalorder %s237, 23
        %s239 = scalar_select %p238, %s237, 23
        %s240 = scalar_lea.vmem %s2, %s239
        %p241 = pneg %p113
        %p242 = pneg %p110
        %p243 = pneg %p141
        %p244 = pneg %p138
        %s245 = sand.u32 %s128, 1
        %s246 = sand.u32 %s128, 1
        %s247 = smul.addr %s246, 32
        %s248 = scalar_lea.vmem [#allocation5], %s247
        %s249 = smul.u32 2, %s22
        %p250 = scmp.lt.s32.totalorder %s249, 1
        %s251 = scalar_select %p250, %s249, 1
        %p252 = scmp.lt.s32.totalorder %s24, 0
        %s253 = scalar_select %p252, %s24, 0
        %s254 = sadd.s32 %s253, %s251
        %s255 = smul.addr %s254, 8
        %s256 = scalar_lea.vmem %s0, %s255
        %s257 = smul.u32 2, %s22
        %s258 = smul.u32 8, %s24
        %s259 = smul.u32 4, %s23
        %s260 = smul.u32 4, %s23
        %p261 = scmp.lt.s32.totalorder %s260, 23
        %s262 = scalar_select %p261, %s260, 23
        %s263 = scalar_lea.vmem %s2, %s262
        %s264 = smul.u32 4, %s23
        %s265 = smul.u32 2, %s22
        %s266 = smul.u32 4, %s23
        %p268 = scmp.eq.s32.totalorder %s24, 0
        // Predicated region
        $region37: #{custom_tokenizer_forward.7} parent=31 // pred_check
          %p269 = pneg %p268
        $region38: #{custom_tokenizer_forward.7} parent=31 // pred_check_branch
          %271 = sbr.rel (%p269) target = $region40
        $region39: #{custom_tokenizer_forward.7} parent=31 // pred_region
          %v272 = vld [vmem:[%s263] sm:$0xf]
          %v274 = vlaneseq
          %v275 = vshrl.u32 %v274, 7
          %v276 = vsub.s32 0, %v275
          %v277 = vrot.slane %v272, %v276
          %v278 = vlaneseq
          %v279 = vshrl.u32 %v278, 7
          %v280 = vsub.s32 1, %v279
          %v281 = vrot.slane %v272, %v280
          %v282 = vlaneseq
          %v283 = vshrl.u32 %v282, 7
          %v284 = vsub.s32 2, %v283
          %v285 = vrot.slane %v272, %v284
          %v286 = vlaneseq
          %v287 = vshrl.u32 %v286, 7
          %v288 = vsub.s32 3, %v287
          %v289 = vrot.slane %v272, %v288
          %294 = vst [vmem:[#allocation2] sm:$0xff] %v277
          %295 = vst [vmem:[#allocation2 + $0x8] sm:$0xff] %v281
          %296 = vst [vmem:[#allocation2 + $0x10] sm:$0xff] %v285
          %297 = vst [vmem:[#allocation2 + $0x18] sm:$0xff] %v289
          %298 = vst [vmem:[#allocation2 + $0x20] sm:$0xff] %v277
          %299 = vst [vmem:[#allocation2 + $0x28] sm:$0xff] %v281
          %300 = vst [vmem:[#allocation2 + $0x30] sm:$0xff] %v285
          %301 = vst [vmem:[#allocation2 + $0x38] sm:$0xff] %v289
        $region40: #{custom_tokenizer_forward.7} parent=31 // pred_fallthru
          _
        %v302 = vld [vmem:[#allocation2] sm:$0xff]
        %v303 = vld [vmem:[#allocation2 + $0x8] sm:$0xff]
        %v304 = vld [vmem:[#allocation2 + $0x10] sm:$0xff]
        %v305 = vld [vmem:[#allocation2 + $0x18] sm:$0xff]
        %v306 = vld [vmem:[#allocation2 + $0x20] sm:$0xff]
        %v307 = vld [vmem:[#allocation2 + $0x28] sm:$0xff]
        %v308 = vld [vmem:[#allocation2 + $0x30] sm:$0xff]
        %v309 = vld [vmem:[#allocation2 + $0x38] sm:$0xff]
        %v310 = vld [vmem:[%s256] sm:$0xff]
        %v311 = vld [vmem:[%s256 + $0x8] sm:$0xff]
        %v312 = vpack.c.bf16 %v311, %v310
        %v313 = vld [vmem:[%s215] sm:$0xff]
        %v314 = vld [vmem:[%s215 + $0x8] sm:$0xff]
        %v315 = vld [vmem:[%s215 + $0x10] sm:$0xff]
        %v316 = vld [vmem:[%s215 + $0x18] sm:$0xff]
        %v317 = vld [vmem:[%s215 + $0x20] sm:$0xff]
        %v318 = vld [vmem:[%s215 + $0x28] sm:$0xff]
        %v319 = vld [vmem:[%s215 + $0x30] sm:$0xff]
        %v320 = vld [vmem:[%s215 + $0x38] sm:$0xff]
        %v321 = vld [vmem:[%s215 + $0x40] sm:$0xff]
        %v322 = vld [vmem:[%s215 + $0x48] sm:$0xff]
        %v323 = vld [vmem:[%s215 + $0x50] sm:$0xff]
        %v324 = vld [vmem:[%s215 + $0x58] sm:$0xff]
        %v325 = vld [vmem:[%s215 + $0x60] sm:$0xff]
        %v326 = vld [vmem:[%s215 + $0x68] sm:$0xff]
        %v327 = vld [vmem:[%s215 + $0x70] sm:$0xff]
        %v328 = vld [vmem:[%s215 + $0x78] sm:$0xff]
        %v345 = vunpack.c.l.b16 %v313
        %v346 = vunpack.c.h.b16 %v313
        %v347 = vunpack.c.l.b16 %v314
        %v348 = vunpack.c.h.b16 %v314
        %v349 = vunpack.c.l.b16 %v315
        %v350 = vunpack.c.h.b16 %v315
        %v351 = vunpack.c.l.b16 %v316
        %v352 = vunpack.c.h.b16 %v316
        %v353 = vunpack.c.l.b16 %v317
        %v354 = vunpack.c.h.b16 %v317
        %v355 = vunpack.c.l.b16 %v318
        %v356 = vunpack.c.h.b16 %v318
        %v357 = vunpack.c.l.b16 %v319
        %v358 = vunpack.c.h.b16 %v319
        %v359 = vunpack.c.l.b16 %v320
        %v360 = vunpack.c.h.b16 %v320
        %v361 = vunpack.c.l.b16 %v321
        %v362 = vunpack.c.h.b16 %v321
        %v363 = vunpack.c.l.b16 %v322
        %v364 = vunpack.c.h.b16 %v322
        %v365 = vunpack.c.l.b16 %v323
        %v366 = vunpack.c.h.b16 %v323
        %v367 = vunpack.c.l.b16 %v324
        %v368 = vunpack.c.h.b16 %v324
        %v369 = vunpack.c.l.b16 %v325
        %v370 = vunpack.c.h.b16 %v325
        %v371 = vunpack.c.l.b16 %v326
        %v372 = vunpack.c.h.b16 %v326
        %v373 = vunpack.c.l.b16 %v327
        %v374 = vunpack.c.h.b16 %v327
        %v375 = vunpack.c.l.b16 %v328
        %v376 = vunpack.c.h.b16 %v328
        %v377 = vpack.c.b16 %v349, %v345
        %v378 = vpack.c.b16 %v350, %v346
        %v379 = vpack.c.b16 %v351, %v347
        %v380 = vpack.c.b16 %v352, %v348
        %v381 = vpack.c.b16 %v357, %v353
        %v382 = vpack.c.b16 %v358, %v354
        %v383 = vpack.c.b16 %v359, %v355
        %v384 = vpack.c.b16 %v360, %v356
        %v385 = vpack.c.b16 %v365, %v361
        %v386 = vpack.c.b16 %v366, %v362
        %v387 = vpack.c.b16 %v367, %v363
        %v388 = vpack.c.b16 %v368, %v364
        %v389 = vpack.c.b16 %v373, %v369
        %v390 = vpack.c.b16 %v374, %v370
        %v391 = vpack.c.b16 %v375, %v371
        %v392 = vpack.c.b16 %v376, %v372
        %vm409 = vcmask 523264
        %v411 = vsel %vm409, %v312, 0
        %413 = vmatprep.subr.bf16.mxu0 %v378
        %414 = vmatpush1.bf16.msra.mxu0 %v377
        %415 = vmatprep.subr.bf16.mxu0 %v382
        %416 = vmatpush1.bf16.msra.mxu0 %v381
        %417 = vmatprep.subr.bf16.mxu0 %v386
        %418 = vmatpush1.bf16.msra.mxu0 %v385
        %419 = vmatprep.subr.bf16.mxu0 %v390
        %420 = vmatpush1.bf16.msra.mxu0 %v389
        %421 = vmatprep.subr.bf16.mxu0 0
        %422 = vmatpush1.bf16.msra.mxu0 0
        %423 = vmatprep.subr.bf16.mxu0 0
        %424 = vmatpush1.bf16.msra.mxu0 0
        %425 = vmatprep.subr.bf16.mxu0 0
        %426 = vmatpush1.bf16.msra.mxu0 0
        %427 = vmatprep.subr.bf16.mxu0 0
        %428 = vmatpush1.bf16.msra.mxu0 0
        %429 = vmatprep.subr.bf16.mxu0 0
        %430 = vmatpush1.bf16.msra.mxu0 0
        %431 = vmatprep.subr.bf16.mxu0 0
        %432 = vmatpush1.bf16.msra.mxu0 0
        %433 = vmatprep.subr.bf16.mxu0 0
        %434 = vmatpush1.bf16.msra.mxu0 0
        %435 = vmatprep.subr.bf16.mxu0 0
        %436 = vmatpush1.bf16.msra.mxu0 0
        %437 = vmatprep.subr.bf16.mxu0 0
        %438 = vmatpush1.bf16.msra.mxu0 0
        %439 = vmatprep.subr.bf16.mxu0 0
        %440 = vmatpush1.bf16.msra.mxu0 0
        %441 = vmatprep.subr.bf16.mxu0 0
        %442 = vmatpush1.bf16.msra.mxu0 0
        %443 = vmatprep.subr.bf16.mxu0 0
        %444 = vmatpush1.bf16.msra.mxu0 0
        %445 = vmatprep.mubr.bf16.mxu0 0
        %446 = vmatmul.mubr.bf16.gmra.mrb[0].mxu0 %v411
        %v447 = vpop.f32.mrb[0].mxu0
        %v448 = vadd.f32 0.0, %v447
        %v449 = vpop.f32.mrb[0].mxu0
        %v450 = vadd.f32 0.0, %v449
        %v451 = vpop.f32.mrb[0].mxu0
        %v452 = vadd.f32 0.0, %v451
        %v453 = vpop.f32.mrb[0].mxu0
        %v454 = vadd.f32 0.0, %v453
        %455 = vdwg.mxu0
        %456 = vmatprep.subr.bf16.mxu0 %v380
        %457 = vmatpush1.bf16.msra.mxu0 %v379
        %458 = vmatprep.subr.bf16.mxu0 %v384
        %459 = vmatpush1.bf16.msra.mxu0 %v383
        %460 = vmatprep.subr.bf16.mxu0 %v388
        %461 = vmatpush1.bf16.msra.mxu0 %v387
        %462 = vmatprep.subr.bf16.mxu0 %v392
        %463 = vmatpush1.bf16.msra.mxu0 %v391
        %464 = vmatprep.subr.bf16.mxu0 0
        %465 = vmatpush1.bf16.msra.mxu0 0
        %466 = vmatprep.subr.bf16.mxu0 0
        %467 = vmatpush1.bf16.msra.mxu0 0
        %468 = vmatprep.subr.bf16.mxu0 0
        %469 = vmatpush1.bf16.msra.mxu0 0
        %470 = vmatprep.subr.bf16.mxu0 0
        %471 = vmatpush1.bf16.msra.mxu0 0
        %472 = vmatprep.subr.bf16.mxu0 0
        %473 = vmatpush1.bf16.msra.mxu0 0
        %474 = vmatprep.subr.bf16.mxu0 0
        %475 = vmatpush1.bf16.msra.mxu0 0
        %476 = vmatprep.subr.bf16.mxu0 0
        %477 = vmatpush1.bf16.msra.mxu0 0
        %478 = vmatprep.subr.bf16.mxu0 0
        %479 = vmatpush1.bf16.msra.mxu0 0
        %480 = vmatprep.subr.bf16.mxu0 0
        %481 = vmatpush1.bf16.msra.mxu0 0
        %482 = vmatprep.subr.bf16.mxu0 0
        %483 = vmatpush1.bf16.msra.mxu0 0
        %484 = vmatprep.subr.bf16.mxu0 0
        %485 = vmatpush1.bf16.msra.mxu0 0
        %486 = vmatprep.subr.bf16.mxu0 0
        %487 = vmatpush1.bf16.msra.mxu0 0
        %488 = vmatprep.mubr.bf16.mxu0 0
        %489 = vmatmul.mubr.bf16.gmra.mrb[0].mxu0 %v411
        %v490 = vpop.f32.mrb[0].mxu0
        %v491 = vadd.f32 0.0, %v490
        %v492 = vpop.f32.mrb[0].mxu0
        %v493 = vadd.f32 0.0, %v492
        %v494 = vpop.f32.mrb[0].mxu0
        %v495 = vadd.f32 0.0, %v494
        %v496 = vpop.f32.mrb[0].mxu0
        %v497 = vadd.f32 0.0, %v496
        %498 = vdwg.mxu0
        %v499 = vadd.f32 %v302, %v448
        %v500 = vadd.f32 %v303, %v450
        %v501 = vadd.f32 %v304, %v491
        %v502 = vadd.f32 %v305, %v493
        %v503 = vadd.f32 %v306, %v452
        %v504 = vadd.f32 %v307, %v454
        %v505 = vadd.f32 %v308, %v495
        %v506 = vadd.f32 %v309, %v497
        %507 = vst [vmem:[#allocation2] sm:$0xff] %v499
        %508 = vst [vmem:[#allocation2 + $0x8] sm:$0xff] %v500
        %509 = vst [vmem:[#allocation2 + $0x10] sm:$0xff] %v501
        %510 = vst [vmem:[#allocation2 + $0x18] sm:$0xff] %v502
        %511 = vst [vmem:[#allocation2 + $0x20] sm:$0xff] %v503
        %512 = vst [vmem:[#allocation2 + $0x28] sm:$0xff] %v504
        %513 = vst [vmem:[#allocation2 + $0x30] sm:$0xff] %v505
        %514 = vst [vmem:[#allocation2 + $0x38] sm:$0xff] %v506
        // Predicated region
        $region41: #{custom_tokenizer_forward.7} parent=31 // pred_check
          %p515 = pneg %p268
        $region42: #{custom_tokenizer_forward.7} parent=31 // pred_check_branch
          %517 = sbr.rel (%p515) target = $region44
        $region43: #{custom_tokenizer_forward.7} parent=31 // pred_region
          %v518 = vld [vmem:[#allocation2] sm:$0xff]
          %v519 = vld [vmem:[#allocation2 + $0x8] sm:$0xff]
          %v520 = vld [vmem:[#allocation2 + $0x10] sm:$0xff]
          %v521 = vld [vmem:[#allocation2 + $0x18] sm:$0xff]
          %v522 = vld [vmem:[#allocation2 + $0x20] sm:$0xff]
          %v523 = vld [vmem:[#allocation2 + $0x28] sm:$0xff]
          %v524 = vld [vmem:[#allocation2 + $0x30] sm:$0xff]
          %v525 = vld [vmem:[#allocation2 + $0x38] sm:$0xff]
          %v526 = vpack.c.bf16 %v522, %v518
          %v527 = vpack.c.bf16 %v523, %v519
          %v528 = vpack.c.bf16 %v524, %v520
          %v529 = vpack.c.bf16 %v525, %v521
          %v534 = vunpack.c.l.b16 %v526
          %v535 = vunpack.c.l.b16 %v527
          %v536 = vunpack.c.l.b16 %v528
          %v537 = vunpack.c.l.b16 %v529
          %v538 = vunpack.c.h.b16 %v526
          %v539 = vunpack.c.h.b16 %v527
          %v540 = vunpack.c.h.b16 %v528
          %v541 = vunpack.c.h.b16 %v529
          %v542 = vpack.c.b16 %v535, %v534
          %v543 = vpack.c.b16 %v537, %v536
          %v544 = vpack.c.b16 %v539, %v538
          %v545 = vpack.c.b16 %v541, %v540
          %550 = vst [vmem:[%s248] sm:$0xff] %v542
          %551 = vst [vmem:[%s248 + $0x8] sm:$0xff] %v543
          %552 = vst [vmem:[%s248 + $0x10] sm:$0xff] %v544
          %553 = vst [vmem:[%s248 + $0x18] sm:$0xff] %v545
        $region44: #{custom_tokenizer_forward.7} parent=31 // pred_fallthru
          _
        %s554 = sand.u32 %s128, 1
        %s555 = sand.u32 %s128, 1
        %s556 = smul.addr %s555, 32
        %s557 = scalar_lea.vmem [#allocation5], %s556
        // Predicated region
        $region45: #{custom_tokenizer_forward.7} parent=31 // pred_check
          %p558 = pneg %p138
        $region46: #{custom_tokenizer_forward.7} parent=31 // pred_check_branch
          %560 = sbr.rel (%p558) target = $region48
        $region47: #{custom_tokenizer_forward.7} parent=31 // pred_region
          %s561 = smul.u32 2, %s22
          %s562 = smul.u32 4, %s23
          %s563 = smul.addr %s561, 24
          %s564 = sadd.s32 %s562, %s563
          %s565 = smul.addr %s564, 4
          %s566 = scalar_lea.vmem %s3, %s565
          // Predicated region
          $region49: #{custom_tokenizer_forward.7} parent=47 // pred_check
            _
          $region50: #{custom_tokenizer_forward.7} parent=47 // pred_check_branch
            %568 = sbr.rel (0) target = $region52
          $region51: #{custom_tokenizer_forward.7} parent=47 // pred_region
            // Predicated region
            $region53: #{custom_tokenizer_forward.7} parent=51 // pred_check
              _
            $region54: #{custom_tokenizer_forward.7} parent=51 // pred_check_branch
              %570 = sbr.rel (0) target = $region56
            $region55: #{custom_tokenizer_forward.7} parent=51 // pred_region
              loop: start=0, step=1, limit=1
              $region57: #{custom_tokenizer_forward.7} parent=55 // loop_pre_header
                _
              $region58: #{custom_tokenizer_forward.7} parent=55 // loop_header
                %s572 = sphi 0, %s576
                %p573 = scmp.ge.s32.totalorder %s572, 1
                %s577 = sphi %s557, %s557
                %s578 = sphi %s566, %s566
              $region59: #{custom_tokenizer_forward.7} parent=55 // loop_header_branch
                %575 = sbr.rel (%p573) target = $region63
              $region60: #{custom_tokenizer_forward.7} parent=55 // loop_body
                %v579 = vld [vmem:[%s577] sm:$0xff]
                %580 = vst [vmem:[%s578] sm:$0xff] %v579
                %v581 = vld [vmem:[%s577 + $0x8] sm:$0xff]
                %582 = vst [vmem:[%s578 + $0x8] sm:$0xff] %v581
                %v583 = vld [vmem:[%s577 + $0x10] sm:$0xff]
                %584 = vst [vmem:[%s578 + $0x60] sm:$0xff] %v583
                %v585 = vld [vmem:[%s577 + $0x18] sm:$0xff]
                %586 = vst [vmem:[%s578 + $0x68] sm:$0xff] %v585
              $region61: #{custom_tokenizer_forward.7} parent=55 // loop_footer
                %s576 = sadd.s32 1, %s572
              $region62: #{custom_tokenizer_forward.7} parent=55 // loop_footer_branch
                %571 = sbr.rel target = $region58
              $region63: #{custom_tokenizer_forward.7} parent=55 // loop_exit
                _
            $region56: #{custom_tokenizer_forward.7} parent=51 // pred_fallthru
              _
            // Predicated region
            $region64: #{custom_tokenizer_forward.7} parent=51 // pred_check
              _
            $region65: #{custom_tokenizer_forward.7} parent=51 // pred_check_branch
              %588 = sbr.rel target = $region67
            $region66: #{custom_tokenizer_forward.7} parent=51 // pred_region
              _
            $region67: #{custom_tokenizer_forward.7} parent=51 // pred_fallthru
              _
          $region52: #{custom_tokenizer_forward.7} parent=47 // pred_fallthru
            _
          %589 = vnop
        $region48: #{custom_tokenizer_forward.7} parent=31 // pred_fallthru
          _
      $region32: #{custom_tokenizer_forward.7} parent=5 // pred_fallthru
        _
      %p590 = scmp.le.s32.totalorder 2, %s12
      // Predicated region
      $region68: #{custom_tokenizer_forward.7} parent=5 // pred_check
        %p591 = pneg %p590
      $region69: #{custom_tokenizer_forward.7} parent=5 // pred_check_branch
        %593 = sbr.rel (%p591) target = $region71
      $region70: #{custom_tokenizer_forward.7} parent=5 // pred_region
        %s594 = ssub.s32 %s12, 2
        // Predicated region
        $region72: #{custom_tokenizer_forward.7} parent=70 // pred_check
          %p595 = pneg %p144
        $region73: #{custom_tokenizer_forward.7} parent=70 // pred_check_branch
          %597 = sbr.rel (%p595) target = $region75
        $region74: #{custom_tokenizer_forward.7} parent=70 // pred_region
          %s598 = sand.u32 %s129, 1
          %s599 = sand.u32 %s129, 1
          %s600 = smul.addr %s599, 32
          %s601 = scalar_lea.vmem [#allocation5], %s600
        $region75: #{custom_tokenizer_forward.7} parent=70 // pred_fallthru
          _
      $region71: #{custom_tokenizer_forward.7} parent=5 // pred_fallthru
        _
    $region6: #{custom_tokenizer_forward.7} parent=1 // loop_footer
      %s16 = sadd.s32 1, %s12
    $region7: #{custom_tokenizer_forward.7} parent=1 // loop_footer_branch
      %11 = sbr.rel target = $region3
    $region8: #{custom_tokenizer_forward.7} parent=1 // loop_exit
      _
    %602 = vsyncpa [#allocation4], 1
    %s603 = scalar_lea.sflag [#allocation4], 1
    %604 = vsyncpa %s603, 1

// kernel: custom_tokenizer_forward.9
$region0: #{custom_tokenizer_forward.9}
  #allocation0 [shape = 'u32[]', space=smem, size = 0x4, offset = 0x4, fixed_abs, tag = 'smem constant byte address 0x4 - core index']
  #allocation1 [shape = 'u32[144,128]{1,0:T(1,128)}', space=vmem, size = 0x12000, scoped, tag = 'internal scratch']
  #allocation2 [shape = 'f32[16,64]{1,0:T(8,128)}', space=vmem, size = 0x2000, scoped, tag = 'scratch operand']
  %s0 = inlined_call_operand.vmem [shape: f32[16,64], index: 0, kind: input, shape index: {}]
  %s1 = inlined_call_operand.vmem [shape: bf16[64,128], index: 1, kind: input, shape index: {}]
  %s2 = inlined_call_operand.vmem [shape: f32[1,128], index: 2, kind: input, shape index: {}]
  %s3 = inlined_call_operand.vmem [shape: bf16[128,64], index: 3, kind: input, shape index: {}]
  %s4 = inlined_call_operand.vmem [shape: f32[1,64], index: 4, kind: input, shape index: {}]
  %s5 = inlined_call_operand.vmem [shape: f32[1,64], index: 5, kind: input, shape index: {}]
  %s6 = inlined_call_operand.vmem [shape: f32[1,64], index: 6, kind: input, shape index: {}]
  %s7 = inlined_call_operand.vmem [shape: f32[16,64], index: 7, kind: output, shape index: {}]
  %s8 = sld [smem:[#allocation0]]
  $region46: #{custom_tokenizer_forward.9} parent=0
    _
  %s10 = ssub.s32 1, %s8
  %s11 = scalar_select 0, %s10, %s8
  // Predicated region
  $region2: #{custom_tokenizer_forward.9} parent=0 // pred_check
    _
  $region3: #{custom_tokenizer_forward.9} parent=0 // pred_check_branch
    %13 = sbr.rel (0) target = $region5
  $region4: #{custom_tokenizer_forward.9} parent=0 // pred_region
    _
  $region5: #{custom_tokenizer_forward.9} parent=0 // pred_fallthru
    _
  // Predicated region
  $region6: #{custom_tokenizer_forward.9} parent=0 // pred_check
    _
  $region7: #{custom_tokenizer_forward.9} parent=0 // pred_check_branch
    %15 = sbr.rel (0) target = $region9
  $region8: #{custom_tokenizer_forward.9} parent=0 // pred_region
    _
  $region9: #{custom_tokenizer_forward.9} parent=0 // pred_fallthru
    _
  // Predicated region
  $region10: #{custom_tokenizer_forward.9} parent=0 // pred_check
    _
  $region11: #{custom_tokenizer_forward.9} parent=0 // pred_check_branch
    %17 = sbr.rel (0) target = $region13
  $region12: #{custom_tokenizer_forward.9} parent=0 // pred_region
    _
  $region13: #{custom_tokenizer_forward.9} parent=0 // pred_fallthru
    _
  // Predicated region
  $region14: #{custom_tokenizer_forward.9} parent=0 // pred_check
    _
  $region15: #{custom_tokenizer_forward.9} parent=0 // pred_check_branch
    %19 = sbr.rel (0) target = $region17
  $region16: #{custom_tokenizer_forward.9} parent=0 // pred_region
    _
  $region17: #{custom_tokenizer_forward.9} parent=0 // pred_fallthru
    _
  // Predicated region
  $region18: #{custom_tokenizer_forward.9} parent=0 // pred_check
    _
  $region19: #{custom_tokenizer_forward.9} parent=0 // pred_check_branch
    %21 = sbr.rel (0) target = $region21
  $region20: #{custom_tokenizer_forward.9} parent=0 // pred_region
    _
  $region21: #{custom_tokenizer_forward.9} parent=0 // pred_fallthru
    _
  // Predicated region
  $region22: #{custom_tokenizer_forward.9} parent=0 // pred_check
    _
  $region23: #{custom_tokenizer_forward.9} parent=0 // pred_check_branch
    %23 = sbr.rel (0) target = $region25
  $region24: #{custom_tokenizer_forward.9} parent=0 // pred_region
    _
  $region25: #{custom_tokenizer_forward.9} parent=0 // pred_fallthru
    _
  // Predicated region
  $region26: #{custom_tokenizer_forward.9} parent=0 // pred_check
    _
  $region27: #{custom_tokenizer_forward.9} parent=0 // pred_check_branch
    %25 = sbr.rel (0) target = $region29
  $region28: #{custom_tokenizer_forward.9} parent=0 // pred_region
    _
  $region29: #{custom_tokenizer_forward.9} parent=0 // pred_fallthru
    _
  %p27 = scmp.eq.s32.totalorder 0, 0
  // Predicated region
  $region30: #{custom_tokenizer_forward.9} parent=0 // pred_check
    %p28 = pneg %p27
  $region31: #{custom_tokenizer_forward.9} parent=0 // pred_check_branch
    %30 = sbr.rel (%p28) target = $region33
  $region32: #{custom_tokenizer_forward.9} parent=0 // pred_region
    %v31 = vld [vmem:[%s4] sm:$0x1]
    %v33 = vlaneseq
    %v34 = vshrl.u32 %v33, 7
    %v35 = vsub.s32 0, %v34
    %v36 = vrot.slane %v31, %v35
    %vm38 = vcmask 523264
    %39 = vst.msk [vmem:[#allocation2] sm:$0xff] %vm38, %v36
    %40 = vst.msk [vmem:[#allocation2 + $0x8] sm:$0xff] %vm38, %v36
  $region33: #{custom_tokenizer_forward.9} parent=0 // pred_fallthru
    _
  %v41 = vld [vmem:[%s0] sm:$0xff]
  %v42 = vld [vmem:[%s0 + $0x8] sm:$0xff]
  %v43 = vpack.c.bf16 %v42, %v41
  %v44 = vld [vmem:[%s1] sm:$0xf]
  %v45 = vld [vmem:[%s1 + $0x4] sm:$0xf]
  %v46 = vld [vmem:[%s1 + $0x8] sm:$0xf]
  %v47 = vld [vmem:[%s1 + $0xc] sm:$0xf]
  %v48 = vld [vmem:[%s1 + $0x10] sm:$0xf]
  %v49 = vld [vmem:[%s1 + $0x14] sm:$0xf]
  %v50 = vld [vmem:[%s1 + $0x18] sm:$0xf]
  %v51 = vld [vmem:[%s1 + $0x1c] sm:$0xf]
  %v52 = vld [vmem:[%s2] sm:$0x1]
  %v54 = vlaneseq
  %v55 = vshrl.u32 %v54, 7
  %v56 = vsub.s32 0, %v55
  %v57 = vrot.slane %v52, %v56
  %v67 = vunpack.c.l.b16 %v44
  %v68 = vunpack.c.l.b16 %v45
  %v69 = vunpack.c.l.b16 %v46
  %v70 = vunpack.c.l.b16 %v47
  %v71 = vunpack.c.l.b16 %v48
  %v72 = vunpack.c.l.b16 %v49
  %v73 = vunpack.c.l.b16 %v50
  %v74 = vunpack.c.l.b16 %v51
  %v75 = vpack.c.b16 %v68, %v67
  %v76 = vpack.c.b16 %v70, %v69
  %v77 = vpack.c.b16 %v72, %v71
  %v78 = vpack.c.b16 %v74, %v73
  %vm83 = vcmask 523264
  %v85 = vsel %vm83, %v43, 0
  %87 = vmatprep.subr.bf16.mxu0 0
  %88 = vmatpush1.bf16.msra.mxu0 %v75
  %89 = vmatprep.subr.bf16.mxu0 0
  %90 = vmatpush1.bf16.msra.mxu0 %v76
  %91 = vmatprep.subr.bf16.mxu0 0
  %92 = vmatpush1.bf16.msra.mxu0 %v77
  %93 = vmatprep.subr.bf16.mxu0 0
  %94 = vmatpush1.bf16.msra.mxu0 %v78
  %95 = vmatprep.subr.bf16.mxu0 0
  %96 = vmatpush1.bf16.msra.mxu0 0
  %97 = vmatprep.subr.bf16.mxu0 0
  %98 = vmatpush1.bf16.msra.mxu0 0
  %99 = vmatprep.subr.bf16.mxu0 0
  %100 = vmatpush1.bf16.msra.mxu0 0
  %101 = vmatprep.subr.bf16.mxu0 0
  %102 = vmatpush1.bf16.msra.mxu0 0
  %103 = vmatprep.subr.bf16.mxu0 0
  %104 = vmatpush1.bf16.msra.mxu0 0
  %105 = vmatprep.subr.bf16.mxu0 0
  %106 = vmatpush1.bf16.msra.mxu0 0
  %107 = vmatprep.subr.bf16.mxu0 0
  %108 = vmatpush1.bf16.msra.mxu0 0
  %109 = vmatprep.subr.bf16.mxu0 0
  %110 = vmatpush1.bf16.msra.mxu0 0
  %111 = vmatprep.subr.bf16.mxu0 0
  %112 = vmatpush1.bf16.msra.mxu0 0
  %113 = vmatprep.subr.bf16.mxu0 0
  %114 = vmatpush1.bf16.msra.mxu0 0
  %115 = vmatprep.subr.bf16.mxu0 0
  %116 = vmatpush1.bf16.msra.mxu0 0
  %117 = vmatprep.subr.bf16.mxu0 0
  %118 = vmatpush1.bf16.msra.mxu0 0
  %119 = vmatprep.mubr.bf16.mxu0 0
  %120 = vmatmul.mubr.bf16.gmra.mrb[0].mxu0 %v85
  %v121 = vpop.f32.mrb[0].mxu0
  %v122 = vadd.f32 %v57, %v121
  %v123 = vpop.f32.mrb[0].mxu0
  %v124 = vpop.f32.mrb[0].mxu0
  %v125 = vadd.f32 %v57, %v124
  %v126 = vpop.f32.mrb[0].mxu0
  %127 = vdwg.mxu0
  %v128 = vmax.f32 %v122, 0.0
  %v129 = vmax.f32 %v125, 0.0
  %v130 = vpack.c.bf16 %v129, %v128
  %v131 = vld [vmem:[#allocation2] sm:$0xff]
  %v132 = vld [vmem:[#allocation2 + $0x8] sm:$0xff]
  %v133 = vld [vmem:[%s3] sm:$0xf]
  %v134 = vld [vmem:[%s3 + $0x4] sm:$0xf]
  %v135 = vld [vmem:[%s3 + $0x8] sm:$0xf]
  %v136 = vld [vmem:[%s3 + $0xc] sm:$0xf]
  %v137 = vld [vmem:[%s3 + $0x10] sm:$0xf]
  %v138 = vld [vmem:[%s3 + $0x14] sm:$0xf]
  %v139 = vld [vmem:[%s3 + $0x18] sm:$0xf]
  %v140 = vld [vmem:[%s3 + $0x1c] sm:$0xf]
  %v141 = vld [vmem:[%s3 + $0x20] sm:$0xf]
  %v142 = vld [vmem:[%s3 + $0x24] sm:$0xf]
  %v143 = vld [vmem:[%s3 + $0x28] sm:$0xf]
  %v144 = vld [vmem:[%s3 + $0x2c] sm:$0xf]
  %v145 = vld [vmem:[%s3 + $0x30] sm:$0xf]
  %v146 = vld [vmem:[%s3 + $0x34] sm:$0xf]
  %v147 = vld [vmem:[%s3 + $0x38] sm:$0xf]
  %v148 = vld [vmem:[%s3 + $0x3c] sm:$0xf]
  %v165 = vunpack.c.l.b16 %v133
  %v166 = vunpack.c.l.b16 %v134
  %v167 = vunpack.c.l.b16 %v135
  %v168 = vunpack.c.l.b16 %v136
  %v169 = vunpack.c.l.b16 %v137
  %v170 = vunpack.c.l.b16 %v138
  %v171 = vunpack.c.l.b16 %v139
  %v172 = vunpack.c.l.b16 %v140
  %v173 = vunpack.c.l.b16 %v141
  %v174 = vunpack.c.l.b16 %v142
  %v175 = vunpack.c.l.b16 %v143
  %v176 = vunpack.c.l.b16 %v144
  %v177 = vunpack.c.l.b16 %v145
  %v178 = vunpack.c.l.b16 %v146
  %v179 = vunpack.c.l.b16 %v147
  %v180 = vunpack.c.l.b16 %v148
  %v181 = vpack.c.b16 %v166, %v165
  %v182 = vpack.c.b16 %v168, %v167
  %v183 = vpack.c.b16 %v170, %v169
  %v184 = vpack.c.b16 %v172, %v171
  %v185 = vpack.c.b16 %v174, %v173
  %v186 = vpack.c.b16 %v176, %v175
  %v187 = vpack.c.b16 %v178, %v177
  %v188 = vpack.c.b16 %v180, %v179
  %197 = vmatprep.subr.bf16.mxu0 0
  %198 = vmatpush1.bf16.msra.mxu0 %v181
  %199 = vmatprep.subr.bf16.mxu0 0
  %200 = vmatpush1.bf16.msra.mxu0 %v182
  %201 = vmatprep.subr.bf16.mxu0 0
  %202 = vmatpush1.bf16.msra.mxu0 %v183
  %203 = vmatprep.subr.bf16.mxu0 0
  %204 = vmatpush1.bf16.msra.mxu0 %v184
  %205 = vmatprep.subr.bf16.mxu0 0
  %206 = vmatpush1.bf16.msra.mxu0 %v185
  %207 = vmatprep.subr.bf16.mxu0 0
  %208 = vmatpush1.bf16.msra.mxu0 %v186
  %209 = vmatprep.subr.bf16.mxu0 0
  %210 = vmatpush1.bf16.msra.mxu0 %v187
  %211 = vmatprep.subr.bf16.mxu0 0
  %212 = vmatpush1.bf16.msra.mxu0 %v188
  %213 = vmatprep.subr.bf16.mxu0 0
  %214 = vmatpush1.bf16.msra.mxu0 0
  %215 = vmatprep.subr.bf16.mxu0 0
  %216 = vmatpush1.bf16.msra.mxu0 0
  %217 = vmatprep.subr.bf16.mxu0 0
  %218 = vmatpush1.bf16.msra.mxu0 0
  %219 = vmatprep.subr.bf16.mxu0 0
  %220 = vmatpush1.bf16.msra.mxu0 0
  %221 = vmatprep.subr.bf16.mxu0 0
  %222 = vmatpush1.bf16.msra.mxu0 0
  %223 = vmatprep.subr.bf16.mxu0 0
  %224 = vmatpush1.bf16.msra.mxu0 0
  %225 = vmatprep.subr.bf16.mxu0 0
  %226 = vmatpush1.bf16.msra.mxu0 0
  %227 = vmatprep.subr.bf16.mxu0 0
  %228 = vmatpush1.bf16.msra.mxu0 0
  %229 = vmatprep.mubr.bf16.mxu0 0
  %230 = vmatmul.mubr.bf16.gmra.mrb[0].mxu0 %v130
  %v231 = vpop.f32.mrb[0].mxu0
  %v232 = vadd.f32 0.0, %v231
  %v233 = vpop.f32.mrb[0].mxu0
  %v234 = vpop.f32.mrb[0].mxu0
  %v235 = vadd.f32 0.0, %v234
  %v236 = vpop.f32.mrb[0].mxu0
  %237 = vdwg.mxu0
  %v238 = vadd.f32 %v131, %v232
  %v239 = vadd.f32 %v132, %v235
  %240 = vst.msk [vmem:[#allocation2] sm:$0xff] %vm83, %v238
  %241 = vst.msk [vmem:[#allocation2 + $0x8] sm:$0xff] %vm83, %v239
  // Predicated region
  $region34: #{custom_tokenizer_forward.9} parent=0 // pred_check
    %p242 = pneg %p27
  $region35: #{custom_tokenizer_forward.9} parent=0 // pred_check_branch
    %244 = sbr.rel (%p242) target = $region37
  $region36: #{custom_tokenizer_forward.9} parent=0 // pred_region
    %v245 = vld [vmem:[#allocation2] sm:$0xff]
    %v246 = vld [vmem:[#allocation2 + $0x8] sm:$0xff]
    %v247 = vld [vmem:[%s0] sm:$0xff]
    %v248 = vld [vmem:[%s0 + $0x8] sm:$0xff]
    %v249 = vadd.f32 %v245, %v247
    %v250 = vadd.f32 %v246, %v248
    %v251 = vsel %vm83, %v249, 0.0
    %252 = vadd.xlane.f32.xlu0 %v251
    %v253 = vpop.xlane.xlu0 %252
    %v254 = vsel %vm83, %v250, 0.0
    %255 = vadd.xlane.f32.xlu0 %v254
    %v256 = vpop.xlane.xlu0 %255
    %v257 = vrcp.pop 64.0
    %v258 = vmul.f32 %v253, %v257
    %v259 = vmul.f32 %v256, %v257
    %v260 = vmul.f32 %v249, %v249
    %v261 = vmul.f32 %v250, %v250
    %v262 = vsel %vm83, %v260, 0.0
    %263 = vadd.xlane.f32.xlu0 %v262
    %v264 = vpop.xlane.xlu0 %263
    %v265 = vsel %vm83, %v261, 0.0
    %266 = vadd.xlane.f32.xlu0 %v265
    %v267 = vpop.xlane.xlu0 %266
    %v268 = vmul.f32 %v264, %v257
    %v269 = vmul.f32 %v267, %v257
    %v270 = vmul.f32 %v258, %v258
    %v271 = vmul.f32 %v259, %v259
    %v272 = vsub.f32 %v268, %v270
    %v273 = vsub.f32 %v269, %v271
    %v274 = vsub.f32 %v249, %v258
    %v275 = vsub.f32 %v250, %v259
    %v276 = vadd.f32 %v272, 1e-05
    %v277 = vadd.f32 %v273, 1e-05
    %v278 = vrsqrt.pop %v276
    %v279 = vrsqrt.pop %v277
    %v280 = vmul.f32 %v274, %v278
    %v281 = vmul.f32 %v275, %v279
    %v282 = vld [vmem:[%s5] sm:$0x1]
    %v284 = vlaneseq
    %v285 = vshrl.u32 %v284, 7
    %v286 = vsub.s32 0, %v285
    %v287 = vrot.slane %v282, %v286
    %v289 = vmul.f32 %v280, %v287
    %v290 = vmul.f32 %v281, %v287
    %v291 = vld [vmem:[%s6] sm:$0x1]
    %v293 = vlaneseq
    %v294 = vshrl.u32 %v293, 7
    %v295 = vsub.s32 0, %v294
    %v296 = vrot.slane %v291, %v295
    %v298 = vadd.f32 %v289, %v296
    %v299 = vadd.f32 %v290, %v296
    %300 = vst.msk [vmem:[%s7] sm:$0xff] %vm83, %v298
    %301 = vst.msk [vmem:[%s7 + $0x8] sm:$0xff] %vm83, %v299
  $region37: #{custom_tokenizer_forward.9} parent=0 // pred_fallthru
    _
  // Predicated region
  $region38: #{custom_tokenizer_forward.9} parent=0 // pred_check
    _
  $region39: #{custom_tokenizer_forward.9} parent=0 // pred_check_branch
    %303 = sbr.rel (0) target = $region41
  $region40: #{custom_tokenizer_forward.9} parent=0 // pred_region
    _
  $region41: #{custom_tokenizer_forward.9} parent=0 // pred_fallthru
    _
  // Predicated region
  $region42: #{custom_tokenizer_forward.9} parent=0 // pred_check
    _
  $region43: #{custom_tokenizer_forward.9} parent=0 // pred_check_branch
    %305 = sbr.rel (0) target = $region45
  $region44: #{custom_tokenizer_forward.9} parent=0 // pred_region
    _
  $region45: #{custom_tokenizer_forward.9} parent=0 // pred_fallthru
    _

// kernel: custom_tokenizer_forward.10
$region0: #{custom_tokenizer_forward.10}
  #allocation0 [shape = 'u32[]', space=smem, size = 0x4, offset = 0x4, fixed_abs, tag = 'smem constant byte address 0x4 - core index']
  #allocation1 [shape = 'u32[144,128]{1,0:T(1,128)}', space=vmem, size = 0x12000, scoped, tag = 'internal scratch']
  #allocation2 [shape = 'f32[16,512]{1,0:T(8,128)}', space=vmem, size = 0x8000, scoped, tag = 'scratch operand']
  %s0 = inlined_call_operand.vmem [shape: f32[16,64], index: 0, kind: input, shape index: {}]
  %s1 = inlined_call_operand.vmem [shape: bf16[64,3072], index: 1, kind: input, shape index: {}]
  %s2 = inlined_call_operand.vmem [shape: f32[1,3072], index: 2, kind: input, shape index: {}]
  %s3 = inlined_call_operand.vmem [shape: bf16[16,3072], index: 3, kind: output, shape index: {}]
  %s4 = sld [smem:[#allocation0]]
  $region95: #{custom_tokenizer_forward.10} parent=0
    _
  %s6 = ssub.s32 1, %s4
  %s7 = scalar_select 0, %s6, %s4
  $region1: #{custom_tokenizer_forward.10} parent=0
    #allocation3 [shape = 'u8[131072]{0}', space=vmem, size = 0x20000, scoped, tag = 'input window, operand 1']
    #allocation4 [shape = 'u8[32768]{0}', space=vmem, size = 0x8000, scoped, tag = 'output window, operand 0']
    loop: start=0, step=1, limit=8
    $region2: #{custom_tokenizer_forward.10} parent=1 // loop_pre_header
      _
    $region3: #{custom_tokenizer_forward.10} parent=1 // loop_header
      %s9 = sphi 0, %s13
      %p10 = scmp.ge.s32.totalorder %s9, 8
      %s16 = sphi 0, %s35
      %s17 = sphi 0, %s31
      %s18 = sphi 0, %s27
      %s19 = sphi 0, %s16
      %s20 = sphi 0, %s17
      %s21 = sphi 0, %s18
      %s22 = sphi 0, %s19
      %s23 = sphi 0, %s20
      %s24 = sphi 0, %s21
      %s40 = sphi 0, %s42
      %s43 = sphi 0, %s40
      %s44 = sphi 0, %s43
      %s60 = sphi 0, %s44
      %s68 = sphi 0, %s70
      %s71 = sphi 0, %s68
      %s72 = sphi 0, %s71
      %s88 = sphi 0, %s72
      %s94 = sphi 0, %s96
      %s97 = sphi 0, %s94
      %s98 = sphi 0, %s97
      %s114 = sphi 0, %s98
      %s122 = sphi 0, %s124
      %s125 = sphi 0, %s122
      %s126 = sphi 0, %s125
      %s142 = sphi 0, %s126
    $region4: #{custom_tokenizer_forward.10} parent=1 // loop_header_branch
      %12 = sbr.rel (%p10) target = $region8
    $region5: #{custom_tokenizer_forward.10} parent=1 // loop_body
      %s14 = ssub.s32 %s9, 1
      %s15 = ssub.s32 %s9, 2
      %s25 = sadd.s32 1, %s18
      %p26 = scmp.ge.s32.totalorder %s25, 1
      %s27 = scalar_select %p26, 0, %s25
      %s28 = sadd.s32 1, %s17
      %s29 = scalar_select %p26, %s28, %s17
      %p30 = scmp.ge.s32.totalorder %s29, 6
      %s31 = scalar_select %p30, 0, %s29
      %s32 = sadd.s32 1, %s16
      %s33 = scalar_select %p30, %s32, %s16
      %p34 = scmp.ge.s32.totalorder %s33, 1
      %s35 = scalar_select %p34, 0, %s33
      %s36 = ssub.s32 %s16, %s35
      %s37 = ssub.s32 %s18, %s27
      %s38 = sor.u32 %s36, %s37
      %p39 = scmp.eq.s32.totalorder %s38, 0
      %s41 = sadd.s32 %s40, 1
      %s42 = scalar_select %p39, %s40, %s41
      %p45 = pneg %p39
      %p46 = scmp.eq.s32.totalorder %s9, 5
      %p47 = por %p45, %p46
      %p48 = scmp.ne.s32.totalorder %s40, %s43
      %p49 = scmp.eq.s32.totalorder %s9, 0
      %p50 = por %p48, %p49
      %p51 = scmp.ne.s32.totalorder %s40, %s43
      %p52 = scmp.eq.s32.totalorder %s14, 5
      %p53 = por %p51, %p52
      %p54 = scmp.ne.s32.totalorder %s43, %s44
      %p55 = scmp.eq.s32.totalorder %s14, 0
      %p56 = por %p54, %p55
      %p57 = scmp.ne.s32.totalorder %s43, %s44
      %p58 = scmp.eq.s32.totalorder %s15, 5
      %p59 = por %p57, %p58
      %p61 = scmp.ne.s32.totalorder %s44, %s60
      %p62 = scmp.eq.s32.totalorder %s15, 0
      %p63 = por %p61, %p62
      %s64 = ssub.s32 %s18, %s27
      %s65 = ssub.s32 %s17, %s31
      %s66 = sor.u32 %s64, %s65
      %p67 = scmp.eq.s32.totalorder %s66, 0
      %s69 = sadd.s32 %s68, 1
      %s70 = scalar_select %p67, %s68, %s69
      %p73 = pneg %p67
      %p74 = scmp.eq.s32.totalorder %s9, 5
      %p75 = por %p73, %p74
      %p76 = scmp.ne.s32.totalorder %s68, %s71
      %p77 = scmp.eq.s32.totalorder %s9, 0
      %p78 = por %p76, %p77
      %p79 = scmp.ne.s32.totalorder %s68, %s71
      %p80 = scmp.eq.s32.totalorder %s14, 5
      %p81 = por %p79, %p80
      %p82 = scmp.ne.s32.totalorder %s71, %s72
      %p83 = scmp.eq.s32.totalorder %s14, 0
      %p84 = por %p82, %p83
      %p85 = scmp.ne.s32.totalorder %s71, %s72
      %p86 = scmp.eq.s32.totalorder %s15, 5
      %p87 = por %p85, %p86
      %p89 = scmp.ne.s32.totalorder %s72, %s88
      %p90 = scmp.eq.s32.totalorder %s15, 0
      %p91 = por %p89, %p90
      %s92 = ssub.s32 %s17, %s31
      %p93 = scmp.eq.s32.totalorder %s92, 0
      %s95 = sadd.s32 %s94, 1
      %s96 = scalar_select %p93, %s94, %s95
      %p99 = pneg %p93
      %p100 = scmp.eq.s32.totalorder %s9, 5
      %p101 = por %p99, %p100
      %p102 = scmp.ne.s32.totalorder %s94, %s97
      %p103 = scmp.eq.s32.totalorder %s9, 0
      %p104 = por %p102, %p103
      %p105 = scmp.ne.s32.totalorder %s94, %s97
      %p106 = scmp.eq.s32.totalorder %s14, 5
      %p107 = por %p105, %p106
      %p108 = scmp.ne.s32.totalorder %s97, %s98
      %p109 = scmp.eq.s32.totalorder %s14, 0
      %p110 = por %p108, %p109
      %p111 = scmp.ne.s32.totalorder %s97, %s98
      %p112 = scmp.eq.s32.totalorder %s15, 5
      %p113 = por %p111, %p112
      %p115 = scmp.ne.s32.totalorder %s98, %s114
      %p116 = scmp.eq.s32.totalorder %s15, 0
      %p117 = por %p115, %p116
      %s118 = ssub.s32 %s16, %s35
      %s119 = ssub.s32 %s17, %s31
      %s120 = sor.u32 %s118, %s119
      %p121 = scmp.eq.s32.totalorder %s120, 0
      %s123 = sadd.s32 %s122, 1
      %s124 = scalar_select %p121, %s122, %s123
      %p127 = pneg %p121
      %p128 = scmp.eq.s32.totalorder %s9, 5
      %p129 = por %p127, %p128
      %p130 = scmp.ne.s32.totalorder %s122, %s125
      %p131 = scmp.eq.s32.totalorder %s9, 0
      %p132 = por %p130, %p131
      %p133 = scmp.ne.s32.totalorder %s122, %s125
      %p134 = scmp.eq.s32.totalorder %s14, 5
      %p135 = por %p133, %p134
      %p136 = scmp.ne.s32.totalorder %s125, %s126
      %p137 = scmp.eq.s32.totalorder %s14, 0
      %p138 = por %p136, %p137
      %p139 = scmp.ne.s32.totalorder %s125, %s126
      %p140 = scmp.eq.s32.totalorder %s15, 5
      %p141 = por %p139, %p140
      %p143 = scmp.ne.s32.totalorder %s126, %s142
      %p144 = scmp.eq.s32.totalorder %s15, 0
      %p145 = por %p143, %p144
      %p146 = scmp.le.s32.totalorder 1, %s9
      %p147 = scmp.lt.s32.totalorder %s9, 7
      %p148 = pnand %p146, %p147
      %p149 = pneg %p148
      // Predicated region
      $region9: #{custom_tokenizer_forward.10} parent=5 // pred_check
        _
      $region10: #{custom_tokenizer_forward.10} parent=5 // pred_check_branch
        %151 = sbr.rel (%p148) target = $region12
      $region11: #{custom_tokenizer_forward.10} parent=5 // pred_region
        %s152 = ssub.s32 %s9, 1
        // Predicated region
        $region13: #{custom_tokenizer_forward.10} parent=11 // pred_check
          %p153 = pneg %p56
        $region14: #{custom_tokenizer_forward.10} parent=11 // pred_check_branch
          %155 = sbr.rel (%p153) target = $region16
        $region15: #{custom_tokenizer_forward.10} parent=11 // pred_region
          %s156 = smul.u32 2, %s19
          %p157 = scmp.lt.s32.totalorder %s156, 1
          %s158 = scalar_select %p157, %s156, 1
          %p159 = scmp.lt.s32.totalorder %s21, 0
          %s160 = scalar_select %p159, %s21, 0
          %s161 = sadd.s32 %s160, %s158
          %s162 = smul.addr %s161, 8
          %s163 = scalar_lea.vmem %s0, %s162
          %s164 = smul.u32 2, %s19
        $region16: #{custom_tokenizer_forward.10} parent=11 // pred_fallthru
          _
      $region12: #{custom_tokenizer_forward.10} parent=5 // pred_fallthru
        _
      %p165 = scmp.lt.s32.totalorder %s9, 6
      // Predicated region
      $region17: #{custom_tokenizer_forward.10} parent=5 // pred_check
        %p166 = pneg %p165
      $region18: #{custom_tokenizer_forward.10} parent=5 // pred_check_branch
        %168 = sbr.rel (%p166) target = $region20
      $region19: #{custom_tokenizer_forward.10} parent=5 // pred_region
        // Predicated region
        $region21: #{custom_tokenizer_forward.10} parent=19 // pred_check
          %p169 = pneg %p78
        $region22: #{custom_tokenizer_forward.10} parent=19 // pred_check_branch
          %171 = sbr.rel (%p169) target = $region24
        $region23: #{custom_tokenizer_forward.10} parent=19 // pred_region
          %s172 = sand.u32 %s68, 1
          %s173 = sand.u32 %s68, 1
          %s174 = smul.addr %s173, 128
          %s175 = scalar_lea.vmem [#allocation3], %s174
          %s176 = smul.u32 8, %s18
          %s177 = smul.u32 4, %s17
          %s178 = smul.addr %s176, 24
          %s179 = sadd.s32 %s177, %s178
          %s180 = smul.addr %s179, 4
          %s181 = scalar_lea.vmem %s1, %s180
          // Predicated region
          $region25: #{custom_tokenizer_forward.10} parent=23 // pred_check
            _
          $region26: #{custom_tokenizer_forward.10} parent=23 // pred_check_branch
            %183 = sbr.rel (0) target = $region28
          $region27: #{custom_tokenizer_forward.10} parent=23 // pred_region
            // Predicated region
            $region29: #{custom_tokenizer_forward.10} parent=27 // pred_check
              _
            $region30: #{custom_tokenizer_forward.10} parent=27 // pred_check_branch
              %185 = sbr.rel (0) target = $region32
            $region31: #{custom_tokenizer_forward.10} parent=27 // pred_region
              loop: start=0, step=1, limit=1
              $region33: #{custom_tokenizer_forward.10} parent=31 // loop_pre_header
                _
              $region34: #{custom_tokenizer_forward.10} parent=31 // loop_header
                %s187 = sphi 0, %s191
                %p188 = scmp.ge.s32.totalorder %s187, 1
                %s192 = sphi %s181, %s181
                %s193 = sphi %s175, %s175
              $region35: #{custom_tokenizer_forward.10} parent=31 // loop_header_branch
                %190 = sbr.rel (%p188) target = $region39
              $region36: #{custom_tokenizer_forward.10} parent=31 // loop_body
                %v194 = vld [vmem:[%s192] sm:$0xff]
                %195 = vst [vmem:[%s193] sm:$0xff] %v194
                %v196 = vld [vmem:[%s192 + $0x8] sm:$0xff]
                %197 = vst [vmem:[%s193 + $0x8] sm:$0xff] %v196
                %v198 = vld [vmem:[%s192 + $0x60] sm:$0xff]
                %199 = vst [vmem:[%s193 + $0x10] sm:$0xff] %v198
                %v200 = vld [vmem:[%s192 + $0x68] sm:$0xff]
                %201 = vst [vmem:[%s193 + $0x18] sm:$0xff] %v200
                %v202 = vld [vmem:[%s192 + $0xc0] sm:$0xff]
                %203 = vst [vmem:[%s193 + $0x20] sm:$0xff] %v202
                %v204 = vld [vmem:[%s192 + $0xc8] sm:$0xff]
                %205 = vst [vmem:[%s193 + $0x28] sm:$0xff] %v204
                %v206 = vld [vmem:[%s192 + $0x120] sm:$0xff]
                %207 = vst [vmem:[%s193 + $0x30] sm:$0xff] %v206
                %v208 = vld [vmem:[%s192 + $0x128] sm:$0xff]
                %209 = vst [vmem:[%s193 + $0x38] sm:$0xff] %v208
                %v210 = vld [vmem:[%s192 + $0x180] sm:$0xff]
                %211 = vst [vmem:[%s193 + $0x40] sm:$0xff] %v210
                %v212 = vld [vmem:[%s192 + $0x188] sm:$0xff]
                %213 = vst [vmem:[%s193 + $0x48] sm:$0xff] %v212
                %v214 = vld [vmem:[%s192 + $0x1e0] sm:$0xff]
                %215 = vst [vmem:[%s193 + $0x50] sm:$0xff] %v214
                %v216 = vld [vmem:[%s192 + $0x1e8] sm:$0xff]
                %217 = vst [vmem:[%s193 + $0x58] sm:$0xff] %v216
                %v218 = vld [vmem:[%s192 + $0x240] sm:$0xff]
                %219 = vst [vmem:[%s193 + $0x60] sm:$0xff] %v218
                %v220 = vld [vmem:[%s192 + $0x248] sm:$0xff]
                %221 = vst [vmem:[%s193 + $0x68] sm:$0xff] %v220
                %v222 = vld [vmem:[%s192 + $0x2a0] sm:$0xff]
                %223 = vst [vmem:[%s193 + $0x70] sm:$0xff] %v222
                %v224 = vld [vmem:[%s192 + $0x2a8] sm:$0xff]
                %225 = vst [vmem:[%s193 + $0x78] sm:$0xff] %v224
              $region37: #{custom_tokenizer_forward.10} parent=31 // loop_footer
                %s191 = sadd.s32 1, %s187
              $region38: #{custom_tokenizer_forward.10} parent=31 // loop_footer_branch
                %186 = sbr.rel target = $region34
              $region39: #{custom_tokenizer_forward.10} parent=31 // loop_exit
                _
            $region32: #{custom_tokenizer_forward.10} parent=27 // pred_fallthru
              _
            // Predicated region
            $region40: #{custom_tokenizer_forward.10} parent=27 // pred_check
              _
            $region41: #{custom_tokenizer_forward.10} parent=27 // pred_check_branch
              %227 = sbr.rel target = $region43
            $region42: #{custom_tokenizer_forward.10} parent=27 // pred_region
              _
            $region43: #{custom_tokenizer_forward.10} parent=27 // pred_fallthru
              _
          $region28: #{custom_tokenizer_forward.10} parent=23 // pred_fallthru
            _
          %228 = vnop
        $region24: #{custom_tokenizer_forward.10} parent=19 // pred_fallthru
          _
        // Predicated region
        $region44: #{custom_tokenizer_forward.10} parent=19 // pred_check
          %p229 = pneg %p104
        $region45: #{custom_tokenizer_forward.10} parent=19 // pred_check_branch
          %231 = sbr.rel (%p229) target = $region47
        $region46: #{custom_tokenizer_forward.10} parent=19 // pred_region
          %s232 = smul.u32 4, %s17
          %p233 = scmp.lt.s32.totalorder %s232, 23
          %s234 = scalar_select %p233, %s232, 23
          %s235 = scalar_lea.vmem %s2, %s234
          %s236 = smul.u32 4, %s17
        $region47: #{custom_tokenizer_forward.10} parent=19 // pred_fallthru
          _
      $region20: #{custom_tokenizer_forward.10} parent=5 // pred_fallthru
        _
      %p237 = scmp.le.s32.totalorder 1, %s9
      %p238 = scmp.lt.s32.totalorder %s9, 7
      %p239 = pnand %p237, %p238
      %p240 = pneg %p239
      // Predicated region
      $region48: #{custom_tokenizer_forward.10} parent=5 // pred_check
        _
      $region49: #{custom_tokenizer_forward.10} parent=5 // pred_check_branch
        %242 = sbr.rel (%p239) target = $region51
      $region50: #{custom_tokenizer_forward.10} parent=5 // pred_region
        %s243 = ssub.s32 %s9, 1
        %s244 = sand.u32 %s71, 1
        %s245 = sand.u32 %s71, 1
        %s246 = smul.addr %s245, 128
        %s247 = scalar_lea.vmem [#allocation3], %s246
        // Predicated region
        $region52: #{custom_tokenizer_forward.10} parent=50 // pred_check
          %p248 = pneg %p84
        $region53: #{custom_tokenizer_forward.10} parent=50 // pred_check_branch
          %250 = sbr.rel (%p248) target = $region55
        $region54: #{custom_tokenizer_forward.10} parent=50 // pred_region
          _
        $region55: #{custom_tokenizer_forward.10} parent=50 // pred_fallthru
          _
        %s251 = smul.u32 2, %s19
        %p252 = scmp.lt.s32.totalorder %s251, 1
        %s253 = scalar_select %p252, %s251, 1
        %p254 = scmp.lt.s32.totalorder %s21, 0
        %s255 = scalar_select %p254, %s21, 0
        %s256 = sadd.s32 %s255, %s253
        %s257 = smul.addr %s256, 8
        %s258 = scalar_lea.vmem %s0, %s257
        %p259 = pneg %p56
        %p260 = pneg %p53
        %s261 = sand.u32 %s71, 1
        %s262 = sand.u32 %s71, 1
        %s263 = smul.addr %s262, 128
        %s264 = scalar_lea.vmem [#allocation3], %s263
        %p265 = pneg %p84
        %p266 = pneg %p81
        %s267 = smul.u32 4, %s20
        %p268 = scmp.lt.s32.totalorder %s267, 23
        %s269 = scalar_select %p268, %s267, 23
        %s270 = scalar_lea.vmem %s2, %s269
        %p271 = pneg %p110
        %p272 = pneg %p107
        %p273 = pneg %p138
        %p274 = pneg %p135
        %s275 = sand.u32 %s125, 1
        %s276 = sand.u32 %s125, 1
        %s277 = smul.addr %s276, 32
        %s278 = scalar_lea.vmem [#allocation4], %s277
        %s279 = smul.u32 2, %s19
        %p280 = scmp.lt.s32.totalorder %s279, 1
        %s281 = scalar_select %p280, %s279, 1
        %p282 = scmp.lt.s32.totalorder %s21, 0
        %s283 = scalar_select %p282, %s21, 0
        %s284 = sadd.s32 %s283, %s281
        %s285 = smul.addr %s284, 8
        %s286 = scalar_lea.vmem %s0, %s285
        %s287 = smul.u32 2, %s19
        %s288 = smul.u32 8, %s21
        %s289 = smul.u32 4, %s20
        %s290 = smul.u32 4, %s20
        %p291 = scmp.lt.s32.totalorder %s290, 23
        %s292 = scalar_select %p291, %s290, 23
        %s293 = scalar_lea.vmem %s2, %s292
        %s294 = smul.u32 4, %s20
        %s295 = smul.u32 2, %s19
        %s296 = smul.u32 4, %s20
        %p298 = scmp.eq.s32.totalorder %s21, 0
        // Predicated region
        $region56: #{custom_tokenizer_forward.10} parent=50 // pred_check
          %p299 = pneg %p298
        $region57: #{custom_tokenizer_forward.10} parent=50 // pred_check_branch
          %301 = sbr.rel (%p299) target = $region59
        $region58: #{custom_tokenizer_forward.10} parent=50 // pred_region
          %v302 = vld [vmem:[%s293] sm:$0xf]
          %v304 = vlaneseq
          %v305 = vshrl.u32 %v304, 7
          %v306 = vsub.s32 0, %v305
          %v307 = vrot.slane %v302, %v306
          %v308 = vlaneseq
          %v309 = vshrl.u32 %v308, 7
          %v310 = vsub.s32 1, %v309
          %v311 = vrot.slane %v302, %v310
          %v312 = vlaneseq
          %v313 = vshrl.u32 %v312, 7
          %v314 = vsub.s32 2, %v313
          %v315 = vrot.slane %v302, %v314
          %v316 = vlaneseq
          %v317 = vshrl.u32 %v316, 7
          %v318 = vsub.s32 3, %v317
          %v319 = vrot.slane %v302, %v318
          %324 = vst [vmem:[#allocation2] sm:$0xff] %v307
          %325 = vst [vmem:[#allocation2 + $0x8] sm:$0xff] %v311
          %326 = vst [vmem:[#allocation2 + $0x10] sm:$0xff] %v315
          %327 = vst [vmem:[#allocation2 + $0x18] sm:$0xff] %v319
          %328 = vst [vmem:[#allocation2 + $0x20] sm:$0xff] %v307
          %329 = vst [vmem:[#allocation2 + $0x28] sm:$0xff] %v311
          %330 = vst [vmem:[#allocation2 + $0x30] sm:$0xff] %v315
          %331 = vst [vmem:[#allocation2 + $0x38] sm:$0xff] %v319
        $region59: #{custom_tokenizer_forward.10} parent=50 // pred_fallthru
          _
        %v332 = vld [vmem:[#allocation2] sm:$0xff]
        %v333 = vld [vmem:[#allocation2 + $0x8] sm:$0xff]
        %v334 = vld [vmem:[#allocation2 + $0x10] sm:$0xff]
        %v335 = vld [vmem:[#allocation2 + $0x18] sm:$0xff]
        %v336 = vld [vmem:[#allocation2 + $0x20] sm:$0xff]
        %v337 = vld [vmem:[#allocation2 + $0x28] sm:$0xff]
        %v338 = vld [vmem:[#allocation2 + $0x30] sm:$0xff]
        %v339 = vld [vmem:[#allocation2 + $0x38] sm:$0xff]
        %v340 = vld [vmem:[%s286] sm:$0xff]
        %v341 = vld [vmem:[%s286 + $0x8] sm:$0xff]
        %v342 = vpack.c.bf16 %v341, %v340
        %v343 = vld [vmem:[%s247] sm:$0xff]
        %v344 = vld [vmem:[%s247 + $0x8] sm:$0xff]
        %v345 = vld [vmem:[%s247 + $0x10] sm:$0xff]
        %v346 = vld [vmem:[%s247 + $0x18] sm:$0xff]
        %v347 = vld [vmem:[%s247 + $0x20] sm:$0xff]
        %v348 = vld [vmem:[%s247 + $0x28] sm:$0xff]
        %v349 = vld [vmem:[%s247 + $0x30] sm:$0xff]
        %v350 = vld [vmem:[%s247 + $0x38] sm:$0xff]
        %v351 = vld [vmem:[%s247 + $0x40] sm:$0xff]
        %v352 = vld [vmem:[%s247 + $0x48] sm:$0xff]
        %v353 = vld [vmem:[%s247 + $0x50] sm:$0xff]
        %v354 = vld [vmem:[%s247 + $0x58] sm:$0xff]
        %v355 = vld [vmem:[%s247 + $0x60] sm:$0xff]
        %v356 = vld [vmem:[%s247 + $0x68] sm:$0xff]
        %v357 = vld [vmem:[%s247 + $0x70] sm:$0xff]
        %v358 = vld [vmem:[%s247 + $0x78] sm:$0xff]
        %v375 = vunpack.c.l.b16 %v343
        %v376 = vunpack.c.h.b16 %v343
        %v377 = vunpack.c.l.b16 %v344
        %v378 = vunpack.c.h.b16 %v344
        %v379 = vunpack.c.l.b16 %v345
        %v380 = vunpack.c.h.b16 %v345
        %v381 = vunpack.c.l.b16 %v346
        %v382 = vunpack.c.h.b16 %v346
        %v383 = vunpack.c.l.b16 %v347
        %v384 = vunpack.c.h.b16 %v347
        %v385 = vunpack.c.l.b16 %v348
        %v386 = vunpack.c.h.b16 %v348
        %v387 = vunpack.c.l.b16 %v349
        %v388 = vunpack.c.h.b16 %v349
        %v389 = vunpack.c.l.b16 %v350
        %v390 = vunpack.c.h.b16 %v350
        %v391 = vunpack.c.l.b16 %v351
        %v392 = vunpack.c.h.b16 %v351
        %v393 = vunpack.c.l.b16 %v352
        %v394 = vunpack.c.h.b16 %v352
        %v395 = vunpack.c.l.b16 %v353
        %v396 = vunpack.c.h.b16 %v353
        %v397 = vunpack.c.l.b16 %v354
        %v398 = vunpack.c.h.b16 %v354
        %v399 = vunpack.c.l.b16 %v355
        %v400 = vunpack.c.h.b16 %v355
        %v401 = vunpack.c.l.b16 %v356
        %v402 = vunpack.c.h.b16 %v356
        %v403 = vunpack.c.l.b16 %v357
        %v404 = vunpack.c.h.b16 %v357
        %v405 = vunpack.c.l.b16 %v358
        %v406 = vunpack.c.h.b16 %v358
        %v407 = vpack.c.b16 %v379, %v375
        %v408 = vpack.c.b16 %v380, %v376
        %v409 = vpack.c.b16 %v381, %v377
        %v410 = vpack.c.b16 %v382, %v378
        %v411 = vpack.c.b16 %v387, %v383
        %v412 = vpack.c.b16 %v388, %v384
        %v413 = vpack.c.b16 %v389, %v385
        %v414 = vpack.c.b16 %v390, %v386
        %v415 = vpack.c.b16 %v395, %v391
        %v416 = vpack.c.b16 %v396, %v392
        %v417 = vpack.c.b16 %v397, %v393
        %v418 = vpack.c.b16 %v398, %v394
        %v419 = vpack.c.b16 %v403, %v399
        %v420 = vpack.c.b16 %v404, %v400
        %v421 = vpack.c.b16 %v405, %v401
        %v422 = vpack.c.b16 %v406, %v402
        %vm439 = vcmask 523264
        %v441 = vsel %vm439, %v342, 0
        %443 = vmatprep.subr.bf16.mxu0 %v408
        %444 = vmatpush1.bf16.msra.mxu0 %v407
        %445 = vmatprep.subr.bf16.mxu0 %v412
        %446 = vmatpush1.bf16.msra.mxu0 %v411
        %447 = vmatprep.subr.bf16.mxu0 %v416
        %448 = vmatpush1.bf16.msra.mxu0 %v415
        %449 = vmatprep.subr.bf16.mxu0 %v420
        %450 = vmatpush1.bf16.msra.mxu0 %v419
        %451 = vmatprep.subr.bf16.mxu0 0
        %452 = vmatpush1.bf16.msra.mxu0 0
        %453 = vmatprep.subr.bf16.mxu0 0
        %454 = vmatpush1.bf16.msra.mxu0 0
        %455 = vmatprep.subr.bf16.mxu0 0
        %456 = vmatpush1.bf16.msra.mxu0 0
        %457 = vmatprep.subr.bf16.mxu0 0
        %458 = vmatpush1.bf16.msra.mxu0 0
        %459 = vmatprep.subr.bf16.mxu0 0
        %460 = vmatpush1.bf16.msra.mxu0 0
        %461 = vmatprep.subr.bf16.mxu0 0
        %462 = vmatpush1.bf16.msra.mxu0 0
        %463 = vmatprep.subr.bf16.mxu0 0
        %464 = vmatpush1.bf16.msra.mxu0 0
        %465 = vmatprep.subr.bf16.mxu0 0
        %466 = vmatpush1.bf16.msra.mxu0 0
        %467 = vmatprep.subr.bf16.mxu0 0
        %468 = vmatpush1.bf16.msra.mxu0 0
        %469 = vmatprep.subr.bf16.mxu0 0
        %470 = vmatpush1.bf16.msra.mxu0 0
        %471 = vmatprep.subr.bf16.mxu0 0
        %472 = vmatpush1.bf16.msra.mxu0 0
        %473 = vmatprep.subr.bf16.mxu0 0
        %474 = vmatpush1.bf16.msra.mxu0 0
        %475 = vmatprep.mubr.bf16.mxu0 0
        %476 = vmatmul.mubr.bf16.gmra.mrb[0].mxu0 %v441
        %v477 = vpop.f32.mrb[0].mxu0
        %v478 = vadd.f32 0.0, %v477
        %v479 = vpop.f32.mrb[0].mxu0
        %v480 = vadd.f32 0.0, %v479
        %v481 = vpop.f32.mrb[0].mxu0
        %v482 = vadd.f32 0.0, %v481
        %v483 = vpop.f32.mrb[0].mxu0
        %v484 = vadd.f32 0.0, %v483
        %485 = vdwg.mxu0
        %486 = vmatprep.subr.bf16.mxu0 %v410
        %487 = vmatpush1.bf16.msra.mxu0 %v409
        %488 = vmatprep.subr.bf16.mxu0 %v414
        %489 = vmatpush1.bf16.msra.mxu0 %v413
        %490 = vmatprep.subr.bf16.mxu0 %v418
        %491 = vmatpush1.bf16.msra.mxu0 %v417
        %492 = vmatprep.subr.bf16.mxu0 %v422
        %493 = vmatpush1.bf16.msra.mxu0 %v421
        %494 = vmatprep.subr.bf16.mxu0 0
        %495 = vmatpush1.bf16.msra.mxu0 0
        %496 = vmatprep.subr.bf16.mxu0 0
        %497 = vmatpush1.bf16.msra.mxu0 0
        %498 = vmatprep.subr.bf16.mxu0 0
        %499 = vmatpush1.bf16.msra.mxu0 0
        %500 = vmatprep.subr.bf16.mxu0 0
        %501 = vmatpush1.bf16.msra.mxu0 0
        %502 = vmatprep.subr.bf16.mxu0 0
        %503 = vmatpush1.bf16.msra.mxu0 0
        %504 = vmatprep.subr.bf16.mxu0 0
        %505 = vmatpush1.bf16.msra.mxu0 0
        %506 = vmatprep.subr.bf16.mxu0 0
        %507 = vmatpush1.bf16.msra.mxu0 0
        %508 = vmatprep.subr.bf16.mxu0 0
        %509 = vmatpush1.bf16.msra.mxu0 0
        %510 = vmatprep.subr.bf16.mxu0 0
        %511 = vmatpush1.bf16.msra.mxu0 0
        %512 = vmatprep.subr.bf16.mxu0 0
        %513 = vmatpush1.bf16.msra.mxu0 0
        %514 = vmatprep.subr.bf16.mxu0 0
        %515 = vmatpush1.bf16.msra.mxu0 0
        %516 = vmatprep.subr.bf16.mxu0 0
        %517 = vmatpush1.bf16.msra.mxu0 0
        %518 = vmatprep.mubr.bf16.mxu0 0
        %519 = vmatmul.mubr.bf16.gmra.mrb[0].mxu0 %v441
        %v520 = vpop.f32.mrb[0].mxu0
        %v521 = vadd.f32 0.0, %v520
        %v522 = vpop.f32.mrb[0].mxu0
        %v523 = vadd.f32 0.0, %v522
        %v524 = vpop.f32.mrb[0].mxu0
        %v525 = vadd.f32 0.0, %v524
        %v526 = vpop.f32.mrb[0].mxu0
        %v527 = vadd.f32 0.0, %v526
        %528 = vdwg.mxu0
        %v529 = vadd.f32 %v332, %v478
        %v530 = vadd.f32 %v333, %v480
        %v531 = vadd.f32 %v334, %v521
        %v532 = vadd.f32 %v335, %v523
        %v533 = vadd.f32 %v336, %v482
        %v534 = vadd.f32 %v337, %v484
        %v535 = vadd.f32 %v338, %v525
        %v536 = vadd.f32 %v339, %v527
        %537 = vst [vmem:[#allocation2] sm:$0xff] %v529
        %538 = vst [vmem:[#allocation2 + $0x8] sm:$0xff] %v530
        %539 = vst [vmem:[#allocation2 + $0x10] sm:$0xff] %v531
        %540 = vst [vmem:[#allocation2 + $0x18] sm:$0xff] %v532
        %541 = vst [vmem:[#allocation2 + $0x20] sm:$0xff] %v533
        %542 = vst [vmem:[#allocation2 + $0x28] sm:$0xff] %v534
        %543 = vst [vmem:[#allocation2 + $0x30] sm:$0xff] %v535
        %544 = vst [vmem:[#allocation2 + $0x38] sm:$0xff] %v536
        // Predicated region
        $region60: #{custom_tokenizer_forward.10} parent=50 // pred_check
          %p545 = pneg %p298
        $region61: #{custom_tokenizer_forward.10} parent=50 // pred_check_branch
          %547 = sbr.rel (%p545) target = $region63
        $region62: #{custom_tokenizer_forward.10} parent=50 // pred_region
          %v548 = vld [vmem:[#allocation2] sm:$0xff]
          %v549 = vld [vmem:[#allocation2 + $0x8] sm:$0xff]
          %v550 = vld [vmem:[#allocation2 + $0x10] sm:$0xff]
          %v551 = vld [vmem:[#allocation2 + $0x18] sm:$0xff]
          %v552 = vld [vmem:[#allocation2 + $0x20] sm:$0xff]
          %v553 = vld [vmem:[#allocation2 + $0x28] sm:$0xff]
          %v554 = vld [vmem:[#allocation2 + $0x30] sm:$0xff]
          %v555 = vld [vmem:[#allocation2 + $0x38] sm:$0xff]
          %v556 = vpack.c.bf16 %v552, %v548
          %v557 = vpack.c.bf16 %v553, %v549
          %v558 = vpack.c.bf16 %v554, %v550
          %v559 = vpack.c.bf16 %v555, %v551
          %v564 = vunpack.c.l.b16 %v556
          %v565 = vunpack.c.l.b16 %v557
          %v566 = vunpack.c.l.b16 %v558
          %v567 = vunpack.c.l.b16 %v559
          %v568 = vunpack.c.h.b16 %v556
          %v569 = vunpack.c.h.b16 %v557
          %v570 = vunpack.c.h.b16 %v558
          %v571 = vunpack.c.h.b16 %v559
          %v572 = vpack.c.b16 %v565, %v564
          %v573 = vpack.c.b16 %v567, %v566
          %v574 = vpack.c.b16 %v569, %v568
          %v575 = vpack.c.b16 %v571, %v570
          %580 = vst [vmem:[%s278] sm:$0xff] %v572
          %581 = vst [vmem:[%s278 + $0x8] sm:$0xff] %v573
          %582 = vst [vmem:[%s278 + $0x10] sm:$0xff] %v574
          %583 = vst [vmem:[%s278 + $0x18] sm:$0xff] %v575
        $region63: #{custom_tokenizer_forward.10} parent=50 // pred_fallthru
          _
        %s584 = sand.u32 %s125, 1
        %s585 = sand.u32 %s125, 1
        %s586 = smul.addr %s585, 32
        %s587 = scalar_lea.vmem [#allocation4], %s586
        // Predicated region
        $region64: #{custom_tokenizer_forward.10} parent=50 // pred_check
          %p588 = pneg %p135
        $region65: #{custom_tokenizer_forward.10} parent=50 // pred_check_branch
          %590 = sbr.rel (%p588) target = $region67
        $region66: #{custom_tokenizer_forward.10} parent=50 // pred_region
          %s591 = smul.u32 2, %s19
          %s592 = smul.u32 4, %s20
          %s593 = smul.addr %s591, 24
          %s594 = sadd.s32 %s592, %s593
          %s595 = smul.addr %s594, 4
          %s596 = scalar_lea.vmem %s3, %s595
          // Predicated region
          $region68: #{custom_tokenizer_forward.10} parent=66 // pred_check
            _
          $region69: #{custom_tokenizer_forward.10} parent=66 // pred_check_branch
            %598 = sbr.rel (0) target = $region71
          $region70: #{custom_tokenizer_forward.10} parent=66 // pred_region
            // Predicated region
            $region72: #{custom_tokenizer_forward.10} parent=70 // pred_check
              _
            $region73: #{custom_tokenizer_forward.10} parent=70 // pred_check_branch
              %600 = sbr.rel (0) target = $region75
            $region74: #{custom_tokenizer_forward.10} parent=70 // pred_region
              loop: start=0, step=1, limit=1
              $region76: #{custom_tokenizer_forward.10} parent=74 // loop_pre_header
                _
              $region77: #{custom_tokenizer_forward.10} parent=74 // loop_header
                %s602 = sphi 0, %s606
                %p603 = scmp.ge.s32.totalorder %s602, 1
                %s607 = sphi %s587, %s587
                %s608 = sphi %s596, %s596
              $region78: #{custom_tokenizer_forward.10} parent=74 // loop_header_branch
                %605 = sbr.rel (%p603) target = $region82
              $region79: #{custom_tokenizer_forward.10} parent=74 // loop_body
                %v609 = vld [vmem:[%s607] sm:$0xff]
                %610 = vst [vmem:[%s608] sm:$0xff] %v609
                %v611 = vld [vmem:[%s607 + $0x8] sm:$0xff]
                %612 = vst [vmem:[%s608 + $0x8] sm:$0xff] %v611
                %v613 = vld [vmem:[%s607 + $0x10] sm:$0xff]
                %614 = vst [vmem:[%s608 + $0x60] sm:$0xff] %v613
                %v615 = vld [vmem:[%s607 + $0x18] sm:$0xff]
                %616 = vst [vmem:[%s608 + $0x68] sm:$0xff] %v615
              $region80: #{custom_tokenizer_forward.10} parent=74 // loop_footer
                %s606 = sadd.s32 1, %s602
              $region81: #{custom_tokenizer_forward.10} parent=74 // loop_footer_branch
                %601 = sbr.rel target = $region77
              $region82: #{custom_tokenizer_forward.10} parent=74 // loop_exit
                _
            $region75: #{custom_tokenizer_forward.10} parent=70 // pred_fallthru
              _
            // Predicated region
            $region83: #{custom_tokenizer_forward.10} parent=70 // pred_check
              _
            $region84: #{custom_tokenizer_forward.10} parent=70 // pred_check_branch
              %618 = sbr.rel target = $region86
            $region85: #{custom_tokenizer_forward.10} parent=70 // pred_region
              _
            $region86: #{custom_tokenizer_forward.10} parent=70 // pred_fallthru
              _
          $region71: #{custom_tokenizer_forward.10} parent=66 // pred_fallthru
            _
          %619 = vnop
        $region67: #{custom_tokenizer_forward.10} parent=50 // pred_fallthru
          _
      $region51: #{custom_tokenizer_forward.10} parent=5 // pred_fallthru
        _
      %p620 = scmp.le.s32.totalorder 2, %s9
      // Predicated region
      $region87: #{custom_tokenizer_forward.10} parent=5 // pred_check
        %p621 = pneg %p620
      $region88: #{custom_tokenizer_forward.10} parent=5 // pred_check_branch
        %623 = sbr.rel (%p621) target = $region90
      $region89: #{custom_tokenizer_forward.10} parent=5 // pred_region
        %s624 = ssub.s32 %s9, 2
        // Predicated region
        $region91: #{custom_tokenizer_forward.10} parent=89 // pred_check
          %p625 = pneg %p141
        $region92: #{custom_tokenizer_forward.10} parent=89 // pred_check_branch
          %627 = sbr.rel (%p625) target = $region94
        $region93: #{custom_tokenizer_forward.10} parent=89 // pred_region
          %s628 = sand.u32 %s126, 1
          %s629 = sand.u32 %s126, 1
          %s630 = smul.addr %s629, 32
          %s631 = scalar_lea.vmem [#allocation4], %s630
        $region94: #{custom_tokenizer_forward.10} parent=89 // pred_fallthru
          _
      $region90: #{custom_tokenizer_forward.10} parent=5 // pred_fallthru
        _
    $region6: #{custom_tokenizer_forward.10} parent=1 // loop_footer
      %s13 = sadd.s32 1, %s9
    $region7: #{custom_tokenizer_forward.10} parent=1 // loop_footer_branch
      %8 = sbr.rel target = $region3
    $region8: #{custom_tokenizer_forward.10} parent=1 // loop_exit
      _

// kernel: custom_tokenizer_forward.13
$region0: #{custom_tokenizer_forward.13}
  #allocation0 [shape = 'u32[]', space=smem, size = 0x4, offset = 0x4, fixed_abs, tag = 'smem constant byte address 0x4 - core index']
  #allocation1 [shape = 'u32[144,128]{1,0:T(1,128)}', space=vmem, size = 0x12000, scoped, tag = 'internal scratch']
  #allocation2 [shape = 'f32[8,256]{1,0:T(8,128)}', space=vmem, size = 0x2000, scoped, tag = 'scratch operand']
  %s0 = inlined_call_operand.vmem [shape: f32[16,64], index: 0, kind: input, shape index: {}]
  %s1 = inlined_call_operand.vmem [shape: bf16[64,256], index: 1, kind: input, shape index: {}]
  %s2 = inlined_call_operand.vmem [shape: f32[1,256], index: 2, kind: input, shape index: {}]
  %s3 = inlined_call_operand.vmem [shape: f32[8,512], index: 3, kind: output, shape index: {}]
  %s4 = sld [smem:[#allocation0]]
  $region53: #{custom_tokenizer_forward.13} parent=0
    _
  %s6 = ssub.s32 1, %s4
  %s7 = scalar_select 0, %s6, %s4
  loop: start=0, step=1, limit=4
  $region2: #{custom_tokenizer_forward.13} parent=0 // loop_pre_header
    _
  $region3: #{custom_tokenizer_forward.13} parent=0 // loop_header
    %s9 = sphi 0, %s13
    %p10 = scmp.ge.s32.totalorder %s9, 4
    %s16 = sphi 0, %s42
    %s17 = sphi 0, %s38
    %s18 = sphi 0, %s34
    %s19 = sphi 0, %s30
    %s20 = sphi 0, %s16
    %s21 = sphi 0, %s17
    %s22 = sphi 0, %s18
    %s23 = sphi 0, %s19
    %s24 = sphi 0, %s20
    %s25 = sphi 0, %s21
    %s26 = sphi 0, %s22
    %s27 = sphi 0, %s23
    %s49 = sphi 0, %s51
    %s52 = sphi 0, %s49
    %s53 = sphi 0, %s52
    %s69 = sphi 0, %s53
    %s77 = sphi 0, %s79
    %s80 = sphi 0, %s77
    %s81 = sphi 0, %s80
    %s97 = sphi 0, %s81
    %s103 = sphi 0, %s105
    %s106 = sphi 0, %s103
    %s107 = sphi 0, %s106
    %s123 = sphi 0, %s107
    %s133 = sphi 0, %s135
    %s136 = sphi 0, %s133
    %s137 = sphi 0, %s136
    %s153 = sphi 0, %s137
  $region4: #{custom_tokenizer_forward.13} parent=0 // loop_header_branch
    %12 = sbr.rel (%p10) target = $region8
  $region5: #{custom_tokenizer_forward.13} parent=0 // loop_body
    %s14 = ssub.s32 %s9, 1
    %s15 = ssub.s32 %s9, 2
    %s28 = sadd.s32 1, %s19
    %p29 = scmp.ge.s32.totalorder %s28, 1
    %s30 = scalar_select %p29, 0, %s28
    %s31 = sadd.s32 1, %s18
    %s32 = scalar_select %p29, %s31, %s18
    %p33 = scmp.ge.s32.totalorder %s32, 1
    %s34 = scalar_select %p33, 0, %s32
    %s35 = sadd.s32 1, %s17
    %s36 = scalar_select %p33, %s35, %s17
    %p37 = scmp.ge.s32.totalorder %s36, 1
    %s38 = scalar_select %p37, 0, %s36
    %s39 = sadd.s32 1, %s16
    %s40 = scalar_select %p37, %s39, %s16
    %p41 = scmp.ge.s32.totalorder %s40, 2
    %s42 = scalar_select %p41, 0, %s40
    %s43 = sadd.s32 %s16, %s17
    %s44 = sadd.s32 %s42, %s38
    %s45 = ssub.s32 %s43, %s44
    %s46 = ssub.s32 %s19, %s30
    %s47 = sor.u32 %s45, %s46
    %p48 = scmp.eq.s32.totalorder %s47, 0
    %s50 = sadd.s32 %s49, 1
    %s51 = scalar_select %p48, %s49, %s50
    %p54 = pneg %p48
    %p55 = scmp.eq.s32.totalorder %s9, 1
    %p56 = por %p54, %p55
    %p57 = scmp.ne.s32.totalorder %s49, %s52
    %p58 = scmp.eq.s32.totalorder %s9, 0
    %p59 = por %p57, %p58
    %p60 = scmp.ne.s32.totalorder %s49, %s52
    %p61 = scmp.eq.s32.totalorder %s14, 1
    %p62 = por %p60, %p61
    %p63 = scmp.ne.s32.totalorder %s52, %s53
    %p64 = scmp.eq.s32.totalorder %s14, 0
    %p65 = por %p63, %p64
    %p66 = scmp.ne.s32.totalorder %s52, %s53
    %p67 = scmp.eq.s32.totalorder %s15, 1
    %p68 = por %p66, %p67
    %p70 = scmp.ne.s32.totalorder %s53, %s69
    %p71 = scmp.eq.s32.totalorder %s15, 0
    %p72 = por %p70, %p71
    %s73 = ssub.s32 %s19, %s30
    %s74 = ssub.s32 %s18, %s34
    %s75 = sor.u32 %s73, %s74
    %p76 = scmp.eq.s32.totalorder %s75, 0
    %s78 = sadd.s32 %s77, 1
    %s79 = scalar_select %p76, %s77, %s78
    %p82 = pneg %p76
    %p83 = scmp.eq.s32.totalorder %s9, 1
    %p84 = por %p82, %p83
    %p85 = scmp.ne.s32.totalorder %s77, %s80
    %p86 = scmp.eq.s32.totalorder %s9, 0
    %p87 = por %p85, %p86
    %p88 = scmp.ne.s32.totalorder %s77, %s80
    %p89 = scmp.eq.s32.totalorder %s14, 1
    %p90 = por %p88, %p89
    %p91 = scmp.ne.s32.totalorder %s80, %s81
    %p92 = scmp.eq.s32.totalorder %s14, 0
    %p93 = por %p91, %p92
    %p94 = scmp.ne.s32.totalorder %s80, %s81
    %p95 = scmp.eq.s32.totalorder %s15, 1
    %p96 = por %p94, %p95
    %p98 = scmp.ne.s32.totalorder %s81, %s97
    %p99 = scmp.eq.s32.totalorder %s15, 0
    %p100 = por %p98, %p99
    %s101 = ssub.s32 %s18, %s34
    %p102 = scmp.eq.s32.totalorder %s101, 0
    %s104 = sadd.s32 %s103, 1
    %s105 = scalar_select %p102, %s103, %s104
    %p108 = pneg %p102
    %p109 = scmp.eq.s32.totalorder %s9, 1
    %p110 = por %p108, %p109
    %p111 = scmp.ne.s32.totalorder %s103, %s106
    %p112 = scmp.eq.s32.totalorder %s9, 0
    %p113 = por %p111, %p112
    %p114 = scmp.ne.s32.totalorder %s103, %s106
    %p115 = scmp.eq.s32.totalorder %s14, 1
    %p116 = por %p114, %p115
    %p117 = scmp.ne.s32.totalorder %s106, %s107
    %p118 = scmp.eq.s32.totalorder %s14, 0
    %p119 = por %p117, %p118
    %p120 = scmp.ne.s32.totalorder %s106, %s107
    %p121 = scmp.eq.s32.totalorder %s15, 1
    %p122 = por %p120, %p121
    %p124 = scmp.ne.s32.totalorder %s107, %s123
    %p125 = scmp.eq.s32.totalorder %s15, 0
    %p126 = por %p124, %p125
    %s127 = sadd.s32 %s16, %s18
    %s128 = sadd.s32 %s42, %s34
    %s129 = ssub.s32 %s17, %s38
    %s130 = ssub.s32 %s127, %s128
    %s131 = sor.u32 %s129, %s130
    %p132 = scmp.eq.s32.totalorder %s131, 0
    %s134 = sadd.s32 %s133, 1
    %s135 = scalar_select %p132, %s133, %s134
    %p138 = pneg %p132
    %p139 = scmp.eq.s32.totalorder %s9, 1
    %p140 = por %p138, %p139
    %p141 = scmp.ne.s32.totalorder %s133, %s136
    %p142 = scmp.eq.s32.totalorder %s9, 0
    %p143 = por %p141, %p142
    %p144 = scmp.ne.s32.totalorder %s133, %s136
    %p145 = scmp.eq.s32.totalorder %s14, 1
    %p146 = por %p144, %p145
    %p147 = scmp.ne.s32.totalorder %s136, %s137
    %p148 = scmp.eq.s32.totalorder %s14, 0
    %p149 = por %p147, %p148
    %p150 = scmp.ne.s32.totalorder %s136, %s137
    %p151 = scmp.eq.s32.totalorder %s15, 1
    %p152 = por %p150, %p151
    %p154 = scmp.ne.s32.totalorder %s137, %s153
    %p155 = scmp.eq.s32.totalorder %s15, 0
    %p156 = por %p154, %p155
    %p157 = scmp.le.s32.totalorder 1, %s9
    %p158 = scmp.lt.s32.totalorder %s9, 3
    %p159 = pnand %p157, %p158
    %p160 = pneg %p159
    // Predicated region
    $region9: #{custom_tokenizer_forward.13} parent=5 // pred_check
      _
    $region10: #{custom_tokenizer_forward.13} parent=5 // pred_check_branch
      %162 = sbr.rel (%p159) target = $region12
    $region11: #{custom_tokenizer_forward.13} parent=5 // pred_region
      %s163 = ssub.s32 %s9, 1
      // Predicated region
      $region13: #{custom_tokenizer_forward.13} parent=11 // pred_check
        %p164 = pneg %p93
      $region14: #{custom_tokenizer_forward.13} parent=11 // pred_check_branch
        %166 = sbr.rel (%p164) target = $region16
      $region15: #{custom_tokenizer_forward.13} parent=11 // pred_region
        %s167 = smul.u32 8, %s23
        %s168 = smul.u32 2, %s22
        %p169 = scmp.lt.s32.totalorder %s167, 7
        %s170 = scalar_select %p169, %s167, 7
        %p171 = scmp.lt.s32.totalorder %s168, 1
        %s172 = scalar_select %p171, %s168, 1
        %s173 = smul.addr %s170, 2
        %s174 = sadd.s32 %s172, %s173
        %s175 = smul.addr %s174, 4
        %s176 = scalar_lea.vmem %s1, %s175
        %s177 = smul.u32 8, %s23
        %s178 = smul.u32 2, %s22
      $region16: #{custom_tokenizer_forward.13} parent=11 // pred_fallthru
        _
      // Predicated region
      $region17: #{custom_tokenizer_forward.13} parent=11 // pred_check
        %p179 = pneg %p119
      $region18: #{custom_tokenizer_forward.13} parent=11 // pred_check_branch
        %181 = sbr.rel (%p179) target = $region20
      $region19: #{custom_tokenizer_forward.13} parent=11 // pred_region
        %s182 = smul.u32 2, %s22
        %p183 = scmp.lt.s32.totalorder %s182, 1
        %s184 = scalar_select %p183, %s182, 1
        %s185 = scalar_lea.vmem %s2, %s184
        %s186 = smul.u32 2, %s22
      $region20: #{custom_tokenizer_forward.13} parent=11 // pred_fallthru
        _
    $region12: #{custom_tokenizer_forward.13} parent=5 // pred_fallthru
      _
    %p187 = scmp.lt.s32.totalorder %s9, 2
    // Predicated region
    $region21: #{custom_tokenizer_forward.13} parent=5 // pred_check
      %p188 = pneg %p187
    $region22: #{custom_tokenizer_forward.13} parent=5 // pred_check_branch
      %190 = sbr.rel (%p188) target = $region24
    $region23: #{custom_tokenizer_forward.13} parent=5 // pred_region
      // Predicated region
      $region25: #{custom_tokenizer_forward.13} parent=23 // pred_check
        %p191 = pneg %p59
      $region26: #{custom_tokenizer_forward.13} parent=23 // pred_check_branch
        %193 = sbr.rel (%p191) target = $region28
      $region27: #{custom_tokenizer_forward.13} parent=23 // pred_region
        %s194 = sadd.s32 %s16, %s17
        %p195 = scmp.lt.s32.totalorder %s194, 1
        %s196 = scalar_select %p195, %s194, 1
        %p197 = scmp.lt.s32.totalorder %s19, 0
        %s198 = scalar_select %p197, %s19, 0
        %s199 = sadd.s32 %s198, %s196
        %s200 = smul.addr %s199, 8
        %s201 = scalar_lea.vmem %s0, %s200
        %s202 = sadd.s32 %s16, %s17
      $region28: #{custom_tokenizer_forward.13} parent=23 // pred_fallthru
        _
    $region24: #{custom_tokenizer_forward.13} parent=5 // pred_fallthru
      _
    %p203 = scmp.le.s32.totalorder 1, %s9
    %p204 = scmp.lt.s32.totalorder %s9, 3
    %p205 = pnand %p203, %p204
    %p206 = pneg %p205
    // Predicated region
    $region29: #{custom_tokenizer_forward.13} parent=5 // pred_check
      _
    $region30: #{custom_tokenizer_forward.13} parent=5 // pred_check_branch
      %208 = sbr.rel (%p205) target = $region32
    $region31: #{custom_tokenizer_forward.13} parent=5 // pred_region
      %s209 = ssub.s32 %s9, 1
      %s210 = sadd.s32 %s20, %s21
      %p211 = scmp.lt.s32.totalorder %s210, 1
      %s212 = scalar_select %p211, %s210, 1
      %p213 = scmp.lt.s32.totalorder %s23, 0
      %s214 = scalar_select %p213, %s23, 0
      %s215 = sadd.s32 %s214, %s212
      %s216 = smul.addr %s215, 8
      %s217 = scalar_lea.vmem %s0, %s216
      %p218 = pneg %p65
      %p219 = pneg %p62
      %s220 = smul.u32 8, %s23
      %s221 = smul.u32 2, %s22
      %p222 = scmp.lt.s32.totalorder %s220, 7
      %s223 = scalar_select %p222, %s220, 7
      %p224 = scmp.lt.s32.totalorder %s221, 1
      %s225 = scalar_select %p224, %s221, 1
      %s226 = smul.addr %s223, 2
      %s227 = sadd.s32 %s225, %s226
      %s228 = smul.addr %s227, 4
      %s229 = scalar_lea.vmem %s1, %s228
      %p230 = pneg %p93
      %p231 = pneg %p90
      %s232 = smul.u32 2, %s22
      %p233 = scmp.lt.s32.totalorder %s232, 1
      %s234 = scalar_select %p233, %s232, 1
      %s235 = scalar_lea.vmem %s2, %s234
      %p236 = pneg %p119
      %p237 = pneg %p116
      %p238 = pneg %p149
      %p239 = pneg %p146
      %s240 = sadd.s32 %s20, %s22
      %s241 = smul.u32 2, %s240
      %p242 = scmp.lt.s32.totalorder %s21, 0
      %s243 = scalar_select %p242, %s21, 0
      %p244 = scmp.lt.s32.totalorder %s241, 3
      %s245 = scalar_select %p244, %s241, 3
      %s246 = smul.addr %s243, 4
      %s247 = sadd.s32 %s245, %s246
      %s248 = smul.addr %s247, 8
      %s249 = scalar_lea.vmem %s3, %s248
      %s250 = sadd.s32 %s20, %s21
      %p251 = scmp.lt.s32.totalorder %s250, 1
      %s252 = scalar_select %p251, %s250, 1
      %p253 = scmp.lt.s32.totalorder %s23, 0
      %s254 = scalar_select %p253, %s23, 0
      %s255 = sadd.s32 %s254, %s252
      %s256 = smul.addr %s255, 8
      %s257 = scalar_lea.vmem %s0, %s256
      %s258 = sadd.s32 %s20, %s21
      %s259 = smul.u32 8, %s23
      %s260 = smul.u32 2, %s22
      %p261 = scmp.lt.s32.totalorder %s259, 7
      %s262 = scalar_select %p261, %s259, 7
      %p263 = scmp.lt.s32.totalorder %s260, 1
      %s264 = scalar_select %p263, %s260, 1
      %s265 = smul.addr %s262, 2
      %s266 = sadd.s32 %s264, %s265
      %s267 = smul.addr %s266, 4
      %s268 = scalar_lea.vmem %s1, %s267
      %s269 = smul.u32 8, %s23
      %s270 = smul.u32 2, %s22
      %s271 = smul.u32 2, %s22
      %p272 = scmp.lt.s32.totalorder %s271, 1
      %s273 = scalar_select %p272, %s271, 1
      %s274 = scalar_lea.vmem %s2, %s273
      %s275 = smul.u32 2, %s22
      %s276 = sadd.s32 %s20, %s22
      %s277 = smul.u32 2, %s276
      %p278 = scmp.lt.s32.totalorder %s21, 0
      %s279 = scalar_select %p278, %s21, 0
      %p280 = scmp.lt.s32.totalorder %s277, 3
      %s281 = scalar_select %p280, %s277, 3
      %s282 = smul.addr %s279, 4
      %s283 = sadd.s32 %s281, %s282
      %s284 = smul.addr %s283, 8
      %s285 = scalar_lea.vmem %s3, %s284
      %s286 = sadd.s32 %s20, %s22
      %s287 = smul.u32 2, %s286
      %p289 = scmp.eq.s32.totalorder %s23, 0
      // Predicated region
      $region33: #{custom_tokenizer_forward.13} parent=31 // pred_check
        %p290 = pneg %p289
      $region34: #{custom_tokenizer_forward.13} parent=31 // pred_check_branch
        %292 = sbr.rel (%p290) target = $region36
      $region35: #{custom_tokenizer_forward.13} parent=31 // pred_region
        %v293 = vld [vmem:[%s274] sm:$0x3]
        %v295 = vlaneseq
        %v296 = vshrl.u32 %v295, 7
        %v297 = vsub.s32 0, %v296
        %v298 = vrot.slane %v293, %v297
        %v299 = vlaneseq
        %v300 = vshrl.u32 %v299, 7
        %v301 = vsub.s32 1, %v300
        %v302 = vrot.slane %v293, %v301
        %305 = vst [vmem:[#allocation2] sm:$0xff] %v298
        %306 = vst [vmem:[#allocation2 + $0x8] sm:$0xff] %v302
      $region36: #{custom_tokenizer_forward.13} parent=31 // pred_fallthru
        _
      %v307 = vld [vmem:[#allocation2] sm:$0xff]
      %v308 = vld [vmem:[#allocation2 + $0x8] sm:$0xff]
      %v309 = vld [vmem:[%s257] sm:$0xff]
      %v310 = vpack.c.bf16 %v309, %v309
      %v311 = vld [vmem:[%s268] sm:$0xff]
      %v312 = vld [vmem:[%s268 + $0x8] sm:$0xff]
      %v313 = vld [vmem:[%s268 + $0x10] sm:$0xff]
      %v314 = vld [vmem:[%s268 + $0x18] sm:$0xff]
      %v315 = vld [vmem:[%s268 + $0x20] sm:$0xff]
      %v316 = vld [vmem:[%s268 + $0x28] sm:$0xff]
      %v317 = vld [vmem:[%s268 + $0x30] sm:$0xff]
      %v318 = vld [vmem:[%s268 + $0x38] sm:$0xff]
      %v327 = vunpack.c.l.b16 %v311
      %v328 = vunpack.c.h.b16 %v311
      %v329 = vunpack.c.l.b16 %v312
      %v330 = vunpack.c.h.b16 %v312
      %v331 = vunpack.c.l.b16 %v313
      %v332 = vunpack.c.h.b16 %v313
      %v333 = vunpack.c.l.b16 %v314
      %v334 = vunpack.c.h.b16 %v314
      %v335 = vunpack.c.l.b16 %v315
      %v336 = vunpack.c.h.b16 %v315
      %v337 = vunpack.c.l.b16 %v316
      %v338 = vunpack.c.h.b16 %v316
      %v339 = vunpack.c.l.b16 %v317
      %v340 = vunpack.c.h.b16 %v317
      %v341 = vunpack.c.l.b16 %v318
      %v342 = vunpack.c.h.b16 %v318
      %v343 = vpack.c.b16 %v329, %v327
      %v344 = vpack.c.b16 %v330, %v328
      %v345 = vpack.c.b16 %v333, %v331
      %v346 = vpack.c.b16 %v334, %v332
      %v347 = vpack.c.b16 %v337, %v335
      %v348 = vpack.c.b16 %v338, %v336
      %v349 = vpack.c.b16 %v341, %v339
      %v350 = vpack.c.b16 %v342, %v340
      %vm359 = vcmask 523264
      %v361 = vsel %vm359, %v310, 0
      %363 = vmatprep.subr.bf16.mxu0 %v344
      %364 = vmatpush1.bf16.msra.mxu0 %v343
      %365 = vmatprep.subr.bf16.mxu0 %v346
      %366 = vmatpush1.bf16.msra.mxu0 %v345
      %367 = vmatprep.subr.bf16.mxu0 %v348
      %368 = vmatpush1.bf16.msra.mxu0 %v347
      %369 = vmatprep.subr.bf16.mxu0 %v350
      %370 = vmatpush1.bf16.msra.mxu0 %v349
      %371 = vmatprep.subr.bf16.mxu0 0
      %372 = vmatpush1.bf16.msra.mxu0 0
      %373 = vmatprep.subr.bf16.mxu0 0
      %374 = vmatpush1.bf16.msra.mxu0 0
      %375 = vmatprep.subr.bf16.mxu0 0
      %376 = vmatpush1.bf16.msra.mxu0 0
      %377 = vmatprep.subr.bf16.mxu0 0
      %378 = vmatpush1.bf16.msra.mxu0 0
      %379 = vmatprep.subr.bf16.mxu0 0
      %380 = vmatpush1.bf16.msra.mxu0 0
      %381 = vmatprep.subr.bf16.mxu0 0
      %382 = vmatpush1.bf16.msra.mxu0 0
      %383 = vmatprep.subr.bf16.mxu0 0
      %384 = vmatpush1.bf16.msra.mxu0 0
      %385 = vmatprep.subr.bf16.mxu0 0
      %386 = vmatpush1.bf16.msra.mxu0 0
      %387 = vmatprep.subr.bf16.mxu0 0
      %388 = vmatpush1.bf16.msra.mxu0 0
      %389 = vmatprep.subr.bf16.mxu0 0
      %390 = vmatpush1.bf16.msra.mxu0 0
      %391 = vmatprep.subr.bf16.mxu0 0
      %392 = vmatpush1.bf16.msra.mxu0 0
      %393 = vmatprep.subr.bf16.mxu0 0
      %394 = vmatpush1.bf16.msra.mxu0 0
      %395 = vmatprep.mubr.bf16.mxu0 0
      %396 = vmatmul.mubr.bf16.gmra.mrb[0].mxu0 %v361
      %v397 = vpop.f32.mrb[0].mxu0
      %v398 = vadd.f32 0.0, %v397
      %v399 = vpop.f32.mrb[0].mxu0
      %v400 = vadd.f32 0.0, %v399
      %v401 = vpop.f32.mrb[0].mxu0
      %v402 = vpop.f32.mrb[0].mxu0
      %403 = vdwg.mxu0
      %v404 = vadd.f32 %v307, %v398
      %v405 = vadd.f32 %v308, %v400
      %406 = vst [vmem:[#allocation2] sm:$0xff] %v404
      %407 = vst [vmem:[#allocation2 + $0x8] sm:$0xff] %v405
      // Predicated region
      $region37: #{custom_tokenizer_forward.13} parent=31 // pred_check
        %p408 = pneg %p289
      $region38: #{custom_tokenizer_forward.13} parent=31 // pred_check_branch
        %410 = sbr.rel (%p408) target = $region40
      $region39: #{custom_tokenizer_forward.13} parent=31 // pred_region
        %v411 = vld [vmem:[#allocation2] sm:$0xff]
        %v412 = vld [vmem:[#allocation2 + $0x8] sm:$0xff]
        %413 = vst [vmem:[%s285] sm:$0xff] %v411
        %414 = vst [vmem:[%s285 + $0x8] sm:$0xff] %v412
      $region40: #{custom_tokenizer_forward.13} parent=31 // pred_fallthru
        _
      %s415 = sadd.s32 %s20, %s22
      %s416 = smul.u32 2, %s415
      %p417 = scmp.lt.s32.totalorder %s21, 0
      %s418 = scalar_select %p417, %s21, 0
      %p419 = scmp.lt.s32.totalorder %s416, 3
      %s420 = scalar_select %p419, %s416, 3
      %s421 = smul.addr %s418, 4
      %s422 = sadd.s32 %s420, %s421
      %s423 = smul.addr %s422, 8
      %s424 = scalar_lea.vmem %s3, %s423
      // Predicated region
      $region41: #{custom_tokenizer_forward.13} parent=31 // pred_check
        %p425 = pneg %p146
      $region42: #{custom_tokenizer_forward.13} parent=31 // pred_check_branch
        %427 = sbr.rel (%p425) target = $region44
      $region43: #{custom_tokenizer_forward.13} parent=31 // pred_region
        %s428 = sadd.s32 %s20, %s22
        %s429 = smul.u32 2, %s428
      $region44: #{custom_tokenizer_forward.13} parent=31 // pred_fallthru
        _
    $region32: #{custom_tokenizer_forward.13} parent=5 // pred_fallthru
      _
    %p430 = scmp.le.s32.totalorder 2, %s9
    // Predicated region
    $region45: #{custom_tokenizer_forward.13} parent=5 // pred_check
      %p431 = pneg %p430
    $region46: #{custom_tokenizer_forward.13} parent=5 // pred_check_branch
      %433 = sbr.rel (%p431) target = $region48
    $region47: #{custom_tokenizer_forward.13} parent=5 // pred_region
      %s434 = ssub.s32 %s9, 2
      // Predicated region
      $region49: #{custom_tokenizer_forward.13} parent=47 // pred_check
        %p435 = pneg %p152
      $region50: #{custom_tokenizer_forward.13} parent=47 // pred_check_branch
        %437 = sbr.rel (%p435) target = $region52
      $region51: #{custom_tokenizer_forward.13} parent=47 // pred_region
        %s438 = sadd.s32 %s24, %s26
        %s439 = smul.u32 2, %s438
        %p440 = scmp.lt.s32.totalorder %s25, 0
        %s441 = scalar_select %p440, %s25, 0
        %p442 = scmp.lt.s32.totalorder %s439, 3
        %s443 = scalar_select %p442, %s439, 3
        %s444 = smul.addr %s441, 4
        %s445 = sadd.s32 %s443, %s444
        %s446 = smul.addr %s445, 8
        %s447 = scalar_lea.vmem %s3, %s446
      $region52: #{custom_tokenizer_forward.13} parent=47 // pred_fallthru
        _
    $region48: #{custom_tokenizer_forward.13} parent=5 // pred_fallthru
      _
  $region6: #{custom_tokenizer_forward.13} parent=0 // loop_footer
    %s13 = sadd.s32 1, %s9
  $region7: #{custom_tokenizer_forward.13} parent=0 // loop_footer_branch
    %8 = sbr.rel target = $region3
  $region8: #{custom_tokenizer_forward.13} parent=0 // loop_exit
    _

// kernel: custom_tokenizer_forward.8
$region0: #{custom_tokenizer_forward.8}
  #allocation0 [shape = 'u32[]', space=smem, size = 0x4, offset = 0x4, fixed_abs, tag = 'smem constant byte address 0x4 - core index']
  #allocation1 [shape = 'u32[144,128]{1,0:T(1,128)}', space=vmem, size = 0x12000, scoped, tag = 'internal scratch']
  #allocation2 [shape = 'f32[8,8,1]{2,1,0:T(8,128)}', space=vmem, size = 0x8000, scoped, tag = 'scratch operand']
  #allocation3 [shape = 'f32[8,8,1]{2,1,0:T(8,128)}', space=vmem, size = 0x8000, scoped, tag = 'scratch operand']
  #allocation4 [shape = 'f32[8,8,128]{2,1,0:T(8,128)}', space=vmem, size = 0x8000, scoped, tag = 'scratch operand']
  %s0 = inlined_call_operand.vmem [shape: bf16[2,8,3072], index: 0, kind: input, shape index: {}, may-alias: {0,1,2}]
  %s1 = inlined_call_operand.vmem [shape: bf16[2,8,3072], index: 1, kind: input, shape index: {}, may-alias: {0,1,2}]
  %s2 = inlined_call_operand.vmem [shape: bf16[2,8,3072], index: 2, kind: input, shape index: {}, may-alias: {0,1,2}]
  %s3 = inlined_call_operand.vmem [shape: f32[2,8,64], index: 3, kind: input, shape index: {}]
  %s4 = inlined_call_operand.vmem [shape: bf16[1024,64], index: 4, kind: input, shape index: {}]
  %s5 = inlined_call_operand.vmem [shape: f32[1,64], index: 5, kind: input, shape index: {}]
  %s6 = inlined_call_operand.vmem [shape: f32[1,64], index: 6, kind: input, shape index: {}]
  %s7 = inlined_call_operand.vmem [shape: f32[1,64], index: 7, kind: input, shape index: {}]
  %s8 = inlined_call_operand.vmem [shape: f32[2,8,64], index: 8, kind: output, shape index: {}]
  %s9 = sld [smem:[#allocation0]]
  $region73: #{custom_tokenizer_forward.8} parent=0
    _
  %s11 = ssub.s32 1, %s9
  %s12 = scalar_select 0, %s11, %s9
  loop: start=0, step=1, limit=4
  $region2: #{custom_tokenizer_forward.8} parent=0 // loop_pre_header
    _
  $region3: #{custom_tokenizer_forward.8} parent=0 // loop_header
    %s14 = sphi 0, %s18
    %p15 = scmp.ge.s32.totalorder %s14, 4
    %s21 = sphi 0, %s40
    %s22 = sphi 0, %s36
    %s23 = sphi 0, %s32
    %s24 = sphi 0, %s21
    %s25 = sphi 0, %s22
    %s26 = sphi 0, %s23
    %s27 = sphi 0, %s24
    %s28 = sphi 0, %s25
    %s29 = sphi 0, %s26
    %s45 = sphi 0, %s47
    %s48 = sphi 0, %s45
    %s49 = sphi 0, %s48
    %s65 = sphi 0, %s49
    %s73 = sphi 0, %s75
    %s76 = sphi 0, %s73
    %s77 = sphi 0, %s76
    %s93 = sphi 0, %s77
    %s101 = sphi 0, %s103
    %s104 = sphi 0, %s101
    %s105 = sphi 0, %s104
    %s121 = sphi 0, %s105
    %s129 = sphi 0, %s131
    %s132 = sphi 0, %s129
    %s133 = sphi 0, %s132
    %s149 = sphi 0, %s133
    %s153 = sphi 0, %s153
    %s155 = sphi 0, %s153
    %s156 = sphi 0, %s155
    %s170 = sphi 0, %s156
    %s174 = sphi 0, %s174
    %s176 = sphi 0, %s174
    %s177 = sphi 0, %s176
    %s191 = sphi 0, %s177
    %s195 = sphi 0, %s195
    %s197 = sphi 0, %s195
    %s198 = sphi 0, %s197
    %s212 = sphi 0, %s198
    %s216 = sphi 0, %s216
    %s218 = sphi 0, %s216
    %s219 = sphi 0, %s218
    %s233 = sphi 0, %s219
    %s241 = sphi 0, %s243
    %s244 = sphi 0, %s241
    %s245 = sphi 0, %s244
    %s261 = sphi 0, %s245
  $region4: #{custom_tokenizer_forward.8} parent=0 // loop_header_branch
    %17 = sbr.rel (%p15) target = $region8
  $region5: #{custom_tokenizer_forward.8} parent=0 // loop_body
    %s19 = ssub.s32 %s14, 1
    %s20 = ssub.s32 %s14, 2
    %s30 = sadd.s32 1, %s23
    %p31 = scmp.ge.s32.totalorder %s30, 1
    %s32 = scalar_select %p31, 0, %s30
    %s33 = sadd.s32 1, %s22
    %s34 = scalar_select %p31, %s33, %s22
    %p35 = scmp.ge.s32.totalorder %s34, 1
    %s36 = scalar_select %p35, 0, %s34
    %s37 = sadd.s32 1, %s21
    %s38 = scalar_select %p35, %s37, %s21
    %p39 = scmp.ge.s32.totalorder %s38, 2
    %s40 = scalar_select %p39, 0, %s38
    %s41 = ssub.s32 %s21, %s40
    %s42 = ssub.s32 %s22, %s36
    %s43 = sor.u32 %s41, %s42
    %p44 = scmp.eq.s32.totalorder %s43, 0
    %s46 = sadd.s32 %s45, 1
    %s47 = scalar_select %p44, %s45, %s46
    %p50 = pneg %p44
    %p51 = scmp.eq.s32.totalorder %s14, 1
    %p52 = por %p50, %p51
    %p53 = scmp.ne.s32.totalorder %s45, %s48
    %p54 = scmp.eq.s32.totalorder %s14, 0
    %p55 = por %p53, %p54
    %p56 = scmp.ne.s32.totalorder %s45, %s48
    %p57 = scmp.eq.s32.totalorder %s19, 1
    %p58 = por %p56, %p57
    %p59 = scmp.ne.s32.totalorder %s48, %s49
    %p60 = scmp.eq.s32.totalorder %s19, 0
    %p61 = por %p59, %p60
    %p62 = scmp.ne.s32.totalorder %s48, %s49
    %p63 = scmp.eq.s32.totalorder %s20, 1
    %p64 = por %p62, %p63
    %p66 = scmp.ne.s32.totalorder %s49, %s65
    %p67 = scmp.eq.s32.totalorder %s20, 0
    %p68 = por %p66, %p67
    %s69 = ssub.s32 %s21, %s40
    %s70 = ssub.s32 %s23, %s32
    %s71 = sor.u32 %s69, %s70
    %p72 = scmp.eq.s32.totalorder %s71, 0
    %s74 = sadd.s32 %s73, 1
    %s75 = scalar_select %p72, %s73, %s74
    %p78 = pneg %p72
    %p79 = scmp.eq.s32.totalorder %s14, 1
    %p80 = por %p78, %p79
    %p81 = scmp.ne.s32.totalorder %s73, %s76
    %p82 = scmp.eq.s32.totalorder %s14, 0
    %p83 = por %p81, %p82
    %p84 = scmp.ne.s32.totalorder %s73, %s76
    %p85 = scmp.eq.s32.totalorder %s19, 1
    %p86 = por %p84, %p85
    %p87 = scmp.ne.s32.totalorder %s76, %s77
    %p88 = scmp.eq.s32.totalorder %s19, 0
    %p89 = por %p87, %p88
    %p90 = scmp.ne.s32.totalorder %s76, %s77
    %p91 = scmp.eq.s32.totalorder %s20, 1
    %p92 = por %p90, %p91
    %p94 = scmp.ne.s32.totalorder %s77, %s93
    %p95 = scmp.eq.s32.totalorder %s20, 0
    %p96 = por %p94, %p95
    %s97 = ssub.s32 %s21, %s40
    %s98 = ssub.s32 %s23, %s32
    %s99 = sor.u32 %s97, %s98
    %p100 = scmp.eq.s32.totalorder %s99, 0
    %s102 = sadd.s32 %s101, 1
    %s103 = scalar_select %p100, %s101, %s102
    %p106 = pneg %p100
    %p107 = scmp.eq.s32.totalorder %s14, 1
    %p108 = por %p106, %p107
    %p109 = scmp.ne.s32.totalorder %s101, %s104
    %p110 = scmp.eq.s32.totalorder %s14, 0
    %p111 = por %p109, %p110
    %p112 = scmp.ne.s32.totalorder %s101, %s104
    %p113 = scmp.eq.s32.totalorder %s19, 1
    %p114 = por %p112, %p113
    %p115 = scmp.ne.s32.totalorder %s104, %s105
    %p116 = scmp.eq.s32.totalorder %s19, 0
    %p117 = por %p115, %p116
    %p118 = scmp.ne.s32.totalorder %s104, %s105
    %p119 = scmp.eq.s32.totalorder %s20, 1
    %p120 = por %p118, %p119
    %p122 = scmp.ne.s32.totalorder %s105, %s121
    %p123 = scmp.eq.s32.totalorder %s20, 0
    %p124 = por %p122, %p123
    %s125 = ssub.s32 %s21, %s40
    %s126 = ssub.s32 %s22, %s36
    %s127 = sor.u32 %s125, %s126
    %p128 = scmp.eq.s32.totalorder %s127, 0
    %s130 = sadd.s32 %s129, 1
    %s131 = scalar_select %p128, %s129, %s130
    %p134 = pneg %p128
    %p135 = scmp.eq.s32.totalorder %s14, 1
    %p136 = por %p134, %p135
    %p137 = scmp.ne.s32.totalorder %s129, %s132
    %p138 = scmp.eq.s32.totalorder %s14, 0
    %p139 = por %p137, %p138
    %p140 = scmp.ne.s32.totalorder %s129, %s132
    %p141 = scmp.eq.s32.totalorder %s19, 1
    %p142 = por %p140, %p141
    %p143 = scmp.ne.s32.totalorder %s132, %s133
    %p144 = scmp.eq.s32.totalorder %s19, 0
    %p145 = por %p143, %p144
    %p146 = scmp.ne.s32.totalorder %s132, %s133
    %p147 = scmp.eq.s32.totalorder %s20, 1
    %p148 = por %p146, %p147
    %p150 = scmp.ne.s32.totalorder %s133, %s149
    %p151 = scmp.eq.s32.totalorder %s20, 0
    %p152 = por %p150, %p151
    %s154 = sadd.s32 %s153, 1
    %p157 = scmp.eq.s32.totalorder %s14, 1
    %p158 = scmp.ne.s32.totalorder %s153, %s155
    %p159 = scmp.eq.s32.totalorder %s14, 0
    %p160 = por %p158, %p159
    %p161 = scmp.ne.s32.totalorder %s153, %s155
    %p162 = scmp.eq.s32.totalorder %s19, 1
    %p163 = por %p161, %p162
    %p164 = scmp.ne.s32.totalorder %s155, %s156
    %p165 = scmp.eq.s32.totalorder %s19, 0
    %p166 = por %p164, %p165
    %p167 = scmp.ne.s32.totalorder %s155, %s156
    %p168 = scmp.eq.s32.totalorder %s20, 1
    %p169 = por %p167, %p168
    %p171 = scmp.ne.s32.totalorder %s156, %s170
    %p172 = scmp.eq.s32.totalorder %s20, 0
    %p173 = por %p171, %p172
    %s175 = sadd.s32 %s174, 1
    %p178 = scmp.eq.s32.totalorder %s14, 1
    %p179 = scmp.ne.s32.totalorder %s174, %s176
    %p180 = scmp.eq.s32.totalorder %s14, 0
    %p181 = por %p179, %p180
    %p182 = scmp.ne.s32.totalorder %s174, %s176
    %p183 = scmp.eq.s32.totalorder %s19, 1
    %p184 = por %p182, %p183
    %p185 = scmp.ne.s32.totalorder %s176, %s177
    %p186 = scmp.eq.s32.totalorder %s19, 0
    %p187 = por %p185, %p186
    %p188 = scmp.ne.s32.totalorder %s176, %s177
    %p189 = scmp.eq.s32.totalorder %s20, 1
    %p190 = por %p188, %p189
    %p192 = scmp.ne.s32.totalorder %s177, %s191
    %p193 = scmp.eq.s32.totalorder %s20, 0
    %p194 = por %p192, %p193
    %s196 = sadd.s32 %s195, 1
    %p199 = scmp.eq.s32.totalorder %s14, 1
    %p200 = scmp.ne.s32.totalorder %s195, %s197
    %p201 = scmp.eq.s32.totalorder %s14, 0
    %p202 = por %p200, %p201
    %p203 = scmp.ne.s32.totalorder %s195, %s197
    %p204 = scmp.eq.s32.totalorder %s19, 1
    %p205 = por %p203, %p204
    %p206 = scmp.ne.s32.totalorder %s197, %s198
    %p207 = scmp.eq.s32.totalorder %s19, 0
    %p208 = por %p206, %p207
    %p209 = scmp.ne.s32.totalorder %s197, %s198
    %p210 = scmp.eq.s32.totalorder %s20, 1
    %p211 = por %p209, %p210
    %p213 = scmp.ne.s32.totalorder %s198, %s212
    %p214 = scmp.eq.s32.totalorder %s20, 0
    %p215 = por %p213, %p214
    %s217 = sadd.s32 %s216, 1
    %p220 = scmp.eq.s32.totalorder %s14, 1
    %p221 = scmp.ne.s32.totalorder %s216, %s218
    %p222 = scmp.eq.s32.totalorder %s14, 0
    %p223 = por %p221, %p222
    %p224 = scmp.ne.s32.totalorder %s216, %s218
    %p225 = scmp.eq.s32.totalorder %s19, 1
    %p226 = por %p224, %p225
    %p227 = scmp.ne.s32.totalorder %s218, %s219
    %p228 = scmp.eq.s32.totalorder %s19, 0
    %p229 = por %p227, %p228
    %p230 = scmp.ne.s32.totalorder %s218, %s219
    %p231 = scmp.eq.s32.totalorder %s20, 1
    %p232 = por %p230, %p231
    %p234 = scmp.ne.s32.totalorder %s219, %s233
    %p235 = scmp.eq.s32.totalorder %s20, 0
    %p236 = por %p234, %p235
    %s237 = ssub.s32 %s21, %s40
    %s238 = ssub.s32 %s22, %s36
    %s239 = sor.u32 %s237, %s238
    %p240 = scmp.eq.s32.totalorder %s239, 0
    %s242 = sadd.s32 %s241, 1
    %s243 = scalar_select %p240, %s241, %s242
    %p246 = pneg %p240
    %p247 = scmp.eq.s32.totalorder %s14, 1
    %p248 = por %p246, %p247
    %p249 = scmp.ne.s32.totalorder %s241, %s244
    %p250 = scmp.eq.s32.totalorder %s14, 0
    %p251 = por %p249, %p250
    %p252 = scmp.ne.s32.totalorder %s241, %s244
    %p253 = scmp.eq.s32.totalorder %s19, 1
    %p254 = por %p252, %p253
    %p255 = scmp.ne.s32.totalorder %s244, %s245
    %p256 = scmp.eq.s32.totalorder %s19, 0
    %p257 = por %p255, %p256
    %p258 = scmp.ne.s32.totalorder %s244, %s245
    %p259 = scmp.eq.s32.totalorder %s20, 1
    %p260 = por %p258, %p259
    %p262 = scmp.ne.s32.totalorder %s245, %s261
    %p263 = scmp.eq.s32.totalorder %s20, 0
    %p264 = por %p262, %p263
    %p265 = scmp.le.s32.totalorder 1, %s14
    %p266 = scmp.lt.s32.totalorder %s14, 3
    %p267 = pnand %p265, %p266
    %p268 = pneg %p267
    // Predicated region
    $region9: #{custom_tokenizer_forward.8} parent=5 // pred_check
      _
    $region10: #{custom_tokenizer_forward.8} parent=5 // pred_check_branch
      %270 = sbr.rel (%p267) target = $region12
    $region11: #{custom_tokenizer_forward.8} parent=5 // pred_region
      %s271 = ssub.s32 %s14, 1
      // Predicated region
      $region13: #{custom_tokenizer_forward.8} parent=11 // pred_check
        %p272 = pneg %p166
      $region14: #{custom_tokenizer_forward.8} parent=11 // pred_check_branch
        %274 = sbr.rel (%p272) target = $region16
      $region15: #{custom_tokenizer_forward.8} parent=11 // pred_region
        _
      $region16: #{custom_tokenizer_forward.8} parent=11 // pred_fallthru
        _
      // Predicated region
      $region17: #{custom_tokenizer_forward.8} parent=11 // pred_check
        %p275 = pneg %p187
      $region18: #{custom_tokenizer_forward.8} parent=11 // pred_check_branch
        %277 = sbr.rel (%p275) target = $region20
      $region19: #{custom_tokenizer_forward.8} parent=11 // pred_region
        _
      $region20: #{custom_tokenizer_forward.8} parent=11 // pred_fallthru
        _
      // Predicated region
      $region21: #{custom_tokenizer_forward.8} parent=11 // pred_check
        %p278 = pneg %p208
      $region22: #{custom_tokenizer_forward.8} parent=11 // pred_check_branch
        %280 = sbr.rel (%p278) target = $region24
      $region23: #{custom_tokenizer_forward.8} parent=11 // pred_region
        _
      $region24: #{custom_tokenizer_forward.8} parent=11 // pred_fallthru
        _
      // Predicated region
      $region25: #{custom_tokenizer_forward.8} parent=11 // pred_check
        %p281 = pneg %p229
      $region26: #{custom_tokenizer_forward.8} parent=11 // pred_check_branch
        %283 = sbr.rel (%p281) target = $region28
      $region27: #{custom_tokenizer_forward.8} parent=11 // pred_region
        _
      $region28: #{custom_tokenizer_forward.8} parent=11 // pred_fallthru
        _
    $region12: #{custom_tokenizer_forward.8} parent=5 // pred_fallthru
      _
    %p284 = scmp.lt.s32.totalorder %s14, 2
    // Predicated region
    $region29: #{custom_tokenizer_forward.8} parent=5 // pred_check
      %p285 = pneg %p284
    $region30: #{custom_tokenizer_forward.8} parent=5 // pred_check_branch
      %287 = sbr.rel (%p285) target = $region32
    $region31: #{custom_tokenizer_forward.8} parent=5 // pred_region
      // Predicated region
      $region33: #{custom_tokenizer_forward.8} parent=31 // pred_check
        %p288 = pneg %p55
      $region34: #{custom_tokenizer_forward.8} parent=31 // pred_check_branch
        %290 = sbr.rel (%p288) target = $region36
      $region35: #{custom_tokenizer_forward.8} parent=31 // pred_region
        %p291 = scmp.lt.s32.totalorder %s21, 1
        %s292 = scalar_select %p291, %s21, 1
        %p293 = scmp.lt.s32.totalorder %s22, 0
        %s294 = scalar_select %p293, %s22, 0
        %s295 = smul.addr %s294, 24
        %s296 = smul.addr %s292, 24
        %s297 = sadd.s32 %s295, %s296
        %s298 = smul.addr %s297, 4
        %s299 = scalar_lea.vmem %s0, %s298
      $region36: #{custom_tokenizer_forward.8} parent=31 // pred_fallthru
        _
      // Predicated region
      $region37: #{custom_tokenizer_forward.8} parent=31 // pred_check
        %p300 = pneg %p83
      $region38: #{custom_tokenizer_forward.8} parent=31 // pred_check_branch
        %302 = sbr.rel (%p300) target = $region40
      $region39: #{custom_tokenizer_forward.8} parent=31 // pred_region
        %p303 = scmp.lt.s32.totalorder %s21, 1
        %s304 = scalar_select %p303, %s21, 1
        %p305 = scmp.lt.s32.totalorder %s23, 0
        %s306 = scalar_select %p305, %s23, 0
        %s307 = smul.addr %s306, 24
        %s308 = sadd.s32 8, %s307
        %s309 = smul.addr %s304, 24
        %s310 = sadd.s32 %s308, %s309
        %s311 = smul.addr %s310, 4
        %s312 = scalar_lea.vmem %s1, %s311
      $region40: #{custom_tokenizer_forward.8} parent=31 // pred_fallthru
        _
      // Predicated region
      $region41: #{custom_tokenizer_forward.8} parent=31 // pred_check
        %p313 = pneg %p111
      $region42: #{custom_tokenizer_forward.8} parent=31 // pred_check_branch
        %315 = sbr.rel (%p313) target = $region44
      $region43: #{custom_tokenizer_forward.8} parent=31 // pred_region
        %p316 = scmp.lt.s32.totalorder %s21, 1
        %s317 = scalar_select %p316, %s21, 1
        %p318 = scmp.lt.s32.totalorder %s23, 0
        %s319 = scalar_select %p318, %s23, 0
        %s320 = smul.addr %s319, 24
        %s321 = sadd.s32 16, %s320
        %s322 = smul.addr %s317, 24
        %s323 = sadd.s32 %s321, %s322
        %s324 = smul.addr %s323, 4
        %s325 = scalar_lea.vmem %s2, %s324
      $region44: #{custom_tokenizer_forward.8} parent=31 // pred_fallthru
        _
      // Predicated region
      $region45: #{custom_tokenizer_forward.8} parent=31 // pred_check
        %p326 = pneg %p139
      $region46: #{custom_tokenizer_forward.8} parent=31 // pred_check_branch
        %328 = sbr.rel (%p326) target = $region48
      $region47: #{custom_tokenizer_forward.8} parent=31 // pred_region
        %p329 = scmp.lt.s32.totalorder %s21, 1
        %s330 = scalar_select %p329, %s21, 1
        %p331 = scmp.lt.s32.totalorder %s22, 0
        %s332 = scalar_select %p331, %s22, 0
        %s333 = sadd.s32 %s332, %s330
        %s334 = smul.addr %s333, 8
        %s335 = scalar_lea.vmem %s3, %s334
      $region48: #{custom_tokenizer_forward.8} parent=31 // pred_fallthru
        _
    $region32: #{custom_tokenizer_forward.8} parent=5 // pred_fallthru
      _
    %p336 = scmp.le.s32.totalorder 1, %s14
    %p337 = scmp.lt.s32.totalorder %s14, 3
    %p338 = pnand %p336, %p337
    %p339 = pneg %p338
    // Predicated region
    $region49: #{custom_tokenizer_forward.8} parent=5 // pred_check
      _
    $region50: #{custom_tokenizer_forward.8} parent=5 // pred_check_branch
      %341 = sbr.rel (%p338) target = $region52
    $region51: #{custom_tokenizer_forward.8} parent=5 // pred_region
      %s342 = ssub.s32 %s14, 1
      %p343 = scmp.lt.s32.totalorder %s24, 1
      %s344 = scalar_select %p343, %s24, 1
      %p345 = scmp.lt.s32.totalorder %s25, 0
      %s346 = scalar_select %p345, %s25, 0
      %s347 = smul.addr %s346, 24
      %s348 = smul.addr %s344, 24
      %s349 = sadd.s32 %s347, %s348
      %s350 = smul.addr %s349, 4
      %s351 = scalar_lea.vmem %s0, %s350
      %p352 = pneg %p61
      %p353 = pneg %p58
      %p354 = scmp.lt.s32.totalorder %s24, 1
      %s355 = scalar_select %p354, %s24, 1
      %p356 = scmp.lt.s32.totalorder %s26, 0
      %s357 = scalar_select %p356, %s26, 0
      %s358 = smul.addr %s357, 24
      %s359 = sadd.s32 8, %s358
      %s360 = smul.addr %s355, 24
      %s361 = sadd.s32 %s359, %s360
      %s362 = smul.addr %s361, 4
      %s363 = scalar_lea.vmem %s1, %s362
      %p364 = pneg %p89
      %p365 = pneg %p86
      %p366 = scmp.lt.s32.totalorder %s24, 1
      %s367 = scalar_select %p366, %s24, 1
      %p368 = scmp.lt.s32.totalorder %s26, 0
      %s369 = scalar_select %p368, %s26, 0
      %s370 = smul.addr %s369, 24
      %s371 = sadd.s32 16, %s370
      %s372 = smul.addr %s367, 24
      %s373 = sadd.s32 %s371, %s372
      %s374 = smul.addr %s373, 4
      %s375 = scalar_lea.vmem %s2, %s374
      %p376 = pneg %p117
      %p377 = pneg %p114
      %p378 = scmp.lt.s32.totalorder %s24, 1
      %s379 = scalar_select %p378, %s24, 1
      %p380 = scmp.lt.s32.totalorder %s25, 0
      %s381 = scalar_select %p380, %s25, 0
      %s382 = sadd.s32 %s381, %s379
      %s383 = smul.addr %s382, 8
      %s384 = scalar_lea.vmem %s3, %s383
      %p385 = pneg %p145
      %p386 = pneg %p142
      %p387 = pneg %p166
      %p388 = pneg %p163
      %p389 = pneg %p187
      %p390 = pneg %p184
      %p391 = pneg %p208
      %p392 = pneg %p205
      %p393 = pneg %p229
      %p394 = pneg %p226
      %p395 = pneg %p257
      %p396 = pneg %p254
      %p397 = scmp.lt.s32.totalorder %s24, 1
      %s398 = scalar_select %p397, %s24, 1
      %p399 = scmp.lt.s32.totalorder %s25, 0
      %s400 = scalar_select %p399, %s25, 0
      %s401 = sadd.s32 %s400, %s398
      %s402 = smul.addr %s401, 8
      %s403 = scalar_lea.vmem %s8, %s402
      %p404 = scmp.lt.s32.totalorder %s24, 1
      %s405 = scalar_select %p404, %s24, 1
      %p406 = scmp.lt.s32.totalorder %s25, 0
      %s407 = scalar_select %p406, %s25, 0
      %s408 = smul.addr %s407, 24
      %s409 = smul.addr %s405, 24
      %s410 = sadd.s32 %s408, %s409
      %s411 = smul.addr %s410, 4
      %s412 = scalar_lea.vmem %s0, %s411
      %p413 = scmp.lt.s32.totalorder %s24, 1
      %s414 = scalar_select %p413, %s24, 1
      %p415 = scmp.lt.s32.totalorder %s26, 0
      %s416 = scalar_select %p415, %s26, 0
      %s417 = smul.addr %s416, 24
      %s418 = sadd.s32 8, %s417
      %s419 = smul.addr %s414, 24
      %s420 = sadd.s32 %s418, %s419
      %s421 = smul.addr %s420, 4
      %s422 = scalar_lea.vmem %s1, %s421
      %p423 = scmp.lt.s32.totalorder %s24, 1
      %s424 = scalar_select %p423, %s24, 1
      %p425 = scmp.lt.s32.totalorder %s26, 0
      %s426 = scalar_select %p425, %s26, 0
      %s427 = smul.addr %s426, 24
      %s428 = sadd.s32 16, %s427
      %s429 = smul.addr %s424, 24
      %s430 = sadd.s32 %s428, %s429
      %s431 = smul.addr %s430, 4
      %s432 = scalar_lea.vmem %s2, %s431
      %p433 = scmp.lt.s32.totalorder %s24, 1
      %s434 = scalar_select %p433, %s24, 1
      %p435 = scmp.lt.s32.totalorder %s25, 0
      %s436 = scalar_select %p435, %s25, 0
      %s437 = sadd.s32 %s436, %s434
      %s438 = smul.addr %s437, 8
      %s439 = scalar_lea.vmem %s3, %s438
      %p440 = scmp.lt.s32.totalorder %s24, 1
      %s441 = scalar_select %p440, %s24, 1
      %p442 = scmp.lt.s32.totalorder %s25, 0
      %s443 = scalar_select %p442, %s25, 0
      %s444 = sadd.s32 %s443, %s441
      %s445 = smul.addr %s444, 8
      %s446 = scalar_lea.vmem %s8, %s445
      %p448 = scmp.eq.s32.totalorder %s26, 0
      // Predicated region
      $region53: #{custom_tokenizer_forward.8} parent=51 // pred_check
        %p449 = pneg %p448
      $region54: #{custom_tokenizer_forward.8} parent=51 // pred_check_branch
        %451 = sbr.rel (%p449) target = $region56
      $region55: #{custom_tokenizer_forward.8} parent=51 // pred_region
        %vm452 = vcmask 7168
        %453 = vst.msk [vmem:[#allocation2] sm:$0xff] %vm452, -inf
        %454 = vst.msk [vmem:[#allocation2 + $0x8] sm:$0xff] %vm452, -inf
        %455 = vst.msk [vmem:[#allocation2 + $0x10] sm:$0xff] %vm452, -inf
        %456 = vst.msk [vmem:[#allocation2 + $0x18] sm:$0xff] %vm452, -inf
        %457 = vst.msk [vmem:[#allocation2 + $0x20] sm:$0xff] %vm452, -inf
        %458 = vst.msk [vmem:[#allocation2 + $0x28] sm:$0xff] %vm452, -inf
        %459 = vst.msk [vmem:[#allocation2 + $0x30] sm:$0xff] %vm452, -inf
        %460 = vst.msk [vmem:[#allocation2 + $0x38] sm:$0xff] %vm452, -inf
        %461 = vst.msk [vmem:[#allocation3] sm:$0xff] %vm452, 0.0
        %462 = vst.msk [vmem:[#allocation3 + $0x8] sm:$0xff] %vm452, 0.0
        %463 = vst.msk [vmem:[#allocation3 + $0x10] sm:$0xff] %vm452, 0.0
        %464 = vst.msk [vmem:[#allocation3 + $0x18] sm:$0xff] %vm452, 0.0
        %465 = vst.msk [vmem:[#allocation3 + $0x20] sm:$0xff] %vm452, 0.0
        %466 = vst.msk [vmem:[#allocation3 + $0x28] sm:$0xff] %vm452, 0.0
        %467 = vst.msk [vmem:[#allocation3 + $0x30] sm:$0xff] %vm452, 0.0
        %468 = vst.msk [vmem:[#allocation3 + $0x38] sm:$0xff] %vm452, 0.0
        %469 = vst [vmem:[#allocation4] sm:$0xff] 0.0
        %470 = vst [vmem:[#allocation4 + $0x8] sm:$0xff] 0.0
        %471 = vst [vmem:[#allocation4 + $0x10] sm:$0xff] 0.0
        %472 = vst [vmem:[#allocation4 + $0x18] sm:$0xff] 0.0
        %473 = vst [vmem:[#allocation4 + $0x20] sm:$0xff] 0.0
        %474 = vst [vmem:[#allocation4 + $0x28] sm:$0xff] 0.0
        %475 = vst [vmem:[#allocation4 + $0x30] sm:$0xff] 0.0
        %476 = vst [vmem:[#allocation4 + $0x38] sm:$0xff] 0.0
      $region56: #{custom_tokenizer_forward.8} parent=51 // pred_fallthru
        _
      %v477 = vld [vmem:[%s412] sm:$0xff]
      %v478 = vld [vmem:[%s412 + $0x8] sm:$0xff]
      %v479 = vld [vmem:[%s412 + $0x10] sm:$0xff]
      %v480 = vld [vmem:[%s412 + $0x18] sm:$0xff]
      %v481 = vld [vmem:[%s422] sm:$0xff]
      %v482 = vld [vmem:[%s422 + $0x8] sm:$0xff]
      %v483 = vld [vmem:[%s422 + $0x10] sm:$0xff]
      %v484 = vld [vmem:[%s422 + $0x18] sm:$0xff]
      %v485 = vld [vmem:[%s432] sm:$0xff]
      %v486 = vld [vmem:[%s432 + $0x8] sm:$0xff]
      %v487 = vld [vmem:[%s432 + $0x10] sm:$0xff]
      %v488 = vld [vmem:[%s432 + $0x18] sm:$0xff]
      %489 = vmatprep.subr.bf16.mxu0 0
      %490 = vmatpush1.bf16.xpose.msra.mxu0 %v481
      %491 = vmatprep.subr.bf16.mxu0 0
      %492 = vmatpush1.bf16.xpose.msra.mxu0 0
      %493 = vmatprep.subr.bf16.mxu0 0
      %494 = vmatpush1.bf16.xpose.msra.mxu0 0
      %495 = vmatprep.subr.bf16.mxu0 0
      %496 = vmatpush1.bf16.xpose.msra.mxu0 0
      %497 = vmatprep.subr.bf16.mxu0 0
      %498 = vmatpush1.bf16.xpose.msra.mxu0 0
      %499 = vmatprep.subr.bf16.mxu0 0
      %500 = vmatpush1.bf16.xpose.msra.mxu0 0
      %501 = vmatprep.subr.bf16.mxu0 0
      %502 = vmatpush1.bf16.xpose.msra.mxu0 0
      %503 = vmatprep.subr.bf16.mxu0 0
      %504 = vmatpush1.bf16.xpose.msra.mxu0 0
      %505 = vmatprep.subr.bf16.mxu0 0
      %506 = vmatpush1.bf16.xpose.msra.mxu0 0
      %507 = vmatprep.subr.bf16.mxu0 0
      %508 = vmatpush1.bf16.xpose.msra.mxu0 0
      %509 = vmatprep.subr.bf16.mxu0 0
      %510 = vmatpush1.bf16.xpose.msra.mxu0 0
      %511 = vmatprep.subr.bf16.mxu0 0
      %512 = vmatpush1.bf16.xpose.msra.mxu0 0
      %513 = vmatprep.subr.bf16.mxu0 0
      %514 = vmatpush1.bf16.xpose.msra.mxu0 0
      %515 = vmatprep.subr.bf16.mxu0 0
      %516 = vmatpush1.bf16.xpose.msra.mxu0 0
      %517 = vmatprep.subr.bf16.mxu0 0
      %518 = vmatpush1.bf16.xpose.msra.mxu0 0
      %519 = vmatprep.subr.bf16.mxu0 0
      %520 = vmatpush1.bf16.xpose.msra.mxu0 0
      %521 = vmatprep.mubr.bf16.mxu0 0
      %522 = vmatmul.mubr.bf16.gmra.mrb[0].mxu0 %v477
      %v523 = vpop.f32.mrb[0].mxu0
      %v524 = vadd.f32 0.0, %v523
      %v525 = vpop.f32.mrb[0].mxu0
      %v526 = vpop.f32.mrb[0].mxu0
      %v527 = vpop.f32.mrb[0].mxu0
      %528 = vdwg.mxu0
      %v529 = vmul.f32 %v524, 0.35355338
      %v530 = vld [vmem:[#allocation2] sm:$0xff]
      %vm531 = vcmask 64512
      %v532 = vsel %vm531, %v529, -inf
      %533 = vmax.xlane.f32.xlu0 %v532
      %v534 = vpop.xlane.xlu0 %533
      %v535 = vmax.f32 %v530, %v534
      %v536 = vsub.f32 %v530, %v535
      %v537 = vmul.f32 %v536, 1.442695
      %v538 = vpow.pop %v537
      %540 = vset.pattern.permute.xlu0 0
      %541 = vperm.xlu0 %540, %v535
      %v542 = vpop.permute.xlu0 %541
      %v544 = vsub.f32 %v529, %v542
      %v545 = vmul.f32 %v544, 1.442695
      %v546 = vpow.pop %v545
      %v547 = vld [vmem:[#allocation3] sm:$0xff]
      %v548 = vmul.f32 %v538, %v547
      %v549 = vsel %vm531, %v546, 0.0
      %550 = vadd.xlane.f32.xlu0 %v549
      %v551 = vpop.xlane.xlu0 %550
      %v552 = vadd.f32 %v548, %v551
      %vm553 = vcmask 7168
      %554 = vst.msk [vmem:[#allocation3] sm:$0xff] %vm553, %v552
      %v555 = vld [vmem:[#allocation4] sm:$0xff]
      %557 = vset.pattern.permute.xlu0 0
      %558 = vperm.xlu0 %557, %v538
      %v559 = vpop.permute.xlu0 %558
      %v561 = vmul.f32 %v559, %v555
      %v562 = vpack.c.bf16 %v546, %v546
      %v564 = vsel %vm531, %v562, 0
      %vm566 = vcmask 1043456
      %v568 = vsel %vm566, %v485, 0
      %570 = vmatprep.subr.bf16.mxu0 0
      %571 = vmatpush1.bf16.msra.mxu0 %v568
      %572 = vmatprep.subr.bf16.mxu0 0
      %573 = vmatpush1.bf16.msra.mxu0 0
      %574 = vmatprep.subr.bf16.mxu0 0
      %575 = vmatpush1.bf16.msra.mxu0 0
      %576 = vmatprep.subr.bf16.mxu0 0
      %577 = vmatpush1.bf16.msra.mxu0 0
      %578 = vmatprep.subr.bf16.mxu0 0
      %579 = vmatpush1.bf16.msra.mxu0 0
      %580 = vmatprep.subr.bf16.mxu0 0
      %581 = vmatpush1.bf16.msra.mxu0 0
      %582 = vmatprep.subr.bf16.mxu0 0
      %583 = vmatpush1.bf16.msra.mxu0 0
      %584 = vmatprep.subr.bf16.mxu0 0
      %585 = vmatpush1.bf16.msra.mxu0 0
      %586 = vmatprep.subr.bf16.mxu0 0
      %587 = vmatpush1.bf16.msra.mxu0 0
      %588 = vmatprep.subr.bf16.mxu0 0
      %589 = vmatpush1.bf16.msra.mxu0 0
      %590 = vmatprep.subr.bf16.mxu0 0
      %591 = vmatpush1.bf16.msra.mxu0 0
      %592 = vmatprep.subr.bf16.mxu0 0
      %593 = vmatpush1.bf16.msra.mxu0 0
      %594 = vmatprep.subr.bf16.mxu0 0
      %595 = vmatpush1.bf16.msra.mxu0 0
      %596 = vmatprep.subr.bf16.mxu0 0
      %597 = vmatpush1.bf16.msra.mxu0 0
      %598 = vmatprep.subr.bf16.mxu0 0
      %599 = vmatpush1.bf16.msra.mxu0 0
      %600 = vmatprep.subr.bf16.mxu0 0
      %601 = vmatpush1.bf16.msra.mxu0 0
      %602 = vmatprep.mubr.bf16.mxu0 0
      %603 = vmatmul.mubr.bf16.gmra.mrb[0].mxu0 %v564
      %v604 = vpop.f32.mrb[0].mxu0
      %v605 = vadd.f32 0.0, %v604
      %v606 = vpop.f32.mrb[0].mxu0
      %v607 = vpop.f32.mrb[0].mxu0
      %v608 = vpop.f32.mrb[0].mxu0
      %609 = vdwg.mxu0
      %v610 = vadd.f32 %v561, %v605
      %611 = vst [vmem:[#allocation4] sm:$0xff] %v610
      %612 = vst.msk [vmem:[#allocation2] sm:$0xff] %vm553, %v535
      %v614 = vunpack.c.h.b16 %v477
      %v615 = vpack.c.b16 %v614, %v614
      %v618 = vunpack.c.h.b16 %v481
      %v619 = vpack.c.b16 %v618, %v618
      %621 = vmatprep.subr.bf16.mxu0 0
      %622 = vmatpush1.bf16.xpose.msra.mxu0 %v619
      %623 = vmatprep.subr.bf16.mxu0 0
      %624 = vmatpush1.bf16.xpose.msra.mxu0 0
      %625 = vmatprep.subr.bf16.mxu0 0
      %626 = vmatpush1.bf16.xpose.msra.mxu0 0
      %627 = vmatprep.subr.bf16.mxu0 0
      %628 = vmatpush1.bf16.xpose.msra.mxu0 0
      %629 = vmatprep.subr.bf16.mxu0 0
      %630 = vmatpush1.bf16.xpose.msra.mxu0 0
      %631 = vmatprep.subr.bf16.mxu0 0
      %632 = vmatpush1.bf16.xpose.msra.mxu0 0
      %633 = vmatprep.subr.bf16.mxu0 0
      %634 = vmatpush1.bf16.xpose.msra.mxu0 0
      %635 = vmatprep.subr.bf16.mxu0 0
      %636 = vmatpush1.bf16.xpose.msra.mxu0 0
      %637 = vmatprep.subr.bf16.mxu0 0
      %638 = vmatpush1.bf16.xpose.msra.mxu0 0
      %639 = vmatprep.subr.bf16.mxu0 0
      %640 = vmatpush1.bf16.xpose.msra.mxu0 0
      %641 = vmatprep.subr.bf16.mxu0 0
      %642 = vmatpush1.bf16.xpose.msra.mxu0 0
      %643 = vmatprep.subr.bf16.mxu0 0
      %644 = vmatpush1.bf16.xpose.msra.mxu0 0
      %645 = vmatprep.subr.bf16.mxu0 0
      %646 = vmatpush1.bf16.xpose.msra.mxu0 0
      %647 = vmatprep.subr.bf16.mxu0 0
      %648 = vmatpush1.bf16.xpose.msra.mxu0 0
      %649 = vmatprep.subr.bf16.mxu0 0
      %650 = vmatpush1.bf16.xpose.msra.mxu0 0
      %651 = vmatprep.subr.bf16.mxu0 0
      %652 = vmatpush1.bf16.xpose.msra.mxu0 0
      %653 = vmatprep.mubr.bf16.mxu0 0
      %654 = vmatmul.mubr.bf16.gmra.mrb[0].mxu0 %v615
      %v655 = vpop.f32.mrb[0].mxu0
      %v656 = vadd.f32 0.0, %v655
      %v657 = vpop.f32.mrb[0].mxu0
      %v658 = vpop.f32.mrb[0].mxu0
      %v659 = vpop.f32.mrb[0].mxu0
      %660 = vdwg.mxu0
      %v661 = vmul.f32 %v656, 0.35355338
      %s662 = scalar_lea.vmem [#allocation2], 8
      %v663 = vld [vmem:[%s662] sm:$0xff]
      %v664 = vsel %vm531, %v661, -inf
      %665 = vmax.xlane.f32.xlu0 %v664
      %v666 = vpop.xlane.xlu0 %665
      %v667 = vmax.f32 %v663, %v666
      %v668 = vsub.f32 %v663, %v667
      %v669 = vmul.f32 %v668, 1.442695
      %v670 = vpow.pop %v669
      %672 = vset.pattern.permute.xlu0 0
      %673 = vperm.xlu0 %672, %v667
      %v674 = vpop.permute.xlu0 %673
      %v676 = vsub.f32 %v661, %v674
      %v677 = vmul.f32 %v676, 1.442695
      %v678 = vpow.pop %v677
      %s679 = scalar_lea.vmem [#allocation3], 8
      %v680 = vld [vmem:[%s679] sm:$0xff]
      %v681 = vmul.f32 %v670, %v680
      %v682 = vsel %vm531, %v678, 0.0
      %683 = vadd.xlane.f32.xlu0 %v682
      %v684 = vpop.xlane.xlu0 %683
      %v685 = vadd.f32 %v681, %v684
      %686 = vst.msk [vmem:[%s679] sm:$0xff] %vm553, %v685
      %s687 = scalar_lea.vmem [#allocation4], 8
      %v688 = vld [vmem:[%s687] sm:$0xff]
      %690 = vset.pattern.permute.xlu0 0
      %691 = vperm.xlu0 %690, %v670
      %v692 = vpop.permute.xlu0 %691
      %v694 = vmul.f32 %v692, %v688
      %v695 = vpack.c.bf16 %v678, %v678
      %v697 = vunpack.c.h.b16 %v485
      %v698 = vpack.c.b16 %v697, %v697
      %v700 = vsel %vm531, %v695, 0
      %v703 = vsel %vm566, %v698, 0
      %705 = vmatprep.subr.bf16.mxu0 0
      %706 = vmatpush1.bf16.msra.mxu0 %v703
      %707 = vmatprep.subr.bf16.mxu0 0
      %708 = vmatpush1.bf16.msra.mxu0 0
      %709 = vmatprep.subr.bf16.mxu0 0
      %710 = vmatpush1.bf16.msra.mxu0 0
      %711 = vmatprep.subr.bf16.mxu0 0
      %712 = vmatpush1.bf16.msra.mxu0 0
      %713 = vmatprep.subr.bf16.mxu0 0
      %714 = vmatpush1.bf16.msra.mxu0 0
      %715 = vmatprep.subr.bf16.mxu0 0
      %716 = vmatpush1.bf16.msra.mxu0 0
      %717 = vmatprep.subr.bf16.mxu0 0
      %718 = vmatpush1.bf16.msra.mxu0 0
      %719 = vmatprep.subr.bf16.mxu0 0
      %720 = vmatpush1.bf16.msra.mxu0 0
      %721 = vmatprep.subr.bf16.mxu0 0
      %722 = vmatpush1.bf16.msra.mxu0 0
      %723 = vmatprep.subr.bf16.mxu0 0
      %724 = vmatpush1.bf16.msra.mxu0 0
      %725 = vmatprep.subr.bf16.mxu0 0
      %726 = vmatpush1.bf16.msra.mxu0 0
      %727 = vmatprep.subr.bf16.mxu0 0
      %728 = vmatpush1.bf16.msra.mxu0 0
      %729 = vmatprep.subr.bf16.mxu0 0
      %730 = vmatpush1.bf16.msra.mxu0 0
      %731 = vmatprep.subr.bf16.mxu0 0
      %732 = vmatpush1.bf16.msra.mxu0 0
      %733 = vmatprep.subr.bf16.mxu0 0
      %734 = vmatpush1.bf16.msra.mxu0 0
      %735 = vmatprep.subr.bf16.mxu0 0
      %736 = vmatpush1.bf16.msra.mxu0 0
      %737 = vmatprep.mubr.bf16.mxu0 0
      %738 = vmatmul.mubr.bf16.gmra.mrb[0].mxu0 %v700
      %v739 = vpop.f32.mrb[0].mxu0
      %v740 = vadd.f32 0.0, %v739
      %v741 = vpop.f32.mrb[0].mxu0
      %v742 = vpop.f32.mrb[0].mxu0
      %v743 = vpop.f32.mrb[0].mxu0
      %744 = vdwg.mxu0
      %v745 = vadd.f32 %v694, %v740
      %746 = vst [vmem:[%s687] sm:$0xff] %v745
      %747 = vst.msk [vmem:[%s662] sm:$0xff] %vm553, %v667
      %748 = vmatprep.subr.bf16.mxu0 0
      %749 = vmatpush1.bf16.xpose.msra.mxu0 %v482
      %750 = vmatprep.subr.bf16.mxu0 0
      %751 = vmatpush1.bf16.xpose.msra.mxu0 0
      %752 = vmatprep.subr.bf16.mxu0 0
      %753 = vmatpush1.bf16.xpose.msra.mxu0 0
      %754 = vmatprep.subr.bf16.mxu0 0
      %755 = vmatpush1.bf16.xpose.msra.mxu0 0
      %756 = vmatprep.subr.bf16.mxu0 0
      %757 = vmatpush1.bf16.xpose.msra.mxu0 0
      %758 = vmatprep.subr.bf16.mxu0 0
      %759 = vmatpush1.bf16.xpose.msra.mxu0 0
      %760 = vmatprep.subr.bf16.mxu0 0
      %761 = vmatpush1.bf16.xpose.msra.mxu0 0
      %762 = vmatprep.subr.bf16.mxu0 0
      %763 = vmatpush1.bf16.xpose.msra.mxu0 0
      %764 = vmatprep.subr.bf16.mxu0 0
      %765 = vmatpush1.bf16.xpose.msra.mxu0 0
      %766 = vmatprep.subr.bf16.mxu0 0
      %767 = vmatpush1.bf16.xpose.msra.mxu0 0
      %768 = vmatprep.subr.bf16.mxu0 0
      %769 = vmatpush1.bf16.xpose.msra.mxu0 0
      %770 = vmatprep.subr.bf16.mxu0 0
      %771 = vmatpush1.bf16.xpose.msra.mxu0 0
      %772 = vmatprep.subr.bf16.mxu0 0
      %773 = vmatpush1.bf16.xpose.msra.mxu0 0
      %774 = vmatprep.subr.bf16.mxu0 0
      %775 = vmatpush1.bf16.xpose.msra.mxu0 0
      %776 = vmatprep.subr.bf16.mxu0 0
      %777 = vmatpush1.bf16.xpose.msra.mxu0 0
      %778 = vmatprep.subr.bf16.mxu0 0
      %779 = vmatpush1.bf16.xpose.msra.mxu0 0
      %780 = vmatprep.mubr.bf16.mxu0 0
      %781 = vmatmul.mubr.bf16.gmra.mrb[0].mxu0 %v478
      %v782 = vpop.f32.mrb[0].mxu0
      %v783 = vadd.f32 0.0, %v782
      %v784 = vpop.f32.mrb[0].mxu0
      %v785 = vpop.f32.mrb[0].mxu0
      %v786 = vpop.f32.mrb[0].mxu0
      %787 = vdwg.mxu0
      %v788 = vmul.f32 %v783, 0.35355338
      %s789 = scalar_lea.vmem [#allocation2], 16
      %v790 = vld [vmem:[%s789] sm:$0xff]
      %v791 = vsel %vm531, %v788, -inf
      %792 = vmax.xlane.f32.xlu0 %v791
      %v793 = vpop.xlane.xlu0 %792
      %v794 = vmax.f32 %v790, %v793
      %v795 = vsub.f32 %v790, %v794
      %v796 = vmul.f32 %v795, 1.442695
      %v797 = vpow.pop %v796
      %799 = vset.pattern.permute.xlu0 0
      %800 = vperm.xlu0 %799, %v794
      %v801 = vpop.permute.xlu0 %800
      %v803 = vsub.f32 %v788, %v801
      %v804 = vmul.f32 %v803, 1.442695
      %v805 = vpow.pop %v804
      %s806 = scalar_lea.vmem [#allocation3], 16
      %v807 = vld [vmem:[%s806] sm:$0xff]
      %v808 = vmul.f32 %v797, %v807
      %v809 = vsel %vm531, %v805, 0.0
      %810 = vadd.xlane.f32.xlu0 %v809
      %v811 = vpop.xlane.xlu0 %810
      %v812 = vadd.f32 %v808, %v811
      %813 = vst.msk [vmem:[%s806] sm:$0xff] %vm553, %v812
      %s814 = scalar_lea.vmem [#allocation4], 16
      %v815 = vld [vmem:[%s814] sm:$0xff]
      %817 = vset.pattern.permute.xlu0 0
      %818 = vperm.xlu0 %817, %v797
      %v819 = vpop.permute.xlu0 %818
      %v821 = vmul.f32 %v819, %v815
      %v822 = vpack.c.bf16 %v805, %v805
      %v824 = vsel %vm531, %v822, 0
      %v827 = vsel %vm566, %v486, 0
      %829 = vmatprep.subr.bf16.mxu0 0
      %830 = vmatpush1.bf16.msra.mxu0 %v827
      %831 = vmatprep.subr.bf16.mxu0 0
      %832 = vmatpush1.bf16.msra.mxu0 0
      %833 = vmatprep.subr.bf16.mxu0 0
      %834 = vmatpush1.bf16.msra.mxu0 0
      %835 = vmatprep.subr.bf16.mxu0 0
      %836 = vmatpush1.bf16.msra.mxu0 0
      %837 = vmatprep.subr.bf16.mxu0 0
      %838 = vmatpush1.bf16.msra.mxu0 0
      %839 = vmatprep.subr.bf16.mxu0 0
      %840 = vmatpush1.bf16.msra.mxu0 0
      %841 = vmatprep.subr.bf16.mxu0 0
      %842 = vmatpush1.bf16.msra.mxu0 0
      %843 = vmatprep.subr.bf16.mxu0 0
      %844 = vmatpush1.bf16.msra.mxu0 0
      %845 = vmatprep.subr.bf16.mxu0 0
      %846 = vmatpush1.bf16.msra.mxu0 0
      %847 = vmatprep.subr.bf16.mxu0 0
      %848 = vmatpush1.bf16.msra.mxu0 0
      %849 = vmatprep.subr.bf16.mxu0 0
      %850 = vmatpush1.bf16.msra.mxu0 0
      %851 = vmatprep.subr.bf16.mxu0 0
      %852 = vmatpush1.bf16.msra.mxu0 0
      %853 = vmatprep.subr.bf16.mxu0 0
      %854 = vmatpush1.bf16.msra.mxu0 0
      %855 = vmatprep.subr.bf16.mxu0 0
      %856 = vmatpush1.bf16.msra.mxu0 0
      %857 = vmatprep.subr.bf16.mxu0 0
      %858 = vmatpush1.bf16.msra.mxu0 0
      %859 = vmatprep.subr.bf16.mxu0 0
      %860 = vmatpush1.bf16.msra.mxu0 0
      %861 = vmatprep.mubr.bf16.mxu0 0
      %862 = vmatmul.mubr.bf16.gmra.mrb[0].mxu0 %v824
      %v863 = vpop.f32.mrb[0].mxu0
      %v864 = vadd.f32 0.0, %v863
      %v865 = vpop.f32.mrb[0].mxu0
      %v866 = vpop.f32.mrb[0].mxu0
      %v867 = vpop.f32.mrb[0].mxu0
      %868 = vdwg.mxu0
      %v869 = vadd.f32 %v821, %v864
      %870 = vst [vmem:[%s814] sm:$0xff] %v869
      %871 = vst.msk [vmem:[%s789] sm:$0xff] %vm553, %v794
      %v873 = vunpack.c.h.b16 %v478
      %v874 = vpack.c.b16 %v873, %v873
      %v877 = vunpack.c.h.b16 %v482
      %v878 = vpack.c.b16 %v877, %v877
      %880 = vmatprep.subr.bf16.mxu0 0
      %881 = vmatpush1.bf16.xpose.msra.mxu0 %v878
      %882 = vmatprep.subr.bf16.mxu0 0
      %883 = vmatpush1.bf16.xpose.msra.mxu0 0
      %884 = vmatprep.subr.bf16.mxu0 0
      %885 = vmatpush1.bf16.xpose.msra.mxu0 0
      %886 = vmatprep.subr.bf16.mxu0 0
      %887 = vmatpush1.bf16.xpose.msra.mxu0 0
      %888 = vmatprep.subr.bf16.mxu0 0
      %889 = vmatpush1.bf16.xpose.msra.mxu0 0
      %890 = vmatprep.subr.bf16.mxu0 0
      %891 = vmatpush1.bf16.xpose.msra.mxu0 0
      %892 = vmatprep.subr.bf16.mxu0 0
      %893 = vmatpush1.bf16.xpose.msra.mxu0 0
      %894 = vmatprep.subr.bf16.mxu0 0
      %895 = vmatpush1.bf16.xpose.msra.mxu0 0
      %896 = vmatprep.subr.bf16.mxu0 0
      %897 = vmatpush1.bf16.xpose.msra.mxu0 0
      %898 = vmatprep.subr.bf16.mxu0 0
      %899 = vmatpush1.bf16.xpose.msra.mxu0 0
      %900 = vmatprep.subr.bf16.mxu0 0
      %901 = vmatpush1.bf16.xpose.msra.mxu0 0
      %902 = vmatprep.subr.bf16.mxu0 0
      %903 = vmatpush1.bf16.xpose.msra.mxu0 0
      %904 = vmatprep.subr.bf16.mxu0 0
      %905 = vmatpush1.bf16.xpose.msra.mxu0 0
      %906 = vmatprep.subr.bf16.mxu0 0
      %907 = vmatpush1.bf16.xpose.msra.mxu0 0
      %908 = vmatprep.subr.bf16.mxu0 0
      %909 = vmatpush1.bf16.xpose.msra.mxu0 0
      %910 = vmatprep.subr.bf16.mxu0 0
      %911 = vmatpush1.bf16.xpose.msra.mxu0 0
      %912 = vmatprep.mubr.bf16.mxu0 0
      %913 = vmatmul.mubr.bf16.gmra.mrb[0].mxu0 %v874
      %v914 = vpop.f32.mrb[0].mxu0
      %v915 = vadd.f32 0.0, %v914
      %v916 = vpop.f32.mrb[0].mxu0
      %v917 = vpop.f32.mrb[0].mxu0
      %v918 = vpop.f32.mrb[0].mxu0
      %919 = vdwg.mxu0
      %v920 = vmul.f32 %v915, 0.35355338
      %s921 = scalar_lea.vmem [#allocation2], 24
      %v922 = vld [vmem:[%s921] sm:$0xff]
      %v923 = vsel %vm531, %v920, -inf
      %924 = vmax.xlane.f32.xlu0 %v923
      %v925 = vpop.xlane.xlu0 %924
      %v926 = vmax.f32 %v922, %v925
      %v927 = vsub.f32 %v922, %v926
      %v928 = vmul.f32 %v927, 1.442695
      %v929 = vpow.pop %v928
      %931 = vset.pattern.permute.xlu0 0
      %932 = vperm.xlu0 %931, %v926
      %v933 = vpop.permute.xlu0 %932
      %v935 = vsub.f32 %v920, %v933
      %v936 = vmul.f32 %v935, 1.442695
      %v937 = vpow.pop %v936
      %s938 = scalar_lea.vmem [#allocation3], 24
      %v939 = vld [vmem:[%s938] sm:$0xff]
      %v940 = vmul.f32 %v929, %v939
      %v941 = vsel %vm531, %v937, 0.0
      %942 = vadd.xlane.f32.xlu0 %v941
      %v943 = vpop.xlane.xlu0 %942
      %v944 = vadd.f32 %v940, %v943
      %945 = vst.msk [vmem:[%s938] sm:$0xff] %vm553, %v944
      %s946 = scalar_lea.vmem [#allocation4], 24
      %v947 = vld [vmem:[%s946] sm:$0xff]
      %949 = vset.pattern.permute.xlu0 0
      %950 = vperm.xlu0 %949, %v929
      %v951 = vpop.permute.xlu0 %950
      %v953 = vmul.f32 %v951, %v947
      %v954 = vpack.c.bf16 %v937, %v937
      %v956 = vunpack.c.h.b16 %v486
      %v957 = vpack.c.b16 %v956, %v956
      %v959 = vsel %vm531, %v954, 0
      %v962 = vsel %vm566, %v957, 0
      %964 = vmatprep.subr.bf16.mxu0 0
      %965 = vmatpush1.bf16.msra.mxu0 %v962
      %966 = vmatprep.subr.bf16.mxu0 0
      %967 = vmatpush1.bf16.msra.mxu0 0
      %968 = vmatprep.subr.bf16.mxu0 0
      %969 = vmatpush1.bf16.msra.mxu0 0
      %970 = vmatprep.subr.bf16.mxu0 0
      %971 = vmatpush1.bf16.msra.mxu0 0
      %972 = vmatprep.subr.bf16.mxu0 0
      %973 = vmatpush1.bf16.msra.mxu0 0
      %974 = vmatprep.subr.bf16.mxu0 0
      %975 = vmatpush1.bf16.msra.mxu0 0
      %976 = vmatprep.subr.bf16.mxu0 0
      %977 = vmatpush1.bf16.msra.mxu0 0
      %978 = vmatprep.subr.bf16.mxu0 0
      %979 = vmatpush1.bf16.msra.mxu0 0
      %980 = vmatprep.subr.bf16.mxu0 0
      %981 = vmatpush1.bf16.msra.mxu0 0
      %982 = vmatprep.subr.bf16.mxu0 0
      %983 = vmatpush1.bf16.msra.mxu0 0
      %984 = vmatprep.subr.bf16.mxu0 0
      %985 = vmatpush1.bf16.msra.mxu0 0
      %986 = vmatprep.subr.bf16.mxu0 0
      %987 = vmatpush1.bf16.msra.mxu0 0
      %988 = vmatprep.subr.bf16.mxu0 0
      %989 = vmatpush1.bf16.msra.mxu0 0
      %990 = vmatprep.subr.bf16.mxu0 0
      %991 = vmatpush1.bf16.msra.mxu0 0
      %992 = vmatprep.subr.bf16.mxu0 0
      %993 = vmatpush1.bf16.msra.mxu0 0
      %994 = vmatprep.subr.bf16.mxu0 0
      %995 = vmatpush1.bf16.msra.mxu0 0
      %996 = vmatprep.mubr.bf16.mxu0 0
      %997 = vmatmul.mubr.bf16.gmra.mrb[0].mxu0 %v959
      %v998 = vpop.f32.mrb[0].mxu0
      %v999 = vadd.f32 0.0, %v998
      %v1000 = vpop.f32.mrb[0].mxu0
      %v1001 = vpop.f32.mrb[0].mxu0
      %v1002 = vpop.f32.mrb[0].mxu0
      %1003 = vdwg.mxu0
      %v1004 = vadd.f32 %v953, %v999
      %1005 = vst [vmem:[%s946] sm:$0xff] %v1004
      %1006 = vst.msk [vmem:[%s921] sm:$0xff] %vm553, %v926
      %1007 = vmatprep.subr.bf16.mxu0 0
      %1008 = vmatpush1.bf16.xpose.msra.mxu0 %v483
      %1009 = vmatprep.subr.bf16.mxu0 0
      %1010 = vmatpush1.bf16.xpose.msra.mxu0 0
      %1011 = vmatprep.subr.bf16.mxu0 0
      %1012 = vmatpush1.bf16.xpose.msra.mxu0 0
      %1013 = vmatprep.subr.bf16.mxu0 0
      %1014 = vmatpush1.bf16.xpose.msra.mxu0 0
      %1015 = vmatprep.subr.bf16.mxu0 0
      %1016 = vmatpush1.bf16.xpose.msra.mxu0 0
      %1017 = vmatprep.subr.bf16.mxu0 0
      %1018 = vmatpush1.bf16.xpose.msra.mxu0 0
      %1019 = vmatprep.subr.bf16.mxu0 0
      %1020 = vmatpush1.bf16.xpose.msra.mxu0 0
      %1021 = vmatprep.subr.bf16.mxu0 0
      %1022 = vmatpush1.bf16.xpose.msra.mxu0 0
      %1023 = vmatprep.subr.bf16.mxu0 0
      %1024 = vmatpush1.bf16.xpose.msra.mxu0 0
      %1025 = vmatprep.subr.bf16.mxu0 0
      %1026 = vmatpush1.bf16.xpose.msra.mxu0 0
      %1027 = vmatprep.subr.bf16.mxu0 0
      %1028 = vmatpush1.bf16.xpose.msra.mxu0 0
      %1029 = vmatprep.subr.bf16.mxu0 0
      %1030 = vmatpush1.bf16.xpose.msra.mxu0 0
      %1031 = vmatprep.subr.bf16.mxu0 0
      %1032 = vmatpush1.bf16.xpose.msra.mxu0 0
      %1033 = vmatprep.subr.bf16.mxu0 0
      %1034 = vmatpush1.bf16.xpose.msra.mxu0 0
      %1035 = vmatprep.subr.bf16.mxu0 0
      %1036 = vmatpush1.bf16.xpose.msra.mxu0 0
      %1037 = vmatprep.subr.bf16.mxu0 0
      %1038 = vmatpush1.bf16.xpose.msra.mxu0 0
      %1039 = vmatprep.mubr.bf16.mxu0 0
      %1040 = vmatmul.mubr.bf16.gmra.mrb[0].mxu0 %v479
      %v1041 = vpop.f32.mrb[0].mxu0
      %v1042 = vadd.f32 0.0, %v1041
      %v1043 = vpop.f32.mrb[0].mxu0
      %v1044 = vpop.f32.mrb[0].mxu0
      %v1045 = vpop.f32.mrb[0].mxu0
      %1046 = vdwg.mxu0
      %v1047 = vmul.f32 %v1042, 0.35355338
      %s1048 = scalar_lea.vmem [#allocation2], 32
      %v1049 = vld [vmem:[%s1048] sm:$0xff]
      %v1050 = vsel %vm531, %v1047, -inf
      %1051 = vmax.xlane.f32.xlu0 %v1050
      %v1052 = vpop.xlane.xlu0 %1051
      %v1053 = vmax.f32 %v1049, %v1052
      %v1054 = vsub.f32 %v1049, %v1053
      %v1055 = vmul.f32 %v1054, 1.442695
      %v1056 = vpow.pop %v1055
      %1058 = vset.pattern.permute.xlu0 0
      %1059 = vperm.xlu0 %1058, %v1053
      %v1060 = vpop.permute.xlu0 %1059
      %v1062 = vsub.f32 %v1047, %v1060
      %v1063 = vmul.f32 %v1062, 1.442695
      %v1064 = vpow.pop %v1063
      %s1065 = scalar_lea.vmem [#allocation3], 32
      %v1066 = vld [vmem:[%s1065] sm:$0xff]
      %v1067 = vmul.f32 %v1056, %v1066
      %v1068 = vsel %vm531, %v1064, 0.0
      %1069 = vadd.xlane.f32.xlu0 %v1068
      %v1070 = vpop.xlane.xlu0 %1069
      %v1071 = vadd.f32 %v1067, %v1070
      %1072 = vst.msk [vmem:[%s1065] sm:$0xff] %vm553, %v1071
      %s1073 = scalar_lea.vmem [#allocation4], 32
      %v1074 = vld [vmem:[%s1073] sm:$0xff]
      %1076 = vset.pattern.permute.xlu0 0
      %1077 = vperm.xlu0 %1076, %v1056
      %v1078 = vpop.permute.xlu0 %1077
      %v1080 = vmul.f32 %v1078, %v1074
      %v1081 = vpack.c.bf16 %v1064, %v1064
      %v1083 = vsel %vm531, %v1081, 0
      %v1086 = vsel %vm566, %v487, 0
      %1088 = vmatprep.subr.bf16.mxu0 0
      %1089 = vmatpush1.bf16.msra.mxu0 %v1086
      %1090 = vmatprep.subr.bf16.mxu0 0
      %1091 = vmatpush1.bf16.msra.mxu0 0
      %1092 = vmatprep.subr.bf16.mxu0 0
      %1093 = vmatpush1.bf16.msra.mxu0 0
      %1094 = vmatprep.subr.bf16.mxu0 0
      %1095 = vmatpush1.bf16.msra.mxu0 0
      %1096 = vmatprep.subr.bf16.mxu0 0
      %1097 = vmatpush1.bf16.msra.mxu0 0
      %1098 = vmatprep.subr.bf16.mxu0 0
      %1099 = vmatpush1.bf16.msra.mxu0 0
      %1100 = vmatprep.subr.bf16.mxu0 0
      %1101 = vmatpush1.bf16.msra.mxu0 0
      %1102 = vmatprep.subr.bf16.mxu0 0
      %1103 = vmatpush1.bf16.msra.mxu0 0
      %1104 = vmatprep.subr.bf16.mxu0 0
      %1105 = vmatpush1.bf16.msra.mxu0 0
      %1106 = vmatprep.subr.bf16.mxu0 0
      %1107 = vmatpush1.bf16.msra.mxu0 0
      %1108 = vmatprep.subr.bf16.mxu0 0
      %1109 = vmatpush1.bf16.msra.mxu0 0
      %1110 = vmatprep.subr.bf16.mxu0 0
      %1111 = vmatpush1.bf16.msra.mxu0 0
      %1112 = vmatprep.subr.bf16.mxu0 0
      %1113 = vmatpush1.bf16.msra.mxu0 0
      %1114 = vmatprep.subr.bf16.mxu0 0
      %1115 = vmatpush1.bf16.msra.mxu0 0
      %1116 = vmatprep.subr.bf16.mxu0 0
      %1117 = vmatpush1.bf16.msra.mxu0 0
      %1118 = vmatprep.subr.bf16.mxu0 0
      %1119 = vmatpush1.bf16.msra.mxu0 0
      %1120 = vmatprep.mubr.bf16.mxu0 0
      %1121 = vmatmul.mubr.bf16.gmra.mrb[0].mxu0 %v1083
      %v1122 = vpop.f32.mrb[0].mxu0
      %v1123 = vadd.f32 0.0, %v1122
      %v1124 = vpop.f32.mrb[0].mxu0
      %v1125 = vpop.f32.mrb[0].mxu0
      %v1126 = vpop.f32.mrb[0].mxu0
      %1127 = vdwg.mxu0
      %v1128 = vadd.f32 %v1080, %v1123
      %1129 = vst [vmem:[%s1073] sm:$0xff] %v1128
      %1130 = vst.msk [vmem:[%s1048] sm:$0xff] %vm553, %v1053
      %v1132 = vunpack.c.h.b16 %v479
      %v1133 = vpack.c.b16 %v1132, %v1132
      %v1136 = vunpack.c.h.b16 %v483
      %v1137 = vpack.c.b16 %v1136, %v1136
      %1139 = vmatprep.subr.bf16.mxu0 0
      %1140 = vmatpush1.bf16.xpose.msra.mxu0 %v1137
      %1141 = vmatprep.subr.bf16.mxu0 0
      %1142 = vmatpush1.bf16.xpose.msra.mxu0 0
      %1143 = vmatprep.subr.bf16.mxu0 0
      %1144 = vmatpush1.bf16.xpose.msra.mxu0 0
      %1145 = vmatprep.subr.bf16.mxu0 0
      %1146 = vmatpush1.bf16.xpose.msra.mxu0 0
      %1147 = vmatprep.subr.bf16.mxu0 0
      %1148 = vmatpush1.bf16.xpose.msra.mxu0 0
      %1149 = vmatprep.subr.bf16.mxu0 0
      %1150 = vmatpush1.bf16.xpose.msra.mxu0 0
      %1151 = vmatprep.subr.bf16.mxu0 0
      %1152 = vmatpush1.bf16.xpose.msra.mxu0 0
      %1153 = vmatprep.subr.bf16.mxu0 0
      %1154 = vmatpush1.bf16.xpose.msra.mxu0 0
      %1155 = vmatprep.subr.bf16.mxu0 0
      %1156 = vmatpush1.bf16.xpose.msra.mxu0 0
      %1157 = vmatprep.subr.bf16.mxu0 0
      %1158 = vmatpush1.bf16.xpose.msra.mxu0 0
      %1159 = vmatprep.subr.bf16.mxu0 0
      %1160 = vmatpush1.bf16.xpose.msra.mxu0 0
      %1161 = vmatprep.subr.bf16.mxu0 0
      %1162 = vmatpush1.bf16.xpose.msra.mxu0 0
      %1163 = vmatprep.subr.bf16.mxu0 0
      %1164 = vmatpush1.bf16.xpose.msra.mxu0 0
      %1165 = vmatprep.subr.bf16.mxu0 0
      %1166 = vmatpush1.bf16.xpose.msra.mxu0 0
      %1167 = vmatprep.subr.bf16.mxu0 0
      %1168 = vmatpush1.bf16.xpose.msra.mxu0 0
      %1169 = vmatprep.subr.bf16.mxu0 0
      %1170 = vmatpush1.bf16.xpose.msra.mxu0 0
      %1171 = vmatprep.mubr.bf16.mxu0 0
      %1172 = vmatmul.mubr.bf16.gmra.mrb[0].mxu0 %v1133
      %v1173 = vpop.f32.mrb[0].mxu0
      %v1174 = vadd.f32 0.0, %v1173
      %v1175 = vpop.f32.mrb[0].mxu0
      %v1176 = vpop.f32.mrb[0].mxu0
      %v1177 = vpop.f32.mrb[0].mxu0
      %1178 = vdwg.mxu0
      %v1179 = vmul.f32 %v1174, 0.35355338
      %s1180 = scalar_lea.vmem [#allocation2], 40
      %v1181 = vld [vmem:[%s1180] sm:$0xff]
      %v1182 = vsel %vm531, %v1179, -inf
      %1183 = vmax.xlane.f32.xlu0 %v1182
      %v1184 = vpop.xlane.xlu0 %1183
      %v1185 = vmax.f32 %v1181, %v1184
      %v1186 = vsub.f32 %v1181, %v1185
      %v1187 = vmul.f32 %v1186, 1.442695
      %v1188 = vpow.pop %v1187
      %1190 = vset.pattern.permute.xlu0 0
      %1191 = vperm.xlu0 %1190, %v1185
      %v1192 = vpop.permute.xlu0 %1191
      %v1194 = vsub.f32 %v1179, %v1192
      %v1195 = vmul.f32 %v1194, 1.442695
      %v1196 = vpow.pop %v1195
      %s1197 = scalar_lea.vmem [#allocation3], 40
      %v1198 = vld [vmem:[%s1197] sm:$0xff]
      %v1199 = vmul.f32 %v1188, %v1198
      %v1200 = vsel %vm531, %v1196, 0.0
      %1201 = vadd.xlane.f32.xlu0 %v1200
      %v1202 = vpop.xlane.xlu0 %1201
      %v1203 = vadd.f32 %v1199, %v1202
      %1204 = vst.msk [vmem:[%s1197] sm:$0xff] %vm553, %v1203
      %s1205 = scalar_lea.vmem [#allocation4], 40
      %v1206 = vld [vmem:[%s1205] sm:$0xff]
      %1208 = vset.pattern.permute.xlu0 0
      %1209 = vperm.xlu0 %1208, %v1188
      %v1210 = vpop.permute.xlu0 %1209
      %v1212 = vmul.f32 %v1210, %v1206
      %v1213 = vpack.c.bf16 %v1196, %v1196
      %v1215 = vunpack.c.h.b16 %v487
      %v1216 = vpack.c.b16 %v1215, %v1215
      %v1218 = vsel %vm531, %v1213, 0
      %v1221 = vsel %vm566, %v1216, 0
      %1223 = vmatprep.subr.bf16.mxu0 0
      %1224 = vmatpush1.bf16.msra.mxu0 %v1221
      %1225 = vmatprep.subr.bf16.mxu0 0
      %1226 = vmatpush1.bf16.msra.mxu0 0
      %1227 = vmatprep.subr.bf16.mxu0 0
      %1228 = vmatpush1.bf16.msra.mxu0 0
      %1229 = vmatprep.subr.bf16.mxu0 0
      %1230 = vmatpush1.bf16.msra.mxu0 0
      %1231 = vmatprep.subr.bf16.mxu0 0
      %1232 = vmatpush1.bf16.msra.mxu0 0
      %1233 = vmatprep.subr.bf16.mxu0 0
      %1234 = vmatpush1.bf16.msra.mxu0 0
      %1235 = vmatprep.subr.bf16.mxu0 0
      %1236 = vmatpush1.bf16.msra.mxu0 0
      %1237 = vmatprep.subr.bf16.mxu0 0
      %1238 = vmatpush1.bf16.msra.mxu0 0
      %1239 = vmatprep.subr.bf16.mxu0 0
      %1240 = vmatpush1.bf16.msra.mxu0 0
      %1241 = vmatprep.subr.bf16.mxu0 0
      %1242 = vmatpush1.bf16.msra.mxu0 0
      %1243 = vmatprep.subr.bf16.mxu0 0
      %1244 = vmatpush1.bf16.msra.mxu0 0
      %1245 = vmatprep.subr.bf16.mxu0 0
      %1246 = vmatpush1.bf16.msra.mxu0 0
      %1247 = vmatprep.subr.bf16.mxu0 0
      %1248 = vmatpush1.bf16.msra.mxu0 0
      %1249 = vmatprep.subr.bf16.mxu0 0
      %1250 = vmatpush1.bf16.msra.mxu0 0
      %1251 = vmatprep.subr.bf16.mxu0 0
      %1252 = vmatpush1.bf16.msra.mxu0 0
      %1253 = vmatprep.subr.bf16.mxu0 0
      %1254 = vmatpush1.bf16.msra.mxu0 0
      %1255 = vmatprep.mubr.bf16.mxu0 0
      %1256 = vmatmul.mubr.bf16.gmra.mrb[0].mxu0 %v1218
      %v1257 = vpop.f32.mrb[0].mxu0
      %v1258 = vadd.f32 0.0, %v1257
      %v1259 = vpop.f32.mrb[0].mxu0
      %v1260 = vpop.f32.mrb[0].mxu0
      %v1261 = vpop.f32.mrb[0].mxu0
      %1262 = vdwg.mxu0
      %v1263 = vadd.f32 %v1212, %v1258
      %1264 = vst [vmem:[%s1205] sm:$0xff] %v1263
      %1265 = vst.msk [vmem:[%s1180] sm:$0xff] %vm553, %v1185
      %1266 = vmatprep.subr.bf16.mxu0 0
      %1267 = vmatpush1.bf16.xpose.msra.mxu0 %v484
      %1268 = vmatprep.subr.bf16.mxu0 0
      %1269 = vmatpush1.bf16.xpose.msra.mxu0 0
      %1270 = vmatprep.subr.bf16.mxu0 0
      %1271 = vmatpush1.bf16.xpose.msra.mxu0 0
      %1272 = vmatprep.subr.bf16.mxu0 0
      %1273 = vmatpush1.bf16.xpose.msra.mxu0 0
      %1274 = vmatprep.subr.bf16.mxu0 0
      %1275 = vmatpush1.bf16.xpose.msra.mxu0 0
      %1276 = vmatprep.subr.bf16.mxu0 0
      %1277 = vmatpush1.bf16.xpose.msra.mxu0 0
      %1278 = vmatprep.subr.bf16.mxu0 0
      %1279 = vmatpush1.bf16.xpose.msra.mxu0 0
      %1280 = vmatprep.subr.bf16.mxu0 0
      %1281 = vmatpush1.bf16.xpose.msra.mxu0 0
      %1282 = vmatprep.subr.bf16.mxu0 0
      %1283 = vmatpush1.bf16.xpose.msra.mxu0 0
      %1284 = vmatprep.subr.bf16.mxu0 0
      %1285 = vmatpush1.bf16.xpose.msra.mxu0 0
      %1286 = vmatprep.subr.bf16.mxu0 0
      %1287 = vmatpush1.bf16.xpose.msra.mxu0 0
      %1288 = vmatprep.subr.bf16.mxu0 0
      %1289 = vmatpush1.bf16.xpose.msra.mxu0 0
      %1290 = vmatprep.subr.bf16.mxu0 0
      %1291 = vmatpush1.bf16.xpose.msra.mxu0 0
      %1292 = vmatprep.subr.bf16.mxu0 0
      %1293 = vmatpush1.bf16.xpose.msra.mxu0 0
      %1294 = vmatprep.subr.bf16.mxu0 0
      %1295 = vmatpush1.bf16.xpose.msra.mxu0 0
      %1296 = vmatprep.subr.bf16.mxu0 0
      %1297 = vmatpush1.bf16.xpose.msra.mxu0 0
      %1298 = vmatprep.mubr.bf16.mxu0 0
      %1299 = vmatmul.mubr.bf16.gmra.mrb[0].mxu0 %v480
      %v1300 = vpop.f32.mrb[0].mxu0
      %v1301 = vadd.f32 0.0, %v1300
      %v1302 = vpop.f32.mrb[0].mxu0
      %v1303 = vpop.f32.mrb[0].mxu0
      %v1304 = vpop.f32.mrb[0].mxu0
      %1305 = vdwg.mxu0
      %v1306 = vmul.f32 %v1301, 0.35355338
      %s1307 = scalar_lea.vmem [#allocation2], 48
      %v1308 = vld [vmem:[%s1307] sm:$0xff]
      %v1309 = vsel %vm531, %v1306, -inf
      %1310 = vmax.xlane.f32.xlu0 %v1309
      %v1311 = vpop.xlane.xlu0 %1310
      %v1312 = vmax.f32 %v1308, %v1311
      %v1313 = vsub.f32 %v1308, %v1312
      %v1314 = vmul.f32 %v1313, 1.442695
      %v1315 = vpow.pop %v1314
      %1317 = vset.pattern.permute.xlu0 0
      %1318 = vperm.xlu0 %1317, %v1312
      %v1319 = vpop.permute.xlu0 %1318
      %v1321 = vsub.f32 %v1306, %v1319
      %v1322 = vmul.f32 %v1321, 1.442695
      %v1323 = vpow.pop %v1322
      %s1324 = scalar_lea.vmem [#allocation3], 48
      %v1325 = vld [vmem:[%s1324] sm:$0xff]
      %v1326 = vmul.f32 %v1315, %v1325
      %v1327 = vsel %vm531, %v1323, 0.0
      %1328 = vadd.xlane.f32.xlu0 %v1327
      %v1329 = vpop.xlane.xlu0 %1328
      %v1330 = vadd.f32 %v1326, %v1329
      %1331 = vst.msk [vmem:[%s1324] sm:$0xff] %vm553, %v1330
      %s1332 = scalar_lea.vmem [#allocation4], 48
      %v1333 = vld [vmem:[%s1332] sm:$0xff]
      %1335 = vset.pattern.permute.xlu0 0
      %1336 = vperm.xlu0 %1335, %v1315
      %v1337 = vpop.permute.xlu0 %1336
      %v1339 = vmul.f32 %v1337, %v1333
      %v1340 = vpack.c.bf16 %v1323, %v1323
      %v1342 = vsel %vm531, %v1340, 0
      %v1345 = vsel %vm566, %v488, 0
      %1347 = vmatprep.subr.bf16.mxu0 0
      %1348 = vmatpush1.bf16.msra.mxu0 %v1345
      %1349 = vmatprep.subr.bf16.mxu0 0
      %1350 = vmatpush1.bf16.msra.mxu0 0
      %1351 = vmatprep.subr.bf16.mxu0 0
      %1352 = vmatpush1.bf16.msra.mxu0 0
      %1353 = vmatprep.subr.bf16.mxu0 0
      %1354 = vmatpush1.bf16.msra.mxu0 0
      %1355 = vmatprep.subr.bf16.mxu0 0
      %1356 = vmatpush1.bf16.msra.mxu0 0
      %1357 = vmatprep.subr.bf16.mxu0 0
      %1358 = vmatpush1.bf16.msra.mxu0 0
      %1359 = vmatprep.subr.bf16.mxu0 0
      %1360 = vmatpush1.bf16.msra.mxu0 0
      %1361 = vmatprep.subr.bf16.mxu0 0
      %1362 = vmatpush1.bf16.msra.mxu0 0
      %1363 = vmatprep.subr.bf16.mxu0 0
      %1364 = vmatpush1.bf16.msra.mxu0 0
      %1365 = vmatprep.subr.bf16.mxu0 0
      %1366 = vmatpush1.bf16.msra.mxu0 0
      %1367 = vmatprep.subr.bf16.mxu0 0
      %1368 = vmatpush1.bf16.msra.mxu0 0
      %1369 = vmatprep.subr.bf16.mxu0 0
      %1370 = vmatpush1.bf16.msra.mxu0 0
      %1371 = vmatprep.subr.bf16.mxu0 0
      %1372 = vmatpush1.bf16.msra.mxu0 0
      %1373 = vmatprep.subr.bf16.mxu0 0
      %1374 = vmatpush1.bf16.msra.mxu0 0
      %1375 = vmatprep.subr.bf16.mxu0 0
      %1376 = vmatpush1.bf16.msra.mxu0 0
      %1377 = vmatprep.subr.bf16.mxu0 0
      %1378 = vmatpush1.bf16.msra.mxu0 0
      %1379 = vmatprep.mubr.bf16.mxu0 0
      %1380 = vmatmul.mubr.bf16.gmra.mrb[0].mxu0 %v1342
      %v1381 = vpop.f32.mrb[0].mxu0
      %v1382 = vadd.f32 0.0, %v1381
      %v1383 = vpop.f32.mrb[0].mxu0
      %v1384 = vpop.f32.mrb[0].mxu0
      %v1385 = vpop.f32.mrb[0].mxu0
      %1386 = vdwg.mxu0
      %v1387 = vadd.f32 %v1339, %v1382
      %1388 = vst [vmem:[%s1332] sm:$0xff] %v1387
      %1389 = vst.msk [vmem:[%s1307] sm:$0xff] %vm553, %v1312
      %v1391 = vunpack.c.h.b16 %v480
      %v1392 = vpack.c.b16 %v1391, %v1391
      %v1395 = vunpack.c.h.b16 %v484
      %v1396 = vpack.c.b16 %v1395, %v1395
      %1398 = vmatprep.subr.bf16.mxu0 0
      %1399 = vmatpush1.bf16.xpose.msra.mxu0 %v1396
      %1400 = vmatprep.subr.bf16.mxu0 0
      %1401 = vmatpush1.bf16.xpose.msra.mxu0 0
      %1402 = vmatprep.subr.bf16.mxu0 0
      %1403 = vmatpush1.bf16.xpose.msra.mxu0 0
      %1404 = vmatprep.subr.bf16.mxu0 0
      %1405 = vmatpush1.bf16.xpose.msra.mxu0 0
      %1406 = vmatprep.subr.bf16.mxu0 0
      %1407 = vmatpush1.bf16.xpose.msra.mxu0 0
      %1408 = vmatprep.subr.bf16.mxu0 0
      %1409 = vmatpush1.bf16.xpose.msra.mxu0 0
      %1410 = vmatprep.subr.bf16.mxu0 0
      %1411 = vmatpush1.bf16.xpose.msra.mxu0 0
      %1412 = vmatprep.subr.bf16.mxu0 0
      %1413 = vmatpush1.bf16.xpose.msra.mxu0 0
      %1414 = vmatprep.subr.bf16.mxu0 0
      %1415 = vmatpush1.bf16.xpose.msra.mxu0 0
      %1416 = vmatprep.subr.bf16.mxu0 0
      %1417 = vmatpush1.bf16.xpose.msra.mxu0 0
      %1418 = vmatprep.subr.bf16.mxu0 0
      %1419 = vmatpush1.bf16.xpose.msra.mxu0 0
      %1420 = vmatprep.subr.bf16.mxu0 0
      %1421 = vmatpush1.bf16.xpose.msra.mxu0 0
      %1422 = vmatprep.subr.bf16.mxu0 0
      %1423 = vmatpush1.bf16.xpose.msra.mxu0 0
      %1424 = vmatprep.subr.bf16.mxu0 0
      %1425 = vmatpush1.bf16.xpose.msra.mxu0 0
      %1426 = vmatprep.subr.bf16.mxu0 0
      %1427 = vmatpush1.bf16.xpose.msra.mxu0 0
      %1428 = vmatprep.subr.bf16.mxu0 0
      %1429 = vmatpush1.bf16.xpose.msra.mxu0 0
      %1430 = vmatprep.mubr.bf16.mxu0 0
      %1431 = vmatmul.mubr.bf16.gmra.mrb[0].mxu0 %v1392
      %v1432 = vpop.f32.mrb[0].mxu0
      %v1433 = vadd.f32 0.0, %v1432
      %v1434 = vpop.f32.mrb[0].mxu0
      %v1435 = vpop.f32.mrb[0].mxu0
      %v1436 = vpop.f32.mrb[0].mxu0
      %1437 = vdwg.mxu0
      %v1438 = vmul.f32 %v1433, 0.35355338
      %s1439 = scalar_lea.vmem [#allocation2], 56
      %v1440 = vld [vmem:[%s1439] sm:$0xff]
      %v1441 = vsel %vm531, %v1438, -inf
      %1442 = vmax.xlane.f32.xlu0 %v1441
      %v1443 = vpop.xlane.xlu0 %1442
      %v1444 = vmax.f32 %v1440, %v1443
      %v1445 = vsub.f32 %v1440, %v1444
      %v1446 = vmul.f32 %v1445, 1.442695
      %v1447 = vpow.pop %v1446
      %1449 = vset.pattern.permute.xlu0 0
      %1450 = vperm.xlu0 %1449, %v1444
      %v1451 = vpop.permute.xlu0 %1450
      %v1453 = vsub.f32 %v1438, %v1451
      %v1454 = vmul.f32 %v1453, 1.442695
      %v1455 = vpow.pop %v1454
      %s1456 = scalar_lea.vmem [#allocation3], 56
      %v1457 = vld [vmem:[%s1456] sm:$0xff]
      %v1458 = vmul.f32 %v1447, %v1457
      %v1459 = vsel %vm531, %v1455, 0.0
      %1460 = vadd.xlane.f32.xlu0 %v1459
      %v1461 = vpop.xlane.xlu0 %1460
      %v1462 = vadd.f32 %v1458, %v1461
      %1463 = vst.msk [vmem:[%s1456] sm:$0xff] %vm553, %v1462
      %s1464 = scalar_lea.vmem [#allocation4], 56
      %v1465 = vld [vmem:[%s1464] sm:$0xff]
      %1467 = vset.pattern.permute.xlu0 0
      %1468 = vperm.xlu0 %1467, %v1447
      %v1469 = vpop.permute.xlu0 %1468
      %v1471 = vmul.f32 %v1469, %v1465
      %v1472 = vpack.c.bf16 %v1455, %v1455
      %v1474 = vunpack.c.h.b16 %v488
      %v1475 = vpack.c.b16 %v1474, %v1474
      %v1477 = vsel %vm531, %v1472, 0
      %v1480 = vsel %vm566, %v1475, 0
      %1482 = vmatprep.subr.bf16.mxu0 0
      %1483 = vmatpush1.bf16.msra.mxu0 %v1480
      %1484 = vmatprep.subr.bf16.mxu0 0
      %1485 = vmatpush1.bf16.msra.mxu0 0
      %1486 = vmatprep.subr.bf16.mxu0 0
      %1487 = vmatpush1.bf16.msra.mxu0 0
      %1488 = vmatprep.subr.bf16.mxu0 0
      %1489 = vmatpush1.bf16.msra.mxu0 0
      %1490 = vmatprep.subr.bf16.mxu0 0
      %1491 = vmatpush1.bf16.msra.mxu0 0
      %1492 = vmatprep.subr.bf16.mxu0 0
      %1493 = vmatpush1.bf16.msra.mxu0 0
      %1494 = vmatprep.subr.bf16.mxu0 0
      %1495 = vmatpush1.bf16.msra.mxu0 0
      %1496 = vmatprep.subr.bf16.mxu0 0
      %1497 = vmatpush1.bf16.msra.mxu0 0
      %1498 = vmatprep.subr.bf16.mxu0 0
      %1499 = vmatpush1.bf16.msra.mxu0 0
      %1500 = vmatprep.subr.bf16.mxu0 0
      %1501 = vmatpush1.bf16.msra.mxu0 0
      %1502 = vmatprep.subr.bf16.mxu0 0
      %1503 = vmatpush1.bf16.msra.mxu0 0
      %1504 = vmatprep.subr.bf16.mxu0 0
      %1505 = vmatpush1.bf16.msra.mxu0 0
      %1506 = vmatprep.subr.bf16.mxu0 0
      %1507 = vmatpush1.bf16.msra.mxu0 0
      %1508 = vmatprep.subr.bf16.mxu0 0
      %1509 = vmatpush1.bf16.msra.mxu0 0
      %1510 = vmatprep.subr.bf16.mxu0 0
      %1511 = vmatpush1.bf16.msra.mxu0 0
      %1512 = vmatprep.subr.bf16.mxu0 0
      %1513 = vmatpush1.bf16.msra.mxu0 0
      %1514 = vmatprep.mubr.bf16.mxu0 0
      %1515 = vmatmul.mubr.bf16.gmra.mrb[0].mxu0 %v1477
      %v1516 = vpop.f32.mrb[0].mxu0
      %v1517 = vadd.f32 0.0, %v1516
      %v1518 = vpop.f32.mrb[0].mxu0
      %v1519 = vpop.f32.mrb[0].mxu0
      %v1520 = vpop.f32.mrb[0].mxu0
      %1521 = vdwg.mxu0
      %v1522 = vadd.f32 %v1471, %v1517
      %1523 = vst [vmem:[%s1464] sm:$0xff] %v1522
      %1524 = vst.msk [vmem:[%s1439] sm:$0xff] %vm553, %v1444
      // Predicated region
      $region57: #{custom_tokenizer_forward.8} parent=51 // pred_check
        %p1525 = pneg %p448
      $region58: #{custom_tokenizer_forward.8} parent=51 // pred_check_branch
        %1527 = sbr.rel (%p1525) target = $region60
      $region59: #{custom_tokenizer_forward.8} parent=51 // pred_region
        %v1528 = vld [vmem:[%s439] sm:$0xff]
        %v1529 = vld [vmem:[%s5] sm:$0x1]
        %v1531 = vlaneseq
        %v1532 = vshrl.u32 %v1531, 7
        %v1533 = vsub.s32 0, %v1532
        %v1534 = vrot.slane %v1529, %v1533
        %v1536 = vadd.f32 %v1528, %v1534
        %v1537 = vld [vmem:[#allocation3] sm:$0xff]
        %v1538 = vrcp.pop %v1537
        %v1539 = vld [vmem:[#allocation4] sm:$0xff]
        %1541 = vset.pattern.permute.xlu0 0
        %1542 = vperm.xlu0 %1541, %v1538
        %v1543 = vpop.permute.xlu0 %1542
        %v1545 = vmul.f32 %v1539, %v1543
        %v1546 = vpack.c.bf16 %v1545, %v1545
        %v1547 = vld [vmem:[%s4] sm:$0xf]
        %v1548 = vld [vmem:[%s4 + $0x4] sm:$0xf]
        %v1549 = vld [vmem:[%s4 + $0x8] sm:$0xf]
        %v1550 = vld [vmem:[%s4 + $0xc] sm:$0xf]
        %v1551 = vld [vmem:[%s4 + $0x10] sm:$0xf]
        %v1552 = vld [vmem:[%s4 + $0x14] sm:$0xf]
        %v1553 = vld [vmem:[%s4 + $0x18] sm:$0xf]
        %v1554 = vld [vmem:[%s4 + $0x1c] sm:$0xf]
        %v1555 = vld [vmem:[%s4 + $0x20] sm:$0xf]
        %v1556 = vld [vmem:[%s4 + $0x24] sm:$0xf]
        %v1557 = vld [vmem:[%s4 + $0x28] sm:$0xf]
        %v1558 = vld [vmem:[%s4 + $0x2c] sm:$0xf]
        %v1559 = vld [vmem:[%s4 + $0x30] sm:$0xf]
        %v1560 = vld [vmem:[%s4 + $0x34] sm:$0xf]
        %v1561 = vld [vmem:[%s4 + $0x38] sm:$0xf]
        %v1562 = vld [vmem:[%s4 + $0x3c] sm:$0xf]
        %v1579 = vunpack.c.l.b16 %v1547
        %v1580 = vunpack.c.l.b16 %v1548
        %v1581 = vunpack.c.l.b16 %v1549
        %v1582 = vunpack.c.l.b16 %v1550
        %v1583 = vunpack.c.l.b16 %v1551
        %v1584 = vunpack.c.l.b16 %v1552
        %v1585 = vunpack.c.l.b16 %v1553
        %v1586 = vunpack.c.l.b16 %v1554
        %v1587 = vunpack.c.l.b16 %v1555
        %v1588 = vunpack.c.l.b16 %v1556
        %v1589 = vunpack.c.l.b16 %v1557
        %v1590 = vunpack.c.l.b16 %v1558
        %v1591 = vunpack.c.l.b16 %v1559
        %v1592 = vunpack.c.l.b16 %v1560
        %v1593 = vunpack.c.l.b16 %v1561
        %v1594 = vunpack.c.l.b16 %v1562
        %v1595 = vpack.c.b16 %v1580, %v1579
        %v1596 = vpack.c.b16 %v1582, %v1581
        %v1597 = vpack.c.b16 %v1584, %v1583
        %v1598 = vpack.c.b16 %v1586, %v1585
        %v1599 = vpack.c.b16 %v1588, %v1587
        %v1600 = vpack.c.b16 %v1590, %v1589
        %v1601 = vpack.c.b16 %v1592, %v1591
        %v1602 = vpack.c.b16 %v1594, %v1593
        %1611 = vmatprep.subr.bf16.mxu0 0
        %1612 = vmatpush1.bf16.msra.mxu0 %v1595
        %1613 = vmatprep.subr.bf16.mxu0 0
        %1614 = vmatpush1.bf16.msra.mxu0 %v1596
        %1615 = vmatprep.subr.bf16.mxu0 0
        %1616 = vmatpush1.bf16.msra.mxu0 %v1597
        %1617 = vmatprep.subr.bf16.mxu0 0
        %1618 = vmatpush1.bf16.msra.mxu0 %v1598
        %1619 = vmatprep.subr.bf16.mxu0 0
        %1620 = vmatpush1.bf16.msra.mxu0 %v1599
        %1621 = vmatprep.subr.bf16.mxu0 0
        %1622 = vmatpush1.bf16.msra.mxu0 %v1600
        %1623 = vmatprep.subr.bf16.mxu0 0
        %1624 = vmatpush1.bf16.msra.mxu0 %v1601
        %1625 = vmatprep.subr.bf16.mxu0 0
        %1626 = vmatpush1.bf16.msra.mxu0 %v1602
        %1627 = vmatprep.subr.bf16.mxu0 0
        %1628 = vmatpush1.bf16.msra.mxu0 0
        %1629 = vmatprep.subr.bf16.mxu0 0
        %1630 = vmatpush1.bf16.msra.mxu0 0
        %1631 = vmatprep.subr.bf16.mxu0 0
        %1632 = vmatpush1.bf16.msra.mxu0 0
        %1633 = vmatprep.subr.bf16.mxu0 0
        %1634 = vmatpush1.bf16.msra.mxu0 0
        %1635 = vmatprep.subr.bf16.mxu0 0
        %1636 = vmatpush1.bf16.msra.mxu0 0
        %1637 = vmatprep.subr.bf16.mxu0 0
        %1638 = vmatpush1.bf16.msra.mxu0 0
        %1639 = vmatprep.subr.bf16.mxu0 0
        %1640 = vmatpush1.bf16.msra.mxu0 0
        %1641 = vmatprep.subr.bf16.mxu0 0
        %1642 = vmatpush1.bf16.msra.mxu0 0
        %1643 = vmatprep.mubr.bf16.mxu0 0
        %1644 = vmatmul.mubr.bf16.gmra.mrb[0].mxu0 %v1546
        %v1645 = vpop.f32.mrb[0].mxu0
        %v1646 = vadd.f32 0.0, %v1645
        %v1647 = vpop.f32.mrb[0].mxu0
        %v1648 = vpop.f32.mrb[0].mxu0
        %v1649 = vpop.f32.mrb[0].mxu0
        %1650 = vdwg.mxu0
        %v1651 = vadd.f32 %v1536, %v1646
        %v1652 = vld [vmem:[%s679] sm:$0xff]
        %v1653 = vrcp.pop %v1652
        %v1654 = vld [vmem:[%s687] sm:$0xff]
        %1656 = vset.pattern.permute.xlu0 0
        %1657 = vperm.xlu0 %1656, %v1653
        %v1658 = vpop.permute.xlu0 %1657
        %v1660 = vmul.f32 %v1654, %v1658
        %v1661 = vpack.c.bf16 %v1660, %v1660
        %v1662 = vld [vmem:[%s4 + $0x40] sm:$0xf]
        %v1663 = vld [vmem:[%s4 + $0x44] sm:$0xf]
        %v1664 = vld [vmem:[%s4 + $0x48] sm:$0xf]
        %v1665 = vld [vmem:[%s4 + $0x4c] sm:$0xf]
        %v1666 = vld [vmem:[%s4 + $0x50] sm:$0xf]
        %v1667 = vld [vmem:[%s4 + $0x54] sm:$0xf]
        %v1668 = vld [vmem:[%s4 + $0x58] sm:$0xf]
        %v1669 = vld [vmem:[%s4 + $0x5c] sm:$0xf]
        %v1670 = vld [vmem:[%s4 + $0x60] sm:$0xf]
        %v1671 = vld [vmem:[%s4 + $0x64] sm:$0xf]
        %v1672 = vld [vmem:[%s4 + $0x68] sm:$0xf]
        %v1673 = vld [vmem:[%s4 + $0x6c] sm:$0xf]
        %v1674 = vld [vmem:[%s4 + $0x70] sm:$0xf]
        %v1675 = vld [vmem:[%s4 + $0x74] sm:$0xf]
        %v1676 = vld [vmem:[%s4 + $0x78] sm:$0xf]
        %v1677 = vld [vmem:[%s4 + $0x7c] sm:$0xf]
        %v1694 = vunpack.c.l.b16 %v1662
        %v1695 = vunpack.c.l.b16 %v1663
        %v1696 = vunpack.c.l.b16 %v1664
        %v1697 = vunpack.c.l.b16 %v1665
        %v1698 = vunpack.c.l.b16 %v1666
        %v1699 = vunpack.c.l.b16 %v1667
        %v1700 = vunpack.c.l.b16 %v1668
        %v1701 = vunpack.c.l.b16 %v1669
        %v1702 = vunpack.c.l.b16 %v1670
        %v1703 = vunpack.c.l.b16 %v1671
        %v1704 = vunpack.c.l.b16 %v1672
        %v1705 = vunpack.c.l.b16 %v1673
        %v1706 = vunpack.c.l.b16 %v1674
        %v1707 = vunpack.c.l.b16 %v1675
        %v1708 = vunpack.c.l.b16 %v1676
        %v1709 = vunpack.c.l.b16 %v1677
        %v1710 = vpack.c.b16 %v1695, %v1694
        %v1711 = vpack.c.b16 %v1697, %v1696
        %v1712 = vpack.c.b16 %v1699, %v1698
        %v1713 = vpack.c.b16 %v1701, %v1700
        %v1714 = vpack.c.b16 %v1703, %v1702
        %v1715 = vpack.c.b16 %v1705, %v1704
        %v1716 = vpack.c.b16 %v1707, %v1706
        %v1717 = vpack.c.b16 %v1709, %v1708
        %1726 = vmatprep.subr.bf16.mxu0 0
        %1727 = vmatpush1.bf16.msra.mxu0 %v1710
        %1728 = vmatprep.subr.bf16.mxu0 0
        %1729 = vmatpush1.bf16.msra.mxu0 %v1711
        %1730 = vmatprep.subr.bf16.mxu0 0
        %1731 = vmatpush1.bf16.msra.mxu0 %v1712
        %1732 = vmatprep.subr.bf16.mxu0 0
        %1733 = vmatpush1.bf16.msra.mxu0 %v1713
        %1734 = vmatprep.subr.bf16.mxu0 0
        %1735 = vmatpush1.bf16.msra.mxu0 %v1714
        %1736 = vmatprep.subr.bf16.mxu0 0
        %1737 = vmatpush1.bf16.msra.mxu0 %v1715
        %1738 = vmatprep.subr.bf16.mxu0 0
        %1739 = vmatpush1.bf16.msra.mxu0 %v1716
        %1740 = vmatprep.subr.bf16.mxu0 0
        %1741 = vmatpush1.bf16.msra.mxu0 %v1717
        %1742 = vmatprep.subr.bf16.mxu0 0
        %1743 = vmatpush1.bf16.msra.mxu0 0
        %1744 = vmatprep.subr.bf16.mxu0 0
        %1745 = vmatpush1.bf16.msra.mxu0 0
        %1746 = vmatprep.subr.bf16.mxu0 0
        %1747 = vmatpush1.bf16.msra.mxu0 0
        %1748 = vmatprep.subr.bf16.mxu0 0
        %1749 = vmatpush1.bf16.msra.mxu0 0
        %1750 = vmatprep.subr.bf16.mxu0 0
        %1751 = vmatpush1.bf16.msra.mxu0 0
        %1752 = vmatprep.subr.bf16.mxu0 0
        %1753 = vmatpush1.bf16.msra.mxu0 0
        %1754 = vmatprep.subr.bf16.mxu0 0
        %1755 = vmatpush1.bf16.msra.mxu0 0
        %1756 = vmatprep.subr.bf16.mxu0 0
        %1757 = vmatpush1.bf16.msra.mxu0 0
        %1758 = vmatprep.mubr.bf16.mxu0 0
        %1759 = vmatmul.mubr.bf16.gmra.mrb[0].mxu0 %v1661
        %v1760 = vpop.f32.mrb[0].mxu0
        %v1761 = vadd.f32 0.0, %v1760
        %v1762 = vpop.f32.mrb[0].mxu0
        %v1763 = vpop.f32.mrb[0].mxu0
        %v1764 = vpop.f32.mrb[0].mxu0
        %1765 = vdwg.mxu0
        %v1766 = vadd.f32 %v1651, %v1761
        %v1767 = vld [vmem:[%s806] sm:$0xff]
        %v1768 = vrcp.pop %v1767
        %v1769 = vld [vmem:[%s814] sm:$0xff]
        %1771 = vset.pattern.permute.xlu0 0
        %1772 = vperm.xlu0 %1771, %v1768
        %v1773 = vpop.permute.xlu0 %1772
        %v1775 = vmul.f32 %v1769, %v1773
        %v1776 = vpack.c.bf16 %v1775, %v1775
        %v1777 = vld [vmem:[%s4 + $0x80] sm:$0xf]
        %v1778 = vld [vmem:[%s4 + $0x84] sm:$0xf]
        %v1779 = vld [vmem:[%s4 + $0x88] sm:$0xf]
        %v1780 = vld [vmem:[%s4 + $0x8c] sm:$0xf]
        %v1781 = vld [vmem:[%s4 + $0x90] sm:$0xf]
        %v1782 = vld [vmem:[%s4 + $0x94] sm:$0xf]
        %v1783 = vld [vmem:[%s4 + $0x98] sm:$0xf]
        %v1784 = vld [vmem:[%s4 + $0x9c] sm:$0xf]
        %v1785 = vld [vmem:[%s4 + $0xa0] sm:$0xf]
        %v1786 = vld [vmem:[%s4 + $0xa4] sm:$0xf]
        %v1787 = vld [vmem:[%s4 + $0xa8] sm:$0xf]
        %v1788 = vld [vmem:[%s4 + $0xac] sm:$0xf]
        %v1789 = vld [vmem:[%s4 + $0xb0] sm:$0xf]
        %v1790 = vld [vmem:[%s4 + $0xb4] sm:$0xf]
        %v1791 = vld [vmem:[%s4 + $0xb8] sm:$0xf]
        %v1792 = vld [vmem:[%s4 + $0xbc] sm:$0xf]
        %v1809 = vunpack.c.l.b16 %v1777
        %v1810 = vunpack.c.l.b16 %v1778
        %v1811 = vunpack.c.l.b16 %v1779
        %v1812 = vunpack.c.l.b16 %v1780
        %v1813 = vunpack.c.l.b16 %v1781
        %v1814 = vunpack.c.l.b16 %v1782
        %v1815 = vunpack.c.l.b16 %v1783
        %v1816 = vunpack.c.l.b16 %v1784
        %v1817 = vunpack.c.l.b16 %v1785
        %v1818 = vunpack.c.l.b16 %v1786
        %v1819 = vunpack.c.l.b16 %v1787
        %v1820 = vunpack.c.l.b16 %v1788
        %v1821 = vunpack.c.l.b16 %v1789
        %v1822 = vunpack.c.l.b16 %v1790
        %v1823 = vunpack.c.l.b16 %v1791
        %v1824 = vunpack.c.l.b16 %v1792
        %v1825 = vpack.c.b16 %v1810, %v1809
        %v1826 = vpack.c.b16 %v1812, %v1811
        %v1827 = vpack.c.b16 %v1814, %v1813
        %v1828 = vpack.c.b16 %v1816, %v1815
        %v1829 = vpack.c.b16 %v1818, %v1817
        %v1830 = vpack.c.b16 %v1820, %v1819
        %v1831 = vpack.c.b16 %v1822, %v1821
        %v1832 = vpack.c.b16 %v1824, %v1823
        %1841 = vmatprep.subr.bf16.mxu0 0
        %1842 = vmatpush1.bf16.msra.mxu0 %v1825
        %1843 = vmatprep.subr.bf16.mxu0 0
        %1844 = vmatpush1.bf16.msra.mxu0 %v1826
        %1845 = vmatprep.subr.bf16.mxu0 0
        %1846 = vmatpush1.bf16.msra.mxu0 %v1827
        %1847 = vmatprep.subr.bf16.mxu0 0
        %1848 = vmatpush1.bf16.msra.mxu0 %v1828
        %1849 = vmatprep.subr.bf16.mxu0 0
        %1850 = vmatpush1.bf16.msra.mxu0 %v1829
        %1851 = vmatprep.subr.bf16.mxu0 0
        %1852 = vmatpush1.bf16.msra.mxu0 %v1830
        %1853 = vmatprep.subr.bf16.mxu0 0
        %1854 = vmatpush1.bf16.msra.mxu0 %v1831
        %1855 = vmatprep.subr.bf16.mxu0 0
        %1856 = vmatpush1.bf16.msra.mxu0 %v1832
        %1857 = vmatprep.subr.bf16.mxu0 0
        %1858 = vmatpush1.bf16.msra.mxu0 0
        %1859 = vmatprep.subr.bf16.mxu0 0
        %1860 = vmatpush1.bf16.msra.mxu0 0
        %1861 = vmatprep.subr.bf16.mxu0 0
        %1862 = vmatpush1.bf16.msra.mxu0 0
        %1863 = vmatprep.subr.bf16.mxu0 0
        %1864 = vmatpush1.bf16.msra.mxu0 0
        %1865 = vmatprep.subr.bf16.mxu0 0
        %1866 = vmatpush1.bf16.msra.mxu0 0
        %1867 = vmatprep.subr.bf16.mxu0 0
        %1868 = vmatpush1.bf16.msra.mxu0 0
        %1869 = vmatprep.subr.bf16.mxu0 0
        %1870 = vmatpush1.bf16.msra.mxu0 0
        %1871 = vmatprep.subr.bf16.mxu0 0
        %1872 = vmatpush1.bf16.msra.mxu0 0
        %1873 = vmatprep.mubr.bf16.mxu0 0
        %1874 = vmatmul.mubr.bf16.gmra.mrb[0].mxu0 %v1776
        %v1875 = vpop.f32.mrb[0].mxu0
        %v1876 = vadd.f32 0.0, %v1875
        %v1877 = vpop.f32.mrb[0].mxu0
        %v1878 = vpop.f32.mrb[0].mxu0
        %v1879 = vpop.f32.mrb[0].mxu0
        %1880 = vdwg.mxu0
        %v1881 = vadd.f32 %v1766, %v1876
        %v1882 = vld [vmem:[%s938] sm:$0xff]
        %v1883 = vrcp.pop %v1882
        %v1884 = vld [vmem:[%s946] sm:$0xff]
        %1886 = vset.pattern.permute.xlu0 0
        %1887 = vperm.xlu0 %1886, %v1883
        %v1888 = vpop.permute.xlu0 %1887
        %v1890 = vmul.f32 %v1884, %v1888
        %v1891 = vpack.c.bf16 %v1890, %v1890
        %v1892 = vld [vmem:[%s4 + $0xc0] sm:$0xf]
        %v1893 = vld [vmem:[%s4 + $0xc4] sm:$0xf]
        %v1894 = vld [vmem:[%s4 + $0xc8] sm:$0xf]
        %v1895 = vld [vmem:[%s4 + $0xcc] sm:$0xf]
        %v1896 = vld [vmem:[%s4 + $0xd0] sm:$0xf]
        %v1897 = vld [vmem:[%s4 + $0xd4] sm:$0xf]
        %v1898 = vld [vmem:[%s4 + $0xd8] sm:$0xf]
        %v1899 = vld [vmem:[%s4 + $0xdc] sm:$0xf]
        %v1900 = vld [vmem:[%s4 + $0xe0] sm:$0xf]
        %v1901 = vld [vmem:[%s4 + $0xe4] sm:$0xf]
        %v1902 = vld [vmem:[%s4 + $0xe8] sm:$0xf]
        %v1903 = vld [vmem:[%s4 + $0xec] sm:$0xf]
        %v1904 = vld [vmem:[%s4 + $0xf0] sm:$0xf]
        %v1905 = vld [vmem:[%s4 + $0xf4] sm:$0xf]
        %v1906 = vld [vmem:[%s4 + $0xf8] sm:$0xf]
        %v1907 = vld [vmem:[%s4 + $0xfc] sm:$0xf]
        %v1924 = vunpack.c.l.b16 %v1892
        %v1925 = vunpack.c.l.b16 %v1893
        %v1926 = vunpack.c.l.b16 %v1894
        %v1927 = vunpack.c.l.b16 %v1895
        %v1928 = vunpack.c.l.b16 %v1896
        %v1929 = vunpack.c.l.b16 %v1897
        %v1930 = vunpack.c.l.b16 %v1898
        %v1931 = vunpack.c.l.b16 %v1899
        %v1932 = vunpack.c.l.b16 %v1900
        %v1933 = vunpack.c.l.b16 %v1901
        %v1934 = vunpack.c.l.b16 %v1902
        %v1935 = vunpack.c.l.b16 %v1903
        %v1936 = vunpack.c.l.b16 %v1904
        %v1937 = vunpack.c.l.b16 %v1905
        %v1938 = vunpack.c.l.b16 %v1906
        %v1939 = vunpack.c.l.b16 %v1907
        %v1940 = vpack.c.b16 %v1925, %v1924
        %v1941 = vpack.c.b16 %v1927, %v1926
        %v1942 = vpack.c.b16 %v1929, %v1928
        %v1943 = vpack.c.b16 %v1931, %v1930
        %v1944 = vpack.c.b16 %v1933, %v1932
        %v1945 = vpack.c.b16 %v1935, %v1934
        %v1946 = vpack.c.b16 %v1937, %v1936
        %v1947 = vpack.c.b16 %v1939, %v1938
        %1956 = vmatprep.subr.bf16.mxu0 0
        %1957 = vmatpush1.bf16.msra.mxu0 %v1940
        %1958 = vmatprep.subr.bf16.mxu0 0
        %1959 = vmatpush1.bf16.msra.mxu0 %v1941
        %1960 = vmatprep.subr.bf16.mxu0 0
        %1961 = vmatpush1.bf16.msra.mxu0 %v1942
        %1962 = vmatprep.subr.bf16.mxu0 0
        %1963 = vmatpush1.bf16.msra.mxu0 %v1943
        %1964 = vmatprep.subr.bf16.mxu0 0
        %1965 = vmatpush1.bf16.msra.mxu0 %v1944
        %1966 = vmatprep.subr.bf16.mxu0 0
        %1967 = vmatpush1.bf16.msra.mxu0 %v1945
        %1968 = vmatprep.subr.bf16.mxu0 0
        %1969 = vmatpush1.bf16.msra.mxu0 %v1946
        %1970 = vmatprep.subr.bf16.mxu0 0
        %1971 = vmatpush1.bf16.msra.mxu0 %v1947
        %1972 = vmatprep.subr.bf16.mxu0 0
        %1973 = vmatpush1.bf16.msra.mxu0 0
        %1974 = vmatprep.subr.bf16.mxu0 0
        %1975 = vmatpush1.bf16.msra.mxu0 0
        %1976 = vmatprep.subr.bf16.mxu0 0
        %1977 = vmatpush1.bf16.msra.mxu0 0
        %1978 = vmatprep.subr.bf16.mxu0 0
        %1979 = vmatpush1.bf16.msra.mxu0 0
        %1980 = vmatprep.subr.bf16.mxu0 0
        %1981 = vmatpush1.bf16.msra.mxu0 0
        %1982 = vmatprep.subr.bf16.mxu0 0
        %1983 = vmatpush1.bf16.msra.mxu0 0
        %1984 = vmatprep.subr.bf16.mxu0 0
        %1985 = vmatpush1.bf16.msra.mxu0 0
        %1986 = vmatprep.subr.bf16.mxu0 0
        %1987 = vmatpush1.bf16.msra.mxu0 0
        %1988 = vmatprep.mubr.bf16.mxu0 0
        %1989 = vmatmul.mubr.bf16.gmra.mrb[0].mxu0 %v1891
        %v1990 = vpop.f32.mrb[0].mxu0
        %v1991 = vadd.f32 0.0, %v1990
        %v1992 = vpop.f32.mrb[0].mxu0
        %v1993 = vpop.f32.mrb[0].mxu0
        %v1994 = vpop.f32.mrb[0].mxu0
        %1995 = vdwg.mxu0
        %v1996 = vadd.f32 %v1881, %v1991
        %v1997 = vld [vmem:[%s1065] sm:$0xff]
        %v1998 = vrcp.pop %v1997
        %v1999 = vld [vmem:[%s1073] sm:$0xff]
        %2001 = vset.pattern.permute.xlu0 0
        %2002 = vperm.xlu0 %2001, %v1998
        %v2003 = vpop.permute.xlu0 %2002
        %v2005 = vmul.f32 %v1999, %v2003
        %v2006 = vpack.c.bf16 %v2005, %v2005
        %v2007 = vld [vmem:[%s4 + $0x100] sm:$0xf]
        %v2008 = vld [vmem:[%s4 + $0x104] sm:$0xf]
        %v2009 = vld [vmem:[%s4 + $0x108] sm:$0xf]
        %v2010 = vld [vmem:[%s4 + $0x10c] sm:$0xf]
        %v2011 = vld [vmem:[%s4 + $0x110] sm:$0xf]
        %v2012 = vld [vmem:[%s4 + $0x114] sm:$0xf]
        %v2013 = vld [vmem:[%s4 + $0x118] sm:$0xf]
        %v2014 = vld [vmem:[%s4 + $0x11c] sm:$0xf]
        %v2015 = vld [vmem:[%s4 + $0x120] sm:$0xf]
        %v2016 = vld [vmem:[%s4 + $0x124] sm:$0xf]
        %v2017 = vld [vmem:[%s4 + $0x128] sm:$0xf]
        %v2018 = vld [vmem:[%s4 + $0x12c] sm:$0xf]
        %v2019 = vld [vmem:[%s4 + $0x130] sm:$0xf]
        %v2020 = vld [vmem:[%s4 + $0x134] sm:$0xf]
        %v2021 = vld [vmem:[%s4 + $0x138] sm:$0xf]
        %v2022 = vld [vmem:[%s4 + $0x13c] sm:$0xf]
        %v2039 = vunpack.c.l.b16 %v2007
        %v2040 = vunpack.c.l.b16 %v2008
        %v2041 = vunpack.c.l.b16 %v2009
        %v2042 = vunpack.c.l.b16 %v2010
        %v2043 = vunpack.c.l.b16 %v2011
        %v2044 = vunpack.c.l.b16 %v2012
        %v2045 = vunpack.c.l.b16 %v2013
        %v2046 = vunpack.c.l.b16 %v2014
        %v2047 = vunpack.c.l.b16 %v2015
        %v2048 = vunpack.c.l.b16 %v2016
        %v2049 = vunpack.c.l.b16 %v2017
        %v2050 = vunpack.c.l.b16 %v2018
        %v2051 = vunpack.c.l.b16 %v2019
        %v2052 = vunpack.c.l.b16 %v2020
        %v2053 = vunpack.c.l.b16 %v2021
        %v2054 = vunpack.c.l.b16 %v2022
        %v2055 = vpack.c.b16 %v2040, %v2039
        %v2056 = vpack.c.b16 %v2042, %v2041
        %v2057 = vpack.c.b16 %v2044, %v2043
        %v2058 = vpack.c.b16 %v2046, %v2045
        %v2059 = vpack.c.b16 %v2048, %v2047
        %v2060 = vpack.c.b16 %v2050, %v2049
        %v2061 = vpack.c.b16 %v2052, %v2051
        %v2062 = vpack.c.b16 %v2054, %v2053
        %2071 = vmatprep.subr.bf16.mxu0 0
        %2072 = vmatpush1.bf16.msra.mxu0 %v2055
        %2073 = vmatprep.subr.bf16.mxu0 0
        %2074 = vmatpush1.bf16.msra.mxu0 %v2056
        %2075 = vmatprep.subr.bf16.mxu0 0
        %2076 = vmatpush1.bf16.msra.mxu0 %v2057
        %2077 = vmatprep.subr.bf16.mxu0 0
        %2078 = vmatpush1.bf16.msra.mxu0 %v2058
        %2079 = vmatprep.subr.bf16.mxu0 0
        %2080 = vmatpush1.bf16.msra.mxu0 %v2059
        %2081 = vmatprep.subr.bf16.mxu0 0
        %2082 = vmatpush1.bf16.msra.mxu0 %v2060
        %2083 = vmatprep.subr.bf16.mxu0 0
        %2084 = vmatpush1.bf16.msra.mxu0 %v2061
        %2085 = vmatprep.subr.bf16.mxu0 0
        %2086 = vmatpush1.bf16.msra.mxu0 %v2062
        %2087 = vmatprep.subr.bf16.mxu0 0
        %2088 = vmatpush1.bf16.msra.mxu0 0
        %2089 = vmatprep.subr.bf16.mxu0 0
        %2090 = vmatpush1.bf16.msra.mxu0 0
        %2091 = vmatprep.subr.bf16.mxu0 0
        %2092 = vmatpush1.bf16.msra.mxu0 0
        %2093 = vmatprep.subr.bf16.mxu0 0
        %2094 = vmatpush1.bf16.msra.mxu0 0
        %2095 = vmatprep.subr.bf16.mxu0 0
        %2096 = vmatpush1.bf16.msra.mxu0 0
        %2097 = vmatprep.subr.bf16.mxu0 0
        %2098 = vmatpush1.bf16.msra.mxu0 0
        %2099 = vmatprep.subr.bf16.mxu0 0
        %2100 = vmatpush1.bf16.msra.mxu0 0
        %2101 = vmatprep.subr.bf16.mxu0 0
        %2102 = vmatpush1.bf16.msra.mxu0 0
        %2103 = vmatprep.mubr.bf16.mxu0 0
        %2104 = vmatmul.mubr.bf16.gmra.mrb[0].mxu0 %v2006
        %v2105 = vpop.f32.mrb[0].mxu0
        %v2106 = vadd.f32 0.0, %v2105
        %v2107 = vpop.f32.mrb[0].mxu0
        %v2108 = vpop.f32.mrb[0].mxu0
        %v2109 = vpop.f32.mrb[0].mxu0
        %2110 = vdwg.mxu0
        %v2111 = vadd.f32 %v1996, %v2106
        %v2112 = vld [vmem:[%s1197] sm:$0xff]
        %v2113 = vrcp.pop %v2112
        %v2114 = vld [vmem:[%s1205] sm:$0xff]
        %2116 = vset.pattern.permute.xlu0 0
        %2117 = vperm.xlu0 %2116, %v2113
        %v2118 = vpop.permute.xlu0 %2117
        %v2120 = vmul.f32 %v2114, %v2118
        %v2121 = vpack.c.bf16 %v2120, %v2120
        %v2122 = vld [vmem:[%s4 + $0x140] sm:$0xf]
        %v2123 = vld [vmem:[%s4 + $0x144] sm:$0xf]
        %v2124 = vld [vmem:[%s4 + $0x148] sm:$0xf]
        %v2125 = vld [vmem:[%s4 + $0x14c] sm:$0xf]
        %v2126 = vld [vmem:[%s4 + $0x150] sm:$0xf]
        %v2127 = vld [vmem:[%s4 + $0x154] sm:$0xf]
        %v2128 = vld [vmem:[%s4 + $0x158] sm:$0xf]
        %v2129 = vld [vmem:[%s4 + $0x15c] sm:$0xf]
        %v2130 = vld [vmem:[%s4 + $0x160] sm:$0xf]
        %v2131 = vld [vmem:[%s4 + $0x164] sm:$0xf]
        %v2132 = vld [vmem:[%s4 + $0x168] sm:$0xf]
        %v2133 = vld [vmem:[%s4 + $0x16c] sm:$0xf]
        %v2134 = vld [vmem:[%s4 + $0x170] sm:$0xf]
        %v2135 = vld [vmem:[%s4 + $0x174] sm:$0xf]
        %v2136 = vld [vmem:[%s4 + $0x178] sm:$0xf]
        %v2137 = vld [vmem:[%s4 + $0x17c] sm:$0xf]
        %v2154 = vunpack.c.l.b16 %v2122
        %v2155 = vunpack.c.l.b16 %v2123
        %v2156 = vunpack.c.l.b16 %v2124
        %v2157 = vunpack.c.l.b16 %v2125
        %v2158 = vunpack.c.l.b16 %v2126
        %v2159 = vunpack.c.l.b16 %v2127
        %v2160 = vunpack.c.l.b16 %v2128
        %v2161 = vunpack.c.l.b16 %v2129
        %v2162 = vunpack.c.l.b16 %v2130
        %v2163 = vunpack.c.l.b16 %v2131
        %v2164 = vunpack.c.l.b16 %v2132
        %v2165 = vunpack.c.l.b16 %v2133
        %v2166 = vunpack.c.l.b16 %v2134
        %v2167 = vunpack.c.l.b16 %v2135
        %v2168 = vunpack.c.l.b16 %v2136
        %v2169 = vunpack.c.l.b16 %v2137
        %v2170 = vpack.c.b16 %v2155, %v2154
        %v2171 = vpack.c.b16 %v2157, %v2156
        %v2172 = vpack.c.b16 %v2159, %v2158
        %v2173 = vpack.c.b16 %v2161, %v2160
        %v2174 = vpack.c.b16 %v2163, %v2162
        %v2175 = vpack.c.b16 %v2165, %v2164
        %v2176 = vpack.c.b16 %v2167, %v2166
        %v2177 = vpack.c.b16 %v2169, %v2168
        %2186 = vmatprep.subr.bf16.mxu0 0
        %2187 = vmatpush1.bf16.msra.mxu0 %v2170
        %2188 = vmatprep.subr.bf16.mxu0 0
        %2189 = vmatpush1.bf16.msra.mxu0 %v2171
        %2190 = vmatprep.subr.bf16.mxu0 0
        %2191 = vmatpush1.bf16.msra.mxu0 %v2172
        %2192 = vmatprep.subr.bf16.mxu0 0
        %2193 = vmatpush1.bf16.msra.mxu0 %v2173
        %2194 = vmatprep.subr.bf16.mxu0 0
        %2195 = vmatpush1.bf16.msra.mxu0 %v2174
        %2196 = vmatprep.subr.bf16.mxu0 0
        %2197 = vmatpush1.bf16.msra.mxu0 %v2175
        %2198 = vmatprep.subr.bf16.mxu0 0
        %2199 = vmatpush1.bf16.msra.mxu0 %v2176
        %2200 = vmatprep.subr.bf16.mxu0 0
        %2201 = vmatpush1.bf16.msra.mxu0 %v2177
        %2202 = vmatprep.subr.bf16.mxu0 0
        %2203 = vmatpush1.bf16.msra.mxu0 0
        %2204 = vmatprep.subr.bf16.mxu0 0
        %2205 = vmatpush1.bf16.msra.mxu0 0
        %2206 = vmatprep.subr.bf16.mxu0 0
        %2207 = vmatpush1.bf16.msra.mxu0 0
        %2208 = vmatprep.subr.bf16.mxu0 0
        %2209 = vmatpush1.bf16.msra.mxu0 0
        %2210 = vmatprep.subr.bf16.mxu0 0
        %2211 = vmatpush1.bf16.msra.mxu0 0
        %2212 = vmatprep.subr.bf16.mxu0 0
        %2213 = vmatpush1.bf16.msra.mxu0 0
        %2214 = vmatprep.subr.bf16.mxu0 0
        %2215 = vmatpush1.bf16.msra.mxu0 0
        %2216 = vmatprep.subr.bf16.mxu0 0
        %2217 = vmatpush1.bf16.msra.mxu0 0
        %2218 = vmatprep.mubr.bf16.mxu0 0
        %2219 = vmatmul.mubr.bf16.gmra.mrb[0].mxu0 %v2121
        %v2220 = vpop.f32.mrb[0].mxu0
        %v2221 = vadd.f32 0.0, %v2220
        %v2222 = vpop.f32.mrb[0].mxu0
        %v2223 = vpop.f32.mrb[0].mxu0
        %v2224 = vpop.f32.mrb[0].mxu0
        %2225 = vdwg.mxu0
        %v2226 = vadd.f32 %v2111, %v2221
        %v2227 = vld [vmem:[%s1324] sm:$0xff]
        %v2228 = vrcp.pop %v2227
        %v2229 = vld [vmem:[%s1332] sm:$0xff]
        %2231 = vset.pattern.permute.xlu0 0
        %2232 = vperm.xlu0 %2231, %v2228
        %v2233 = vpop.permute.xlu0 %2232
        %v2235 = vmul.f32 %v2229, %v2233
        %v2236 = vpack.c.bf16 %v2235, %v2235
        %v2237 = vld [vmem:[%s4 + $0x180] sm:$0xf]
        %v2238 = vld [vmem:[%s4 + $0x184] sm:$0xf]
        %v2239 = vld [vmem:[%s4 + $0x188] sm:$0xf]
        %v2240 = vld [vmem:[%s4 + $0x18c] sm:$0xf]
        %v2241 = vld [vmem:[%s4 + $0x190] sm:$0xf]
        %v2242 = vld [vmem:[%s4 + $0x194] sm:$0xf]
        %v2243 = vld [vmem:[%s4 + $0x198] sm:$0xf]
        %v2244 = vld [vmem:[%s4 + $0x19c] sm:$0xf]
        %v2245 = vld [vmem:[%s4 + $0x1a0] sm:$0xf]
        %v2246 = vld [vmem:[%s4 + $0x1a4] sm:$0xf]
        %v2247 = vld [vmem:[%s4 + $0x1a8] sm:$0xf]
        %v2248 = vld [vmem:[%s4 + $0x1ac] sm:$0xf]
        %v2249 = vld [vmem:[%s4 + $0x1b0] sm:$0xf]
        %v2250 = vld [vmem:[%s4 + $0x1b4] sm:$0xf]
        %v2251 = vld [vmem:[%s4 + $0x1b8] sm:$0xf]
        %v2252 = vld [vmem:[%s4 + $0x1bc] sm:$0xf]
        %v2269 = vunpack.c.l.b16 %v2237
        %v2270 = vunpack.c.l.b16 %v2238
        %v2271 = vunpack.c.l.b16 %v2239
        %v2272 = vunpack.c.l.b16 %v2240
        %v2273 = vunpack.c.l.b16 %v2241
        %v2274 = vunpack.c.l.b16 %v2242
        %v2275 = vunpack.c.l.b16 %v2243
        %v2276 = vunpack.c.l.b16 %v2244
        %v2277 = vunpack.c.l.b16 %v2245
        %v2278 = vunpack.c.l.b16 %v2246
        %v2279 = vunpack.c.l.b16 %v2247
        %v2280 = vunpack.c.l.b16 %v2248
        %v2281 = vunpack.c.l.b16 %v2249
        %v2282 = vunpack.c.l.b16 %v2250
        %v2283 = vunpack.c.l.b16 %v2251
        %v2284 = vunpack.c.l.b16 %v2252
        %v2285 = vpack.c.b16 %v2270, %v2269
        %v2286 = vpack.c.b16 %v2272, %v2271
        %v2287 = vpack.c.b16 %v2274, %v2273
        %v2288 = vpack.c.b16 %v2276, %v2275
        %v2289 = vpack.c.b16 %v2278, %v2277
        %v2290 = vpack.c.b16 %v2280, %v2279
        %v2291 = vpack.c.b16 %v2282, %v2281
        %v2292 = vpack.c.b16 %v2284, %v2283
        %2301 = vmatprep.subr.bf16.mxu0 0
        %2302 = vmatpush1.bf16.msra.mxu0 %v2285
        %2303 = vmatprep.subr.bf16.mxu0 0
        %2304 = vmatpush1.bf16.msra.mxu0 %v2286
        %2305 = vmatprep.subr.bf16.mxu0 0
        %2306 = vmatpush1.bf16.msra.mxu0 %v2287
        %2307 = vmatprep.subr.bf16.mxu0 0
        %2308 = vmatpush1.bf16.msra.mxu0 %v2288
        %2309 = vmatprep.subr.bf16.mxu0 0
        %2310 = vmatpush1.bf16.msra.mxu0 %v2289
        %2311 = vmatprep.subr.bf16.mxu0 0
        %2312 = vmatpush1.bf16.msra.mxu0 %v2290
        %2313 = vmatprep.subr.bf16.mxu0 0
        %2314 = vmatpush1.bf16.msra.mxu0 %v2291
        %2315 = vmatprep.subr.bf16.mxu0 0
        %2316 = vmatpush1.bf16.msra.mxu0 %v2292
        %2317 = vmatprep.subr.bf16.mxu0 0
        %2318 = vmatpush1.bf16.msra.mxu0 0
        %2319 = vmatprep.subr.bf16.mxu0 0
        %2320 = vmatpush1.bf16.msra.mxu0 0
        %2321 = vmatprep.subr.bf16.mxu0 0
        %2322 = vmatpush1.bf16.msra.mxu0 0
        %2323 = vmatprep.subr.bf16.mxu0 0
        %2324 = vmatpush1.bf16.msra.mxu0 0
        %2325 = vmatprep.subr.bf16.mxu0 0
        %2326 = vmatpush1.bf16.msra.mxu0 0
        %2327 = vmatprep.subr.bf16.mxu0 0
        %2328 = vmatpush1.bf16.msra.mxu0 0
        %2329 = vmatprep.subr.bf16.mxu0 0
        %2330 = vmatpush1.bf16.msra.mxu0 0
        %2331 = vmatprep.subr.bf16.mxu0 0
        %2332 = vmatpush1.bf16.msra.mxu0 0
        %2333 = vmatprep.mubr.bf16.mxu0 0
        %2334 = vmatmul.mubr.bf16.gmra.mrb[0].mxu0 %v2236
        %v2335 = vpop.f32.mrb[0].mxu0
        %v2336 = vadd.f32 0.0, %v2335
        %v2337 = vpop.f32.mrb[0].mxu0
        %v2338 = vpop.f32.mrb[0].mxu0
        %v2339 = vpop.f32.mrb[0].mxu0
        %2340 = vdwg.mxu0
        %v2341 = vadd.f32 %v2226, %v2336
        %v2342 = vld [vmem:[%s1456] sm:$0xff]
        %v2343 = vrcp.pop %v2342
        %v2344 = vld [vmem:[%s1464] sm:$0xff]
        %2346 = vset.pattern.permute.xlu0 0
        %2347 = vperm.xlu0 %2346, %v2343
        %v2348 = vpop.permute.xlu0 %2347
        %v2350 = vmul.f32 %v2344, %v2348
        %v2351 = vpack.c.bf16 %v2350, %v2350
        %v2352 = vld [vmem:[%s4 + $0x1c0] sm:$0xf]
        %v2353 = vld [vmem:[%s4 + $0x1c4] sm:$0xf]
        %v2354 = vld [vmem:[%s4 + $0x1c8] sm:$0xf]
        %v2355 = vld [vmem:[%s4 + $0x1cc] sm:$0xf]
        %v2356 = vld [vmem:[%s4 + $0x1d0] sm:$0xf]
        %v2357 = vld [vmem:[%s4 + $0x1d4] sm:$0xf]
        %v2358 = vld [vmem:[%s4 + $0x1d8] sm:$0xf]
        %v2359 = vld [vmem:[%s4 + $0x1dc] sm:$0xf]
        %v2360 = vld [vmem:[%s4 + $0x1e0] sm:$0xf]
        %v2361 = vld [vmem:[%s4 + $0x1e4] sm:$0xf]
        %v2362 = vld [vmem:[%s4 + $0x1e8] sm:$0xf]
        %v2363 = vld [vmem:[%s4 + $0x1ec] sm:$0xf]
        %v2364 = vld [vmem:[%s4 + $0x1f0] sm:$0xf]
        %v2365 = vld [vmem:[%s4 + $0x1f4] sm:$0xf]
        %v2366 = vld [vmem:[%s4 + $0x1f8] sm:$0xf]
        %v2367 = vld [vmem:[%s4 + $0x1fc] sm:$0xf]
        %v2384 = vunpack.c.l.b16 %v2352
        %v2385 = vunpack.c.l.b16 %v2353
        %v2386 = vunpack.c.l.b16 %v2354
        %v2387 = vunpack.c.l.b16 %v2355
        %v2388 = vunpack.c.l.b16 %v2356
        %v2389 = vunpack.c.l.b16 %v2357
        %v2390 = vunpack.c.l.b16 %v2358
        %v2391 = vunpack.c.l.b16 %v2359
        %v2392 = vunpack.c.l.b16 %v2360
        %v2393 = vunpack.c.l.b16 %v2361
        %v2394 = vunpack.c.l.b16 %v2362
        %v2395 = vunpack.c.l.b16 %v2363
        %v2396 = vunpack.c.l.b16 %v2364
        %v2397 = vunpack.c.l.b16 %v2365
        %v2398 = vunpack.c.l.b16 %v2366
        %v2399 = vunpack.c.l.b16 %v2367
        %v2400 = vpack.c.b16 %v2385, %v2384
        %v2401 = vpack.c.b16 %v2387, %v2386
        %v2402 = vpack.c.b16 %v2389, %v2388
        %v2403 = vpack.c.b16 %v2391, %v2390
        %v2404 = vpack.c.b16 %v2393, %v2392
        %v2405 = vpack.c.b16 %v2395, %v2394
        %v2406 = vpack.c.b16 %v2397, %v2396
        %v2407 = vpack.c.b16 %v2399, %v2398
        %2416 = vmatprep.subr.bf16.mxu0 0
        %2417 = vmatpush1.bf16.msra.mxu0 %v2400
        %2418 = vmatprep.subr.bf16.mxu0 0
        %2419 = vmatpush1.bf16.msra.mxu0 %v2401
        %2420 = vmatprep.subr.bf16.mxu0 0
        %2421 = vmatpush1.bf16.msra.mxu0 %v2402
        %2422 = vmatprep.subr.bf16.mxu0 0
        %2423 = vmatpush1.bf16.msra.mxu0 %v2403
        %2424 = vmatprep.subr.bf16.mxu0 0
        %2425 = vmatpush1.bf16.msra.mxu0 %v2404
        %2426 = vmatprep.subr.bf16.mxu0 0
        %2427 = vmatpush1.bf16.msra.mxu0 %v2405
        %2428 = vmatprep.subr.bf16.mxu0 0
        %2429 = vmatpush1.bf16.msra.mxu0 %v2406
        %2430 = vmatprep.subr.bf16.mxu0 0
        %2431 = vmatpush1.bf16.msra.mxu0 %v2407
        %2432 = vmatprep.subr.bf16.mxu0 0
        %2433 = vmatpush1.bf16.msra.mxu0 0
        %2434 = vmatprep.subr.bf16.mxu0 0
        %2435 = vmatpush1.bf16.msra.mxu0 0
        %2436 = vmatprep.subr.bf16.mxu0 0
        %2437 = vmatpush1.bf16.msra.mxu0 0
        %2438 = vmatprep.subr.bf16.mxu0 0
        %2439 = vmatpush1.bf16.msra.mxu0 0
        %2440 = vmatprep.subr.bf16.mxu0 0
        %2441 = vmatpush1.bf16.msra.mxu0 0
        %2442 = vmatprep.subr.bf16.mxu0 0
        %2443 = vmatpush1.bf16.msra.mxu0 0
        %2444 = vmatprep.subr.bf16.mxu0 0
        %2445 = vmatpush1.bf16.msra.mxu0 0
        %2446 = vmatprep.subr.bf16.mxu0 0
        %2447 = vmatpush1.bf16.msra.mxu0 0
        %2448 = vmatprep.mubr.bf16.mxu0 0
        %2449 = vmatmul.mubr.bf16.gmra.mrb[0].mxu0 %v2351
        %v2450 = vpop.f32.mrb[0].mxu0
        %v2451 = vadd.f32 0.0, %v2450
        %v2452 = vpop.f32.mrb[0].mxu0
        %v2453 = vpop.f32.mrb[0].mxu0
        %v2454 = vpop.f32.mrb[0].mxu0
        %2455 = vdwg.mxu0
        %v2456 = vadd.f32 %v2341, %v2451
        %vm2457 = vcmask 523264
        %v2458 = vsel %vm2457, %v2456, 0.0
        %2459 = vadd.xlane.f32.xlu0 %v2458
        %v2460 = vpop.xlane.xlu0 %2459
        %v2461 = vrcp.pop 64.0
        %v2462 = vmul.f32 %v2460, %v2461
        %v2463 = vmul.f32 %v2456, %v2456
        %v2464 = vsel %vm2457, %v2463, 0.0
        %2465 = vadd.xlane.f32.xlu0 %v2464
        %v2466 = vpop.xlane.xlu0 %2465
        %v2467 = vmul.f32 %v2466, %v2461
        %v2468 = vmul.f32 %v2462, %v2462
        %v2469 = vsub.f32 %v2467, %v2468
        %v2470 = vsub.f32 %v2456, %v2462
        %v2471 = vadd.f32 %v2469, 1e-05
        %v2472 = vrsqrt.pop %v2471
        %v2473 = vmul.f32 %v2470, %v2472
        %v2474 = vld [vmem:[%s6] sm:$0x1]
        %v2476 = vlaneseq
        %v2477 = vshrl.u32 %v2476, 7
        %v2478 = vsub.s32 0, %v2477
        %v2479 = vrot.slane %v2474, %v2478
        %v2481 = vmul.f32 %v2473, %v2479
        %v2482 = vld [vmem:[%s7] sm:$0x1]
        %v2484 = vlaneseq
        %v2485 = vshrl.u32 %v2484, 7
        %v2486 = vsub.s32 0, %v2485
        %v2487 = vrot.slane %v2482, %v2486
        %v2489 = vadd.f32 %v2481, %v2487
        %2490 = vst.msk [vmem:[%s446] sm:$0xff] %vm2457, %v2489
      $region60: #{custom_tokenizer_forward.8} parent=51 // pred_fallthru
        _
      %p2491 = scmp.lt.s32.totalorder %s24, 1
      %s2492 = scalar_select %p2491, %s24, 1
      %p2493 = scmp.lt.s32.totalorder %s25, 0
      %s2494 = scalar_select %p2493, %s25, 0
      %s2495 = sadd.s32 %s2494, %s2492
      %s2496 = smul.addr %s2495, 8
      %s2497 = scalar_lea.vmem %s8, %s2496
      // Predicated region
      $region61: #{custom_tokenizer_forward.8} parent=51 // pred_check
        %p2498 = pneg %p254
      $region62: #{custom_tokenizer_forward.8} parent=51 // pred_check_branch
        %2500 = sbr.rel (%p2498) target = $region64
      $region63: #{custom_tokenizer_forward.8} parent=51 // pred_region
        _
      $region64: #{custom_tokenizer_forward.8} parent=51 // pred_fallthru
        _
    $region52: #{custom_tokenizer_forward.8} parent=5 // pred_fallthru
      _
    %p2501 = scmp.le.s32.totalorder 2, %s14
    // Predicated region
    $region65: #{custom_tokenizer_forward.8} parent=5 // pred_check
      %p2502 = pneg %p2501
    $region66: #{custom_tokenizer_forward.8} parent=5 // pred_check_branch
      %2504 = sbr.rel (%p2502) target = $region68
    $region67: #{custom_tokenizer_forward.8} parent=5 // pred_region
      %s2505 = ssub.s32 %s14, 2
      // Predicated region
      $region69: #{custom_tokenizer_forward.8} parent=67 // pred_check
        %p2506 = pneg %p260
      $region70: #{custom_tokenizer_forward.8} parent=67 // pred_check_branch
        %2508 = sbr.rel (%p2506) target = $region72
      $region71: #{custom_tokenizer_forward.8} parent=67 // pred_region
        %p2509 = scmp.lt.s32.totalorder %s27, 1
        %s2510 = scalar_select %p2509, %s27, 1
        %p2511 = scmp.lt.s32.totalorder %s28, 0
        %s2512 = scalar_select %p2511, %s28, 0
        %s2513 = sadd.s32 %s2512, %s2510
        %s2514 = smul.addr %s2513, 8
        %s2515 = scalar_lea.vmem %s8, %s2514
      $region72: #{custom_tokenizer_forward.8} parent=67 // pred_fallthru
        _
    $region68: #{custom_tokenizer_forward.8} parent=5 // pred_fallthru
      _
  $region6: #{custom_tokenizer_forward.8} parent=0 // loop_footer
    %s18 = sadd.s32 1, %s14
  $region7: #{custom_tokenizer_forward.8} parent=0 // loop_footer_branch
    %13 = sbr.rel target = $region3
  $region8: #{custom_tokenizer_forward.8} parent=0 // loop_exit
    _

</llo_original>
